<compile_context>
chip_gen: v7x
topology: tpu7x:2x2x1
jax: 0.10.0
libtpu: 0.0.40
codegen_flags: <defaults>
</compile_context>

<pallas_src>
import functools
import numpy as np
import jax
import jax.numpy as jnp
from jax.experimental import pallas as pl
from jax.experimental.pallas import tpu as pltpu

LEAKY_SLOPE = 0.01   # InPlaceABNSync default activation: leaky_relu(0.01)
BN_EPS = 1e-5


# ---------------------------------------------------------------------------
# Fused Pallas kernel (one grid step = `NB` batch elements)
# ---------------------------------------------------------------------------
def _psp_fused_kernel(W, x_ref, kT_ref, w1T_ref, sc1_ref, b1_ref, zmask_ref,
                      uT_ref, w3_ref, bmask_ref, sc3_ref, b3_ref, o_ref):
    """Layout is (channels, H*W): channels on sublanes, spatial on lanes.

      x_ref    (NB, C, HW)            bf16  input feature maps (flattened NCHW)
      kT_ref   (HW, S_pad)            bf16  stacked adaptive-avg-pool operator^T (S zero-padded)
      w1T_ref  (nS*Cout, C)           bf16  stacked 1x1-conv weights (transposed)
      sc1/b1   (nS*Cout, 1)           f32   folded BN scale / bias per stage channel
      zmask    (nS*Cout, S_pad)       f32   block mask selecting each stage's columns
      uT_ref   (S_pad, HW)            bf16  stacked bilinear upsample operator^T
      w3_ref   (9*Cout, nS*Cout + C)  bf16  merged 3x3-conv taps over concat([priors, x])
      bmask    (9, HW)                f32   per-tap boundary-validity masks
      sc3/b3   (Cout, 1)              f32   folded BN scale / bias (bottleneck)
      o_ref    (NB, Cout, HW)         f32   output
    """
    NB, C, HW = x_ref.shape
    Cout = o_ref.shape[1]

    # Constants loaded once per grid step (reused across the unrolled batch loop).
    kT = kT_ref[...]
    w1T = w1T_ref[...]
    sc1 = sc1_ref[...]
    b1 = b1_ref[...]
    zmask = zmask_ref[...]
    uT = uT_ref[...]
    w3 = w3_ref[...]
    sc3 = sc3_ref[...]
    b3 = b3_ref[...]

    for n in range(NB):   # static unroll: whole batch block in one grid step
        xb = x_ref[n]                                                # (C, HW) bf16

        # 1) adaptive average pooling -- all pyramid stages in one matmul.
        pooled = jnp.dot(xb, kT, preferred_element_type=jnp.float32)          # (C, S_pad)

        # 2) per-stage 1x1 conv + folded BN + leaky_relu (stages stacked on rows).
        z = jnp.dot(w1T, pooled.astype(jnp.bfloat16),
                    preferred_element_type=jnp.float32)                        # (nS*Cout, S_pad)
        z = z * sc1 + b1
        z = jnp.where(z >= 0, z, LEAKY_SLOPE * z)
        z = z * zmask             # zero columns belonging to other stages / S padding

        # 3) bilinear upsample (align_corners=True) -- all stages in one matmul.
        up = jnp.dot(z.astype(jnp.bfloat16), uT,
                     preferred_element_type=jnp.float32)                       # (nS*Cout, HW)

        # 4) 3x3 conv (padding=1) over concat([priors, x]): ONE deep matmul
        #    produces all 9 taps for all output channels; each tap is then
        #    spatially aligned with a lane roll (XLU) + precomputed boundary mask.
        cat = jnp.concatenate([up.astype(jnp.bfloat16), xb], axis=0)           # (nS*Cout+C, HW)
        y = jnp.dot(w3, cat, preferred_element_type=jnp.float32)               # (9*Cout, HW)

        acc = jnp.zeros((Cout, HW), jnp.float32)
        for kh in range(3):
            for kw in range(3):
                t = kh * 3 + kw
                d = (kh - 1) * W + (kw - 1)
                # Cout is kept a multiple of 8 so this slice stays on sublane-tile
                # boundaries (no per-tap VMEM copies).
                yt = y[t * Cout:(t + 1) * Cout, :]
                if d != 0:
                    yt = pltpu.roll(yt, shift=(-d) % HW, axis=1)
                acc = acc + yt * bmask_ref[t:t + 1, :]

        out = acc * sc3 + b3                       # folded BN (inference)
        out = jnp.where(out >= 0, out, LEAKY_SLOPE * out)
        # TODO(synk): Dropout2d(0.1) is identity at inference; training-mode channel
        # dropout and InPlaceABNSync synchronized batch statistics are not modeled.
        o_ref[n] = out.astype(o_ref.dtype)


# ---------------------------------------------------------------------------
# Constant operators (cached) and parameter packing
# ---------------------------------------------------------------------------
def adaptive_pool_matrix(out_size, in_size):
    """PyTorch AdaptiveAvgPool1d weights as a dense (out_size, in_size) matrix."""
    M = np.zeros((out_size, in_size), np.float32)
    for i in range(out_size):
        start = (i * in_size) // out_size
        end = -((-(i + 1) * in_size) // out_size)    # ceil((i+1)*in/out)
        M[i, start:end] = 1.0 / (end - start)
    return M


def bilinear_matrix(out_size, in_size):
    """Bilinear (align_corners=True) interpolation weights (out_size, in_size)."""
    M = np.zeros((out_size, in_size), np.float32)
    if in_size == 1:
        M[:, 0] = 1.0
        return M
    scale = (in_size - 1) / (out_size - 1) if out_size > 1 else 0.0
    for o in range(out_size):
        src = o * scale
        i0 = min(int(np.floor(src)), in_size - 1)
        i1 = min(i0 + 1, in_size - 1)
        frac = src - i0
        M[o, i0] += 1.0 - frac
        M[o, i1] += frac
    return M


@functools.lru_cache(maxsize=None)
def _psp_operators(H, W, sizes):
    """Stacked pooling / upsampling operators for all stages, cached per (H,W,sizes)."""
    k_blocks, u_blocks = [], []
    for s in sizes:
        Ph, Pw = adaptive_pool_matrix(s, H), adaptive_pool_matrix(s, W)
        Uh, Uw = bilinear_matrix(H, s), bilinear_matrix(W, s)
        k_blocks.append(np.kron(Ph, Pw))             # (s*s, H*W)
        u_blocks.append(np.kron(Uh, Uw).T)           # (s*s, H*W)
    K_all = np.concatenate(k_blocks, axis=0)         # (S, H*W)
    U_all = np.concatenate(u_blocks, axis=0)         # (S, H*W)
    # TODO(synk): for production H,W (e.g. 64x64, C=2048) add a spatial row-block
    # grid axis with a 1-row halo (the roll+mask already handles the boundary) and
    # tile the tap/Cout axis so the (9*Cout, HW) intermediate fits v7x's 64 MiB VMEM.
    return K_all.T.copy(), U_all                     # kT (HW,S), uT (S,HW)


def _bn_fold(gamma, beta, mean, var):
    scale = gamma / jnp.sqrt(var + BN_EPS)
    bias = beta - mean * scale
    return scale.reshape(1, -1), bias.reshape(1, -1)


def make_params(key, features, out_features, sizes):
    # TODO(synk): InPlaceABNSync training-mode synchronized batch statistics are
    # not reproduced; BN uses deterministic running stats folded into scale/bias.
    ki = iter(jax.random.split(key, 5 * len(sizes) + 5))
    w1, sc1, b1 = [], [], []
    for _ in sizes:
        w1.append(0.05 * jax.random.normal(next(ki), (features, out_features), jnp.float32))
        gamma = 1.0 + 0.1 * jax.random.normal(next(ki), (out_features,), jnp.float32)
        beta = 0.1 * jax.random.normal(next(ki), (out_features,), jnp.float32)
        mean = 0.1 * jax.random.normal(next(ki), (out_features,), jnp.float32)
        var = 0.5 + jax.random.uniform(next(ki), (out_features,), jnp.float32)
        s, b = _bn_fold(gamma, beta, mean, var)
        sc1.append(s); b1.append(b)
    ccat = features + len(sizes) * out_features
    w3 = 0.05 * jax.random.normal(next(ki), (3, 3, ccat, out_features), jnp.float32)
    gamma = 1.0 + 0.1 * jax.random.normal(next(ki), (out_features,), jnp.float32)
    beta = 0.1 * jax.random.normal(next(ki), (out_features,), jnp.float32)
    mean = 0.1 * jax.random.normal(next(ki), (out_features,), jnp.float32)
    var = 0.5 + jax.random.uniform(next(ki), (out_features,), jnp.float32)
    sc3, b3 = _bn_fold(gamma, beta, mean, var)
    return dict(w1=w1, sc1=sc1, b1=b1, w3=w3, sc3=sc3, b3=b3)


def pack_params(params, sizes, H, W):
    """Pre-stack / transpose parameters + constant operators into the kernel's
    (channels, spatial) layout.  MXU operands are cast to bf16 (f32 accumulate);
    BN scale/bias and masks stay f32.  S is zero-padded to a lane-aligned width."""
    Cout = params['w3'].shape[-1]
    C = params['w1'][0].shape[0]
    nS = len(sizes)
    HW = H * W
    S = sum(s * s for s in sizes)
    S_pad = ((S + 127) // 128) * 128                 # lane-aligned stacked stage axis

    kT, uT = _psp_operators(H, W, tuple(sizes))      # (HW, S), (S, HW)
    kT_pad = np.zeros((HW, S_pad), np.float32); kT_pad[:, :S] = kT
    uT_pad = np.zeros((S_pad, HW), np.float32); uT_pad[:S, :] = uT

    zmask = np.zeros((nS * Cout, S_pad), np.float32)
    off = 0
    for i, sz in enumerate(sizes):
        zmask[i * Cout:(i + 1) * Cout, off:off + sz * sz] = 1.0
        off += sz * sz

    # 9 precomputed boundary-validity masks (destination coords) for the roll-based
    # 3x3 conv -- removes per-tap iota/compare/select work from the kernel.
    hh, ww = np.divmod(np.arange(HW), W)
    bmask = np.zeros((9, HW), np.float32)
    for kh in range(3):
        for kw in range(3):
            dh, dw = kh - 1, kw - 1
            valid = (hh + dh >= 0) & (hh + dh < H) & (ww + dw >= 0) & (ww + dw < W)
            bmask[kh * 3 + kw] = valid.astype(np.float32)

    w1T = jnp.concatenate([w.T for w in params['w1']], axis=0)              # (nS*Cout, C)
    sc1 = jnp.concatenate([s.reshape(-1, 1) for s in params['sc1']], axis=0)
    b1 = jnp.concatenate([b.reshape(-1, 1) for b in params['b1']], axis=0)
    # Merged 3x3 weights: rows = (tap, cout), cols = concat channels [priors | x]
    # (matches torch.cat(priors + [feats], 1) ordering) -> single deep MXU matmul.
    w3cat = jnp.transpose(params['w3'], (0, 1, 3, 2)).reshape(9 * Cout, -1)  # (9*Cout, Ccat)
    return dict(
        kT=jnp.asarray(kT_pad, jnp.bfloat16),
        w1T=w1T.astype(jnp.bfloat16),
        sc1=sc1, b1=b1,
        zmask=jnp.asarray(zmask),
        uT=jnp.asarray(uT_pad, jnp.bfloat16),
        w3=w3cat.astype(jnp.bfloat16),
        bmask=jnp.asarray(bmask),
        sc3=params['sc3'].reshape(-1, 1),
        b3=params['b3'].reshape(-1, 1),
    )


# ---------------------------------------------------------------------------
# pallas_call wrapper (NCHW in, NCHW out -- only free reshapes + one bf16 cast)
# ---------------------------------------------------------------------------
def _const_spec(arr, pipe_kwargs):
    nd = arr.ndim
    return pl.BlockSpec(arr.shape, lambda i, _n=nd: (0,) * _n, **pipe_kwargs)


def psp_module_forward(x_nchw, packed, *, batch_block=None):
    N, C, H, W = x_nchw.shape
    HW = H * W
    Cout = packed['sc3'].shape[0]
    nSC = packed['w1T'].shape[0]
    S_pad = packed['kT'].shape[1]

    nb = N if batch_block is None else batch_block   # demo: whole batch in ONE grid step
    assert N % nb == 0, "batch_block must divide the batch size"

    # bf16 activations at the pallas_call boundary: halves the dominant HBM read.
    x_flat = x_nchw.reshape(N, C, HW).astype(jnp.bfloat16)

    flops = 2 * N * (C * HW * S_pad + nSC * C * S_pad + nSC * S_pad * HW
                     + 9 * Cout * (nSC + C) * HW)
    bytes_acc = (x_flat.size * x_flat.dtype.itemsize + N * Cout * HW * 4
                 + sum(int(np.prod(v.shape)) * v.dtype.itemsize for v in packed.values()))

    kernel = functools.partial(_psp_fused_kernel, W)
    consts = (packed['kT'], packed['w1T'], packed['sc1'], packed['b1'],
              packed['zmask'], packed['uT'], packed['w3'], packed['bmask'],
              packed['sc3'], packed['b3'])

    def run(single_buffer_consts):
        # Single-buffer the resident constants (constant index maps) -> halves
        # their VMEM footprint; x and the output keep default double-buffering.
        pipe = {'pipeline_mode': pl.Buffered(1)} if single_buffer_consts else {}
        in_specs = [pl.BlockSpec((nb, C, HW), lambda i: (i, 0, 0))]
        in_specs += [_const_spec(a, pipe) for a in consts]
        return pl.pallas_call(
            kernel,
            out_shape=jax.ShapeDtypeStruct((N, Cout, HW), jnp.float32),
            grid=(N // nb,),
            in_specs=in_specs,
            out_specs=pl.BlockSpec((nb, Cout, HW), lambda i: (i, 0, 0)),
            compiler_params=pltpu.CompilerParams(
                dimension_semantics=("parallel",),
                vmem_limit_bytes=64 * 1024 * 1024),
            cost_estimate=pl.CostEstimate(flops=int(flops), transcendentals=0,
                                          bytes_accessed=int(bytes_acc)),
        )(x_flat, *consts)

    try:
        out = run(True)
    except Exception:
        # pl.Buffered(1) not supported on this jax build -> fall back to the
        # default 2-deep buffering (correctness unchanged, slightly more VMEM).
        out = run(False)
    return out.reshape(N, Cout, H, W)


# ---------------------------------------------------------------------------
# Pure-JAX reference (verification only)
# ---------------------------------------------------------------------------
def reference_forward(x_nchw, params, sizes):
    hp = jax.lax.Precision.HIGHEST
    x = jnp.transpose(x_nchw, (0, 2, 3, 1)).astype(jnp.float32)
    N, H, W, C = x.shape
    priors = []
    for i, s in enumerate(sizes):
        Ph = jnp.asarray(adaptive_pool_matrix(s, H))
        Pw = jnp.asarray(adaptive_pool_matrix(s, W))
        Uh = jnp.asarray(bilinear_matrix(H, s))
        Uw = jnp.asarray(bilinear_matrix(W, s))
        pooled = jnp.einsum('ih,jw,nhwc->nijc', Ph, Pw, x, precision=hp)
        z = jnp.einsum('nijc,cd->nijd', pooled, params['w1'][i], precision=hp)
        z = z * params['sc1'][i][0] + params['b1'][i][0]
        z = jnp.where(z >= 0, z, LEAKY_SLOPE * z)
        up = jnp.einsum('hi,wj,nijd->nhwd', Uh, Uw, z, precision=hp)
        priors.append(up)
    cat = jnp.concatenate(priors + [x], axis=-1)
    y = jax.lax.conv_general_dilated(
        cat, params['w3'], window_strides=(1, 1), padding='SAME',
        dimension_numbers=('NHWC', 'HWIO', 'NHWC'), precision=hp)
    y = y * params['sc3'][0] + params['b3'][0]
    y = jnp.where(y >= 0, y, LEAKY_SLOPE * y)
    return jnp.transpose(y, (0, 3, 1, 2))


# ---------------------------------------------------------------------------
if __name__ == "__main__":
    SIZES = (1, 2, 3, 6)
    OUT_FEATURES = 8          # multiple of 8: per-tap slices stay sublane-tile aligned
    key = jax.random.PRNGKey(0)

    # Main (square) demo config + a non-square sanity config (roll/mask boundary check).
    for case_idx, (N, C, H, W) in enumerate([(2, 4, 16, 16), (2, 4, 8, 16)]):
        kx, kp = jax.random.split(jax.random.fold_in(key, case_idx))
        x = jax.random.normal(kx, (N, C, H, W), jnp.float32)
        params = make_params(kp, C, OUT_FEATURES, SIZES)
        packed = pack_params(params, SIZES, H, W)

        out = jax.block_until_ready(psp_module_forward(x, packed))
        assert out.shape == (N, OUT_FEATURES, H, W), out.shape

        ref = reference_forward(x, params, SIZES)
        # Kernel uses bf16 activations + bf16 MXU operands (f32 accumulation);
        # reference is all-f32.
        np.testing.assert_allclose(np.asarray(out), np.asarray(ref),
                                   atol=3e-2, rtol=3e-2)
    print("KERNEL_OK")
</pallas_src>

<mosaic_0001>
module attributes {stable_mosaic.version = 11 : i64} {
  func.func @_psp_fused_kernel(%arg0: i32, %arg1: memref<2x4x256xbf16, #tpu.memory_space<vmem>>, %arg2: memref<256x128xbf16, #tpu.memory_space<vmem>>, %arg3: memref<32x4xbf16, #tpu.memory_space<vmem>>, %arg4: memref<32x1xf32, #tpu.memory_space<vmem>>, %arg5: memref<32x1xf32, #tpu.memory_space<vmem>>, %arg6: memref<32x128xf32, #tpu.memory_space<vmem>>, %arg7: memref<128x256xbf16, #tpu.memory_space<vmem>>, %arg8: memref<72x36xbf16, #tpu.memory_space<vmem>>, %arg9: memref<9x256xf32, #tpu.memory_space<vmem>>, %arg10: memref<8x1xf32, #tpu.memory_space<vmem>>, %arg11: memref<8x1xf32, #tpu.memory_space<vmem>>, %arg12: memref<2x8x256xf32, #tpu.memory_space<vmem>>) attributes {dimension_semantics = [#tpu.dimension_semantics<parallel>], iteration_bounds = array<i64: 1>, scalar_prefetch = 0 : i64, scratch_operands = 0 : i64, tpu.core_type = #tpu.core_type<tc>, window_params = [{transform_indices = @transform_0, window_bounds = array<i64: 2, 4, 256>}, {pipeline_mode = #tpu.pipeline_mode<synchronous>, transform_indices = @transform_1, window_bounds = array<i64: 256, 128>}, {pipeline_mode = #tpu.pipeline_mode<synchronous>, transform_indices = @transform_2, window_bounds = array<i64: 32, 4>}, {pipeline_mode = #tpu.pipeline_mode<synchronous>, transform_indices = @transform_3, window_bounds = array<i64: 32, 1>}, {pipeline_mode = #tpu.pipeline_mode<synchronous>, transform_indices = @transform_4, window_bounds = array<i64: 32, 1>}, {pipeline_mode = #tpu.pipeline_mode<synchronous>, transform_indices = @transform_5, window_bounds = array<i64: 32, 128>}, {pipeline_mode = #tpu.pipeline_mode<synchronous>, transform_indices = @transform_6, window_bounds = array<i64: 128, 256>}, {pipeline_mode = #tpu.pipeline_mode<synchronous>, transform_indices = @transform_7, window_bounds = array<i64: 72, 36>}, {pipeline_mode = #tpu.pipeline_mode<synchronous>, transform_indices = @transform_8, window_bounds = array<i64: 9, 256>}, {pipeline_mode = #tpu.pipeline_mode<synchronous>, transform_indices = @transform_9, window_bounds = array<i64: 8, 1>}, {pipeline_mode = #tpu.pipeline_mode<synchronous>, transform_indices = @transform_10, window_bounds = array<i64: 8, 1>}, {transform_indices = @transform_11, window_bounds = array<i64: 2, 8, 256>}]} {
    %c0 = arith.constant 0 : index
    %c0_0 = arith.constant 0 : index
    %0 = vector.load %arg2[%c0, %c0_0] : memref<256x128xbf16, #tpu.memory_space<vmem>>, vector<256x128xbf16>
    %c0_1 = arith.constant 0 : index
    %c0_2 = arith.constant 0 : index
    %1 = vector.load %arg3[%c0_1, %c0_2] : memref<32x4xbf16, #tpu.memory_space<vmem>>, vector<32x4xbf16>
    %c0_3 = arith.constant 0 : index
    %c0_4 = arith.constant 0 : index
    %2 = vector.load %arg4[%c0_3, %c0_4] : memref<32x1xf32, #tpu.memory_space<vmem>>, vector<32x1xf32>
    %c0_5 = arith.constant 0 : index
    %c0_6 = arith.constant 0 : index
    %3 = vector.load %arg5[%c0_5, %c0_6] : memref<32x1xf32, #tpu.memory_space<vmem>>, vector<32x1xf32>
    %c0_7 = arith.constant 0 : index
    %c0_8 = arith.constant 0 : index
    %4 = vector.load %arg6[%c0_7, %c0_8] : memref<32x128xf32, #tpu.memory_space<vmem>>, vector<32x128xf32>
    %c0_9 = arith.constant 0 : index
    %c0_10 = arith.constant 0 : index
    %5 = vector.load %arg7[%c0_9, %c0_10] : memref<128x256xbf16, #tpu.memory_space<vmem>>, vector<128x256xbf16>
    %c0_11 = arith.constant 0 : index
    %c0_12 = arith.constant 0 : index
    %6 = vector.load %arg8[%c0_11, %c0_12] : memref<72x36xbf16, #tpu.memory_space<vmem>>, vector<72x36xbf16>
    %c0_13 = arith.constant 0 : index
    %c0_14 = arith.constant 0 : index
    %7 = vector.load %arg10[%c0_13, %c0_14] : memref<8x1xf32, #tpu.memory_space<vmem>>, vector<8x1xf32>
    %c0_15 = arith.constant 0 : index
    %c0_16 = arith.constant 0 : index
    %8 = vector.load %arg11[%c0_15, %c0_16] : memref<8x1xf32, #tpu.memory_space<vmem>>, vector<8x1xf32>
    %c0_17 = arith.constant 0 : index
    %c0_18 = arith.constant 0 : index
    %c0_19 = arith.constant 0 : index
    %9 = vector.load %arg1[%c0_17, %c0_18, %c0_19] : memref<2x4x256xbf16, #tpu.memory_space<vmem>>, vector<1x4x256xbf16>
    %10 = vector.shape_cast %9 : vector<1x4x256xbf16> to vector<4x256xbf16>
    %cst = arith.constant dense<0.000000e+00> : vector<4x128xf32>
    %11 = tpu.matmul %10, %0, %cst {dimension_numbers = #tpu.dot_dimension_numbers<[1], [0], [0], [1], [0, 0, 1, 1], [], []>} : vector<4x256xbf16>, vector<256x128xbf16>, vector<4x128xf32> -> vector<4x128xf32>
    %12 = arith.truncf %11 : vector<4x128xf32> to vector<4x128xbf16>
    %cst_20 = arith.constant dense<0.000000e+00> : vector<32x128xf32>
    %13 = tpu.matmul %1, %12, %cst_20 {dimension_numbers = #tpu.dot_dimension_numbers<[1], [0], [0], [1], [0, 0, 1, 1], [], []>} : vector<32x4xbf16>, vector<4x128xbf16>, vector<32x128xf32> -> vector<32x128xf32>
    %14 = vector.broadcast %2 : vector<32x1xf32> to vector<32x128xf32>
    %15 = arith.mulf %13, %14 : vector<32x128xf32>
    %16 = vector.broadcast %3 : vector<32x1xf32> to vector<32x128xf32>
    %17 = arith.addf %15, %16 : vector<32x128xf32>
    %cst_21 = arith.constant 0.000000e+00 : f32
    %18 = vector.broadcast %cst_21 : f32 to vector<32x128xf32>
    %19 = arith.cmpf oge, %17, %18 : vector<32x128xf32>
    %cst_22 = arith.constant 0.00999999977 : f32
    %20 = vector.broadcast %cst_22 : f32 to vector<32x128xf32>
    %21 = arith.mulf %20, %17 : vector<32x128xf32>
    %22 = arith.select %19, %17, %21 : vector<32x128xi1>, vector<32x128xf32>
    %23 = arith.mulf %22, %4 : vector<32x128xf32>
    %24 = arith.truncf %23 : vector<32x128xf32> to vector<32x128xbf16>
    %cst_23 = arith.constant dense<0.000000e+00> : vector<32x256xf32>
    %25 = tpu.matmul %24, %5, %cst_23 {dimension_numbers = #tpu.dot_dimension_numbers<[1], [0], [0], [1], [0, 0, 1, 1], [], []>} : vector<32x128xbf16>, vector<128x256xbf16>, vector<32x256xf32> -> vector<32x256xf32>
    %26 = arith.truncf %25 : vector<32x256xf32> to vector<32x256xbf16>
    %27 = tpu.concatenate %26, %10 in 0 : vector<32x256xbf16>, vector<4x256xbf16> -> vector<36x256xbf16>
    %cst_24 = arith.constant dense<0.000000e+00> : vector<72x256xf32>
    %28 = tpu.matmul %6, %27, %cst_24 {dimension_numbers = #tpu.dot_dimension_numbers<[1], [0], [0], [1], [0, 0, 1, 1], [], []>} : vector<72x36xbf16>, vector<36x256xbf16>, vector<72x256xf32> -> vector<72x256xf32>
    %cst_25 = arith.constant 0.000000e+00 : f32
    %29 = vector.broadcast %cst_25 : f32 to vector<8x256xf32>
    %30 = vector.extract_strided_slice %28 {offsets = [0, 0], sizes = [8, 256], strides = [1, 1]} : vector<72x256xf32> to vector<8x256xf32>
    %c17_i32 = arith.constant 17 : i32
    %31 = tpu.dynamic_rotate %30 by %c17_i32 dim 1 : vector<8x256xf32>, i32 -> vector<8x256xf32>
    %c0_26 = arith.constant 0 : index
    %c0_27 = arith.constant 0 : index
    %32 = vector.load %arg9[%c0_26, %c0_27] : memref<9x256xf32, #tpu.memory_space<vmem>>, vector<1x256xf32>
    %33 = vector.broadcast %32 : vector<1x256xf32> to vector<8x256xf32>
    %34 = arith.mulf %31, %33 : vector<8x256xf32>
    %35 = arith.addf %29, %34 : vector<8x256xf32>
    %36 = vector.extract_strided_slice %28 {offsets = [8, 0], sizes = [8, 256], strides = [1, 1]} : vector<72x256xf32> to vector<8x256xf32>
    %c16_i32 = arith.constant 16 : i32
    %37 = tpu.dynamic_rotate %36 by %c16_i32 dim 1 : vector<8x256xf32>, i32 -> vector<8x256xf32>
    %c1 = arith.constant 1 : index
    %c0_28 = arith.constant 0 : index
    %38 = vector.load %arg9[%c1, %c0_28] : memref<9x256xf32, #tpu.memory_space<vmem>>, vector<1x256xf32>
    %39 = vector.broadcast %38 : vector<1x256xf32> to vector<8x256xf32>
    %40 = arith.mulf %37, %39 : vector<8x256xf32>
    %41 = arith.addf %35, %40 : vector<8x256xf32>
    %42 = vector.extract_strided_slice %28 {offsets = [16, 0], sizes = [8, 256], strides = [1, 1]} : vector<72x256xf32> to vector<8x256xf32>
    %c15_i32 = arith.constant 15 : i32
    %43 = tpu.dynamic_rotate %42 by %c15_i32 dim 1 : vector<8x256xf32>, i32 -> vector<8x256xf32>
    %c2 = arith.constant 2 : index
    %c0_29 = arith.constant 0 : index
    %44 = vector.load %arg9[%c2, %c0_29] : memref<9x256xf32, #tpu.memory_space<vmem>>, vector<1x256xf32>
    %45 = vector.broadcast %44 : vector<1x256xf32> to vector<8x256xf32>
    %46 = arith.mulf %43, %45 : vector<8x256xf32>
    %47 = arith.addf %41, %46 : vector<8x256xf32>
    %48 = vector.extract_strided_slice %28 {offsets = [24, 0], sizes = [8, 256], strides = [1, 1]} : vector<72x256xf32> to vector<8x256xf32>
    %c1_i32 = arith.constant 1 : i32
    %49 = tpu.dynamic_rotate %48 by %c1_i32 dim 1 : vector<8x256xf32>, i32 -> vector<8x256xf32>
    %c3 = arith.constant 3 : index
    %c0_30 = arith.constant 0 : index
    %50 = vector.load %arg9[%c3, %c0_30] : memref<9x256xf32, #tpu.memory_space<vmem>>, vector<1x256xf32>
    %51 = vector.broadcast %50 : vector<1x256xf32> to vector<8x256xf32>
    %52 = arith.mulf %49, %51 : vector<8x256xf32>
    %53 = arith.addf %47, %52 : vector<8x256xf32>
    %54 = vector.extract_strided_slice %28 {offsets = [32, 0], sizes = [8, 256], strides = [1, 1]} : vector<72x256xf32> to vector<8x256xf32>
    %c4 = arith.constant 4 : index
    %c0_31 = arith.constant 0 : index
    %55 = vector.load %arg9[%c4, %c0_31] : memref<9x256xf32, #tpu.memory_space<vmem>>, vector<1x256xf32>
    %56 = vector.broadcast %55 : vector<1x256xf32> to vector<8x256xf32>
    %57 = arith.mulf %54, %56 : vector<8x256xf32>
    %58 = arith.addf %53, %57 : vector<8x256xf32>
    %59 = vector.extract_strided_slice %28 {offsets = [40, 0], sizes = [8, 256], strides = [1, 1]} : vector<72x256xf32> to vector<8x256xf32>
    %c255_i32 = arith.constant 255 : i32
    %60 = tpu.dynamic_rotate %59 by %c255_i32 dim 1 : vector<8x256xf32>, i32 -> vector<8x256xf32>
    %c5 = arith.constant 5 : index
    %c0_32 = arith.constant 0 : index
    %61 = vector.load %arg9[%c5, %c0_32] : memref<9x256xf32, #tpu.memory_space<vmem>>, vector<1x256xf32>
    %62 = vector.broadcast %61 : vector<1x256xf32> to vector<8x256xf32>
    %63 = arith.mulf %60, %62 : vector<8x256xf32>
    %64 = arith.addf %58, %63 : vector<8x256xf32>
    %65 = vector.extract_strided_slice %28 {offsets = [48, 0], sizes = [8, 256], strides = [1, 1]} : vector<72x256xf32> to vector<8x256xf32>
    %c241_i32 = arith.constant 241 : i32
    %66 = tpu.dynamic_rotate %65 by %c241_i32 dim 1 : vector<8x256xf32>, i32 -> vector<8x256xf32>
    %c6 = arith.constant 6 : index
    %c0_33 = arith.constant 0 : index
    %67 = vector.load %arg9[%c6, %c0_33] : memref<9x256xf32, #tpu.memory_space<vmem>>, vector<1x256xf32>
    %68 = vector.broadcast %67 : vector<1x256xf32> to vector<8x256xf32>
    %69 = arith.mulf %66, %68 : vector<8x256xf32>
    %70 = arith.addf %64, %69 : vector<8x256xf32>
    %71 = vector.extract_strided_slice %28 {offsets = [56, 0], sizes = [8, 256], strides = [1, 1]} : vector<72x256xf32> to vector<8x256xf32>
    %c240_i32 = arith.constant 240 : i32
    %72 = tpu.dynamic_rotate %71 by %c240_i32 dim 1 : vector<8x256xf32>, i32 -> vector<8x256xf32>
    %c7 = arith.constant 7 : index
    %c0_34 = arith.constant 0 : index
    %73 = vector.load %arg9[%c7, %c0_34] : memref<9x256xf32, #tpu.memory_space<vmem>>, vector<1x256xf32>
    %74 = vector.broadcast %73 : vector<1x256xf32> to vector<8x256xf32>
    %75 = arith.mulf %72, %74 : vector<8x256xf32>
    %76 = arith.addf %70, %75 : vector<8x256xf32>
    %77 = vector.extract_strided_slice %28 {offsets = [64, 0], sizes = [8, 256], strides = [1, 1]} : vector<72x256xf32> to vector<8x256xf32>
    %c239_i32 = arith.constant 239 : i32
    %78 = tpu.dynamic_rotate %77 by %c239_i32 dim 1 : vector<8x256xf32>, i32 -> vector<8x256xf32>
    %c8 = arith.constant 8 : index
    %c0_35 = arith.constant 0 : index
    %79 = vector.load %arg9[%c8, %c0_35] : memref<9x256xf32, #tpu.memory_space<vmem>>, vector<1x256xf32>
    %80 = vector.broadcast %79 : vector<1x256xf32> to vector<8x256xf32>
    %81 = arith.mulf %78, %80 : vector<8x256xf32>
    %82 = arith.addf %76, %81 : vector<8x256xf32>
    %83 = vector.broadcast %7 : vector<8x1xf32> to vector<8x256xf32>
    %84 = arith.mulf %82, %83 : vector<8x256xf32>
    %85 = vector.broadcast %8 : vector<8x1xf32> to vector<8x256xf32>
    %86 = arith.addf %84, %85 : vector<8x256xf32>
    %cst_36 = arith.constant 0.000000e+00 : f32
    %87 = vector.broadcast %cst_36 : f32 to vector<8x256xf32>
    %88 = arith.cmpf oge, %86, %87 : vector<8x256xf32>
    %cst_37 = arith.constant 0.00999999977 : f32
    %89 = vector.broadcast %cst_37 : f32 to vector<8x256xf32>
    %90 = arith.mulf %89, %86 : vector<8x256xf32>
    %91 = arith.select %88, %86, %90 : vector<8x256xi1>, vector<8x256xf32>
    %c0_38 = arith.constant 0 : index
    %c0_39 = arith.constant 0 : index
    %c0_40 = arith.constant 0 : index
    %92 = vector.load %arg12[%c0_38, %c0_39, %c0_40] : memref<2x8x256xf32, #tpu.memory_space<vmem>>, vector<1x8x256xf32>
    %93 = vector.shape_cast %92 : vector<1x8x256xf32> to vector<8x256xf32>
    %94 = vector.shape_cast %91 : vector<8x256xf32> to vector<1x8x256xf32>
    tpu.vector_store %arg12[%c0_38, %c0_39, %c0_40], %94 {strides = array<i32>} : memref<2x8x256xf32, #tpu.memory_space<vmem>>, vector<1x8x256xf32>,
    %c1_41 = arith.constant 1 : index
    %c0_42 = arith.constant 0 : index
    %c0_43 = arith.constant 0 : index
    %95 = vector.load %arg1[%c1_41, %c0_42, %c0_43] : memref<2x4x256xbf16, #tpu.memory_space<vmem>>, vector<1x4x256xbf16>
    %96 = vector.shape_cast %95 : vector<1x4x256xbf16> to vector<4x256xbf16>
    %cst_44 = arith.constant dense<0.000000e+00> : vector<4x128xf32>
    %97 = tpu.matmul %96, %0, %cst_44 {dimension_numbers = #tpu.dot_dimension_numbers<[1], [0], [0], [1], [0, 0, 1, 1], [], []>} : vector<4x256xbf16>, vector<256x128xbf16>, vector<4x128xf32> -> vector<4x128xf32>
    %98 = arith.truncf %97 : vector<4x128xf32> to vector<4x128xbf16>
    %cst_45 = arith.constant dense<0.000000e+00> : vector<32x128xf32>
    %99 = tpu.matmul %1, %98, %cst_45 {dimension_numbers = #tpu.dot_dimension_numbers<[1], [0], [0], [1], [0, 0, 1, 1], [], []>} : vector<32x4xbf16>, vector<4x128xbf16>, vector<32x128xf32> -> vector<32x128xf32>
    %100 = vector.broadcast %2 : vector<32x1xf32> to vector<32x128xf32>
    %101 = arith.mulf %99, %100 : vector<32x128xf32>
    %102 = vector.broadcast %3 : vector<32x1xf32> to vector<32x128xf32>
    %103 = arith.addf %101, %102 : vector<32x128xf32>
    %cst_46 = arith.constant 0.000000e+00 : f32
    %104 = vector.broadcast %cst_46 : f32 to vector<32x128xf32>
    %105 = arith.cmpf oge, %103, %104 : vector<32x128xf32>
    %cst_47 = arith.constant 0.00999999977 : f32
    %106 = vector.broadcast %cst_47 : f32 to vector<32x128xf32>
    %107 = arith.mulf %106, %103 : vector<32x128xf32>
    %108 = arith.select %105, %103, %107 : vector<32x128xi1>, vector<32x128xf32>
    %109 = arith.mulf %108, %4 : vector<32x128xf32>
    %110 = arith.truncf %109 : vector<32x128xf32> to vector<32x128xbf16>
    %cst_48 = arith.constant dense<0.000000e+00> : vector<32x256xf32>
    %111 = tpu.matmul %110, %5, %cst_48 {dimension_numbers = #tpu.dot_dimension_numbers<[1], [0], [0], [1], [0, 0, 1, 1], [], []>} : vector<32x128xbf16>, vector<128x256xbf16>, vector<32x256xf32> -> vector<32x256xf32>
    %112 = arith.truncf %111 : vector<32x256xf32> to vector<32x256xbf16>
    %113 = tpu.concatenate %112, %96 in 0 : vector<32x256xbf16>, vector<4x256xbf16> -> vector<36x256xbf16>
    %cst_49 = arith.constant dense<0.000000e+00> : vector<72x256xf32>
    %114 = tpu.matmul %6, %113, %cst_49 {dimension_numbers = #tpu.dot_dimension_numbers<[1], [0], [0], [1], [0, 0, 1, 1], [], []>} : vector<72x36xbf16>, vector<36x256xbf16>, vector<72x256xf32> -> vector<72x256xf32>
    %cst_50 = arith.constant 0.000000e+00 : f32
    %115 = vector.broadcast %cst_50 : f32 to vector<8x256xf32>
    %116 = vector.extract_strided_slice %114 {offsets = [0, 0], sizes = [8, 256], strides = [1, 1]} : vector<72x256xf32> to vector<8x256xf32>
    %c17_i32_51 = arith.constant 17 : i32
    %117 = tpu.dynamic_rotate %116 by %c17_i32_51 dim 1 : vector<8x256xf32>, i32 -> vector<8x256xf32>
    %c0_52 = arith.constant 0 : index
    %c0_53 = arith.constant 0 : index
    %118 = vector.load %arg9[%c0_52, %c0_53] : memref<9x256xf32, #tpu.memory_space<vmem>>, vector<1x256xf32>
    %119 = vector.broadcast %118 : vector<1x256xf32> to vector<8x256xf32>
    %120 = arith.mulf %117, %119 : vector<8x256xf32>
    %121 = arith.addf %115, %120 : vector<8x256xf32>
    %122 = vector.extract_strided_slice %114 {offsets = [8, 0], sizes = [8, 256], strides = [1, 1]} : vector<72x256xf32> to vector<8x256xf32>
    %c16_i32_54 = arith.constant 16 : i32
    %123 = tpu.dynamic_rotate %122 by %c16_i32_54 dim 1 : vector<8x256xf32>, i32 -> vector<8x256xf32>
    %c1_55 = arith.constant 1 : index
    %c0_56 = arith.constant 0 : index
    %124 = vector.load %arg9[%c1_55, %c0_56] : memref<9x256xf32, #tpu.memory_space<vmem>>, vector<1x256xf32>
    %125 = vector.broadcast %124 : vector<1x256xf32> to vector<8x256xf32>
    %126 = arith.mulf %123, %125 : vector<8x256xf32>
    %127 = arith.addf %121, %126 : vector<8x256xf32>
    %128 = vector.extract_strided_slice %114 {offsets = [16, 0], sizes = [8, 256], strides = [1, 1]} : vector<72x256xf32> to vector<8x256xf32>
    %c15_i32_57 = arith.constant 15 : i32
    %129 = tpu.dynamic_rotate %128 by %c15_i32_57 dim 1 : vector<8x256xf32>, i32 -> vector<8x256xf32>
    %c2_58 = arith.constant 2 : index
    %c0_59 = arith.constant 0 : index
    %130 = vector.load %arg9[%c2_58, %c0_59] : memref<9x256xf32, #tpu.memory_space<vmem>>, vector<1x256xf32>
    %131 = vector.broadcast %130 : vector<1x256xf32> to vector<8x256xf32>
    %132 = arith.mulf %129, %131 : vector<8x256xf32>
    %133 = arith.addf %127, %132 : vector<8x256xf32>
    %134 = vector.extract_strided_slice %114 {offsets = [24, 0], sizes = [8, 256], strides = [1, 1]} : vector<72x256xf32> to vector<8x256xf32>
    %c1_i32_60 = arith.constant 1 : i32
    %135 = tpu.dynamic_rotate %134 by %c1_i32_60 dim 1 : vector<8x256xf32>, i32 -> vector<8x256xf32>
    %c3_61 = arith.constant 3 : index
    %c0_62 = arith.constant 0 : index
    %136 = vector.load %arg9[%c3_61, %c0_62] : memref<9x256xf32, #tpu.memory_space<vmem>>, vector<1x256xf32>
    %137 = vector.broadcast %136 : vector<1x256xf32> to vector<8x256xf32>
    %138 = arith.mulf %135, %137 : vector<8x256xf32>
    %139 = arith.addf %133, %138 : vector<8x256xf32>
    %140 = vector.extract_strided_slice %114 {offsets = [32, 0], sizes = [8, 256], strides = [1, 1]} : vector<72x256xf32> to vector<8x256xf32>
    %c4_63 = arith.constant 4 : index
    %c0_64 = arith.constant 0 : index
    %141 = vector.load %arg9[%c4_63, %c0_64] : memref<9x256xf32, #tpu.memory_space<vmem>>, vector<1x256xf32>
    %142 = vector.broadcast %141 : vector<1x256xf32> to vector<8x256xf32>
    %143 = arith.mulf %140, %142 : vector<8x256xf32>
    %144 = arith.addf %139, %143 : vector<8x256xf32>
    %145 = vector.extract_strided_slice %114 {offsets = [40, 0], sizes = [8, 256], strides = [1, 1]} : vector<72x256xf32> to vector<8x256xf32>
    %c255_i32_65 = arith.constant 255 : i32
    %146 = tpu.dynamic_rotate %145 by %c255_i32_65 dim 1 : vector<8x256xf32>, i32 -> vector<8x256xf32>
    %c5_66 = arith.constant 5 : index
    %c0_67 = arith.constant 0 : index
    %147 = vector.load %arg9[%c5_66, %c0_67] : memref<9x256xf32, #tpu.memory_space<vmem>>, vector<1x256xf32>
    %148 = vector.broadcast %147 : vector<1x256xf32> to vector<8x256xf32>
    %149 = arith.mulf %146, %148 : vector<8x256xf32>
    %150 = arith.addf %144, %149 : vector<8x256xf32>
    %151 = vector.extract_strided_slice %114 {offsets = [48, 0], sizes = [8, 256], strides = [1, 1]} : vector<72x256xf32> to vector<8x256xf32>
    %c241_i32_68 = arith.constant 241 : i32
    %152 = tpu.dynamic_rotate %151 by %c241_i32_68 dim 1 : vector<8x256xf32>, i32 -> vector<8x256xf32>
    %c6_69 = arith.constant 6 : index
    %c0_70 = arith.constant 0 : index
    %153 = vector.load %arg9[%c6_69, %c0_70] : memref<9x256xf32, #tpu.memory_space<vmem>>, vector<1x256xf32>
    %154 = vector.broadcast %153 : vector<1x256xf32> to vector<8x256xf32>
    %155 = arith.mulf %152, %154 : vector<8x256xf32>
    %156 = arith.addf %150, %155 : vector<8x256xf32>
    %157 = vector.extract_strided_slice %114 {offsets = [56, 0], sizes = [8, 256], strides = [1, 1]} : vector<72x256xf32> to vector<8x256xf32>
    %c240_i32_71 = arith.constant 240 : i32
    %158 = tpu.dynamic_rotate %157 by %c240_i32_71 dim 1 : vector<8x256xf32>, i32 -> vector<8x256xf32>
    %c7_72 = arith.constant 7 : index
    %c0_73 = arith.constant 0 : index
    %159 = vector.load %arg9[%c7_72, %c0_73] : memref<9x256xf32, #tpu.memory_space<vmem>>, vector<1x256xf32>
    %160 = vector.broadcast %159 : vector<1x256xf32> to vector<8x256xf32>
    %161 = arith.mulf %158, %160 : vector<8x256xf32>
    %162 = arith.addf %156, %161 : vector<8x256xf32>
    %163 = vector.extract_strided_slice %114 {offsets = [64, 0], sizes = [8, 256], strides = [1, 1]} : vector<72x256xf32> to vector<8x256xf32>
    %c239_i32_74 = arith.constant 239 : i32
    %164 = tpu.dynamic_rotate %163 by %c239_i32_74 dim 1 : vector<8x256xf32>, i32 -> vector<8x256xf32>
    %c8_75 = arith.constant 8 : index
    %c0_76 = arith.constant 0 : index
    %165 = vector.load %arg9[%c8_75, %c0_76] : memref<9x256xf32, #tpu.memory_space<vmem>>, vector<1x256xf32>
    %166 = vector.broadcast %165 : vector<1x256xf32> to vector<8x256xf32>
    %167 = arith.mulf %164, %166 : vector<8x256xf32>
    %168 = arith.addf %162, %167 : vector<8x256xf32>
    %169 = vector.broadcast %7 : vector<8x1xf32> to vector<8x256xf32>
    %170 = arith.mulf %168, %169 : vector<8x256xf32>
    %171 = vector.broadcast %8 : vector<8x1xf32> to vector<8x256xf32>
    %172 = arith.addf %170, %171 : vector<8x256xf32>
    %cst_77 = arith.constant 0.000000e+00 : f32
    %173 = vector.broadcast %cst_77 : f32 to vector<8x256xf32>
    %174 = arith.cmpf oge, %172, %173 : vector<8x256xf32>
    %cst_78 = arith.constant 0.00999999977 : f32
    %175 = vector.broadcast %cst_78 : f32 to vector<8x256xf32>
    %176 = arith.mulf %175, %172 : vector<8x256xf32>
    %177 = arith.select %174, %172, %176 : vector<8x256xi1>, vector<8x256xf32>
    %c1_79 = arith.constant 1 : index
    %c0_80 = arith.constant 0 : index
    %c0_81 = arith.constant 0 : index
    %178 = vector.load %arg12[%c1_79, %c0_80, %c0_81] : memref<2x8x256xf32, #tpu.memory_space<vmem>>, vector<1x8x256xf32>
    %179 = vector.shape_cast %178 : vector<1x8x256xf32> to vector<8x256xf32>
    %180 = vector.shape_cast %177 : vector<8x256xf32> to vector<1x8x256xf32>
    tpu.vector_store %arg12[%c1_79, %c0_80, %c0_81], %180 {strides = array<i32>} : memref<2x8x256xf32, #tpu.memory_space<vmem>>, vector<1x8x256xf32>,
    return
  }
  func.func @transform_0(%arg0: i32) -> (i32, i32, i32) {
    %c0_i32 = arith.constant 0 : i32
    %c0_i32_0 = arith.constant 0 : i32
    %c0_i32_1 = arith.constant 0 : i32
    return %arg0, %c0_i32, %c0_i32_0 : i32, i32, i32
  }
  func.func @transform_1(%arg0: i32) -> (i32, i32) {
    %c0_i32 = arith.constant 0 : i32
    %c0_i32_0 = arith.constant 0 : i32
    %c0_i32_1 = arith.constant 0 : i32
    return %c0_i32, %c0_i32_0 : i32, i32
  }
  func.func @transform_2(%arg0: i32) -> (i32, i32) {
    %c0_i32 = arith.constant 0 : i32
    %c0_i32_0 = arith.constant 0 : i32
    %c0_i32_1 = arith.constant 0 : i32
    return %c0_i32, %c0_i32_0 : i32, i32
  }
  func.func @transform_3(%arg0: i32) -> (i32, i32) {
    %c0_i32 = arith.constant 0 : i32
    %c0_i32_0 = arith.constant 0 : i32
    %c0_i32_1 = arith.constant 0 : i32
    return %c0_i32, %c0_i32_0 : i32, i32
  }
  func.func @transform_4(%arg0: i32) -> (i32, i32) {
    %c0_i32 = arith.constant 0 : i32
    %c0_i32_0 = arith.constant 0 : i32
    %c0_i32_1 = arith.constant 0 : i32
    return %c0_i32, %c0_i32_0 : i32, i32
  }
  func.func @transform_5(%arg0: i32) -> (i32, i32) {
    %c0_i32 = arith.constant 0 : i32
    %c0_i32_0 = arith.constant 0 : i32
    %c0_i32_1 = arith.constant 0 : i32
    return %c0_i32, %c0_i32_0 : i32, i32
  }
  func.func @transform_6(%arg0: i32) -> (i32, i32) {
    %c0_i32 = arith.constant 0 : i32
    %c0_i32_0 = arith.constant 0 : i32
    %c0_i32_1 = arith.constant 0 : i32
    return %c0_i32, %c0_i32_0 : i32, i32
  }
  func.func @transform_7(%arg0: i32) -> (i32, i32) {
    %c0_i32 = arith.constant 0 : i32
    %c0_i32_0 = arith.constant 0 : i32
    %c0_i32_1 = arith.constant 0 : i32
    return %c0_i32, %c0_i32_0 : i32, i32
  }
  func.func @transform_8(%arg0: i32) -> (i32, i32) {
    %c0_i32 = arith.constant 0 : i32
    %c0_i32_0 = arith.constant 0 : i32
    %c0_i32_1 = arith.constant 0 : i32
    return %c0_i32, %c0_i32_0 : i32, i32
  }
  func.func @transform_9(%arg0: i32) -> (i32, i32) {
    %c0_i32 = arith.constant 0 : i32
    %c0_i32_0 = arith.constant 0 : i32
    %c0_i32_1 = arith.constant 0 : i32
    return %c0_i32, %c0_i32_0 : i32, i32
  }
  func.func @transform_10(%arg0: i32) -> (i32, i32) {
    %c0_i32 = arith.constant 0 : i32
    %c0_i32_0 = arith.constant 0 : i32
    %c0_i32_1 = arith.constant 0 : i32
    return %c0_i32, %c0_i32_0 : i32, i32
  }
  func.func @transform_11(%arg0: i32) -> (i32, i32, i32) {
    %c0_i32 = arith.constant 0 : i32
    %c0_i32_0 = arith.constant 0 : i32
    %c0_i32_1 = arith.constant 0 : i32
    return %arg0, %c0_i32, %c0_i32_0 : i32, i32, i32
  }
}

module attributes {stable_mosaic.version = 11 : i64} {
  func.func @_psp_fused_kernel(%arg0: i32, %arg1: memref<2x4x256xbf16, #tpu.memory_space<vmem>>, %arg2: memref<256x128xbf16, #tpu.memory_space<vmem>>, %arg3: memref<32x4xbf16, #tpu.memory_space<vmem>>, %arg4: memref<32x1xf32, #tpu.memory_space<vmem>>, %arg5: memref<32x1xf32, #tpu.memory_space<vmem>>, %arg6: memref<32x128xf32, #tpu.memory_space<vmem>>, %arg7: memref<128x256xbf16, #tpu.memory_space<vmem>>, %arg8: memref<72x36xbf16, #tpu.memory_space<vmem>>, %arg9: memref<9x256xf32, #tpu.memory_space<vmem>>, %arg10: memref<8x1xf32, #tpu.memory_space<vmem>>, %arg11: memref<8x1xf32, #tpu.memory_space<vmem>>, %arg12: memref<2x8x256xf32, #tpu.memory_space<vmem>>) attributes {dimension_semantics = [#tpu.dimension_semantics<parallel>], iteration_bounds = array<i64: 1>, scalar_prefetch = 0 : i64, scratch_operands = 0 : i64, tpu.core_type = #tpu.core_type<tc>, window_params = [{transform_indices = @transform_0, window_bounds = array<i64: 2, 4, 256>}, {pipeline_mode = #tpu.pipeline_mode<synchronous>, transform_indices = @transform_1, window_bounds = array<i64: 256, 128>}, {pipeline_mode = #tpu.pipeline_mode<synchronous>, transform_indices = @transform_2, window_bounds = array<i64: 32, 4>}, {pipeline_mode = #tpu.pipeline_mode<synchronous>, transform_indices = @transform_3, window_bounds = array<i64: 32, 1>}, {pipeline_mode = #tpu.pipeline_mode<synchronous>, transform_indices = @transform_4, window_bounds = array<i64: 32, 1>}, {pipeline_mode = #tpu.pipeline_mode<synchronous>, transform_indices = @transform_5, window_bounds = array<i64: 32, 128>}, {pipeline_mode = #tpu.pipeline_mode<synchronous>, transform_indices = @transform_6, window_bounds = array<i64: 128, 256>}, {pipeline_mode = #tpu.pipeline_mode<synchronous>, transform_indices = @transform_7, window_bounds = array<i64: 72, 36>}, {pipeline_mode = #tpu.pipeline_mode<synchronous>, transform_indices = @transform_8, window_bounds = array<i64: 9, 256>}, {pipeline_mode = #tpu.pipeline_mode<synchronous>, transform_indices = @transform_9, window_bounds = array<i64: 8, 1>}, {pipeline_mode = #tpu.pipeline_mode<synchronous>, transform_indices = @transform_10, window_bounds = array<i64: 8, 1>}, {transform_indices = @transform_11, window_bounds = array<i64: 2, 8, 256>}]} {
    %c0 = arith.constant 0 : index
    %c0_0 = arith.constant 0 : index
    %0 = vector.load %arg2[%c0, %c0_0] : memref<256x128xbf16, #tpu.memory_space<vmem>>, vector<256x128xbf16>
    %c0_1 = arith.constant 0 : index
    %c0_2 = arith.constant 0 : index
    %1 = vector.load %arg3[%c0_1, %c0_2] : memref<32x4xbf16, #tpu.memory_space<vmem>>, vector<32x4xbf16>
    %c0_3 = arith.constant 0 : index
    %c0_4 = arith.constant 0 : index
    %2 = vector.load %arg4[%c0_3, %c0_4] : memref<32x1xf32, #tpu.memory_space<vmem>>, vector<32x1xf32>
    %c0_5 = arith.constant 0 : index
    %c0_6 = arith.constant 0 : index
    %3 = vector.load %arg5[%c0_5, %c0_6] : memref<32x1xf32, #tpu.memory_space<vmem>>, vector<32x1xf32>
    %c0_7 = arith.constant 0 : index
    %c0_8 = arith.constant 0 : index
    %4 = vector.load %arg6[%c0_7, %c0_8] : memref<32x128xf32, #tpu.memory_space<vmem>>, vector<32x128xf32>
    %c0_9 = arith.constant 0 : index
    %c0_10 = arith.constant 0 : index
    %5 = vector.load %arg7[%c0_9, %c0_10] : memref<128x256xbf16, #tpu.memory_space<vmem>>, vector<128x256xbf16>
    %c0_11 = arith.constant 0 : index
    %c0_12 = arith.constant 0 : index
    %6 = vector.load %arg8[%c0_11, %c0_12] : memref<72x36xbf16, #tpu.memory_space<vmem>>, vector<72x36xbf16>
    %c0_13 = arith.constant 0 : index
    %c0_14 = arith.constant 0 : index
    %7 = vector.load %arg10[%c0_13, %c0_14] : memref<8x1xf32, #tpu.memory_space<vmem>>, vector<8x1xf32>
    %c0_15 = arith.constant 0 : index
    %c0_16 = arith.constant 0 : index
    %8 = vector.load %arg11[%c0_15, %c0_16] : memref<8x1xf32, #tpu.memory_space<vmem>>, vector<8x1xf32>
    %c0_17 = arith.constant 0 : index
    %c0_18 = arith.constant 0 : index
    %c0_19 = arith.constant 0 : index
    %9 = vector.load %arg1[%c0_17, %c0_18, %c0_19] : memref<2x4x256xbf16, #tpu.memory_space<vmem>>, vector<1x4x256xbf16>
    %10 = vector.shape_cast %9 : vector<1x4x256xbf16> to vector<4x256xbf16>
    %cst = arith.constant dense<0.000000e+00> : vector<4x128xf32>
    %11 = tpu.matmul %10, %0, %cst {dimension_numbers = #tpu.dot_dimension_numbers<[1], [0], [0], [1], [0, 0, 1, 1], [], []>} : vector<4x256xbf16>, vector<256x128xbf16>, vector<4x128xf32> -> vector<4x128xf32>
    %12 = arith.truncf %11 : vector<4x128xf32> to vector<4x128xbf16>
    %cst_20 = arith.constant dense<0.000000e+00> : vector<32x128xf32>
    %13 = tpu.matmul %1, %12, %cst_20 {dimension_numbers = #tpu.dot_dimension_numbers<[1], [0], [0], [1], [0, 0, 1, 1], [], []>} : vector<32x4xbf16>, vector<4x128xbf16>, vector<32x128xf32> -> vector<32x128xf32>
    %14 = vector.broadcast %2 : vector<32x1xf32> to vector<32x128xf32>
    %15 = arith.mulf %13, %14 : vector<32x128xf32>
    %16 = vector.broadcast %3 : vector<32x1xf32> to vector<32x128xf32>
    %17 = arith.addf %15, %16 : vector<32x128xf32>
    %cst_21 = arith.constant 0.000000e+00 : f32
    %18 = vector.broadcast %cst_21 : f32 to vector<32x128xf32>
    %19 = arith.cmpf oge, %17, %18 : vector<32x128xf32>
    %cst_22 = arith.constant 0.00999999977 : f32
    %20 = vector.broadcast %cst_22 : f32 to vector<32x128xf32>
    %21 = arith.mulf %20, %17 : vector<32x128xf32>
    %22 = arith.select %19, %17, %21 : vector<32x128xi1>, vector<32x128xf32>
    %23 = arith.mulf %22, %4 : vector<32x128xf32>
    %24 = arith.truncf %23 : vector<32x128xf32> to vector<32x128xbf16>
    %cst_23 = arith.constant dense<0.000000e+00> : vector<32x256xf32>
    %25 = tpu.matmul %24, %5, %cst_23 {dimension_numbers = #tpu.dot_dimension_numbers<[1], [0], [0], [1], [0, 0, 1, 1], [], []>} : vector<32x128xbf16>, vector<128x256xbf16>, vector<32x256xf32> -> vector<32x256xf32>
    %26 = arith.truncf %25 : vector<32x256xf32> to vector<32x256xbf16>
    %27 = tpu.concatenate %26, %10 in 0 : vector<32x256xbf16>, vector<4x256xbf16> -> vector<36x256xbf16>
    %cst_24 = arith.constant dense<0.000000e+00> : vector<72x256xf32>
    %28 = tpu.matmul %6, %27, %cst_24 {dimension_numbers = #tpu.dot_dimension_numbers<[1], [0], [0], [1], [0, 0, 1, 1], [], []>} : vector<72x36xbf16>, vector<36x256xbf16>, vector<72x256xf32> -> vector<72x256xf32>
    %cst_25 = arith.constant 0.000000e+00 : f32
    %29 = vector.broadcast %cst_25 : f32 to vector<8x256xf32>
    %30 = vector.extract_strided_slice %28 {offsets = [0, 0], sizes = [8, 256], strides = [1, 1]} : vector<72x256xf32> to vector<8x256xf32>
    %c17_i32 = arith.constant 17 : i32
    %31 = tpu.dynamic_rotate %30 by %c17_i32 dim 1 : vector<8x256xf32>, i32 -> vector<8x256xf32>
    %c0_26 = arith.constant 0 : index
    %c0_27 = arith.constant 0 : index
    %32 = vector.load %arg9[%c0_26, %c0_27] : memref<9x256xf32, #tpu.memory_space<vmem>>, vector<1x256xf32>
    %33 = vector.broadcast %32 : vector<1x256xf32> to vector<8x256xf32>
    %34 = arith.mulf %31, %33 : vector<8x256xf32>
    %35 = arith.addf %29, %34 : vector<8x256xf32>
    %36 = vector.extract_strided_slice %28 {offsets = [8, 0], sizes = [8, 256], strides = [1, 1]} : vector<72x256xf32> to vector<8x256xf32>
    %c16_i32 = arith.constant 16 : i32
    %37 = tpu.dynamic_rotate %36 by %c16_i32 dim 1 : vector<8x256xf32>, i32 -> vector<8x256xf32>
    %c1 = arith.constant 1 : index
    %c0_28 = arith.constant 0 : index
    %38 = vector.load %arg9[%c1, %c0_28] : memref<9x256xf32, #tpu.memory_space<vmem>>, vector<1x256xf32>
    %39 = vector.broadcast %38 : vector<1x256xf32> to vector<8x256xf32>
    %40 = arith.mulf %37, %39 : vector<8x256xf32>
    %41 = arith.addf %35, %40 : vector<8x256xf32>
    %42 = vector.extract_strided_slice %28 {offsets = [16, 0], sizes = [8, 256], strides = [1, 1]} : vector<72x256xf32> to vector<8x256xf32>
    %c15_i32 = arith.constant 15 : i32
    %43 = tpu.dynamic_rotate %42 by %c15_i32 dim 1 : vector<8x256xf32>, i32 -> vector<8x256xf32>
    %c2 = arith.constant 2 : index
    %c0_29 = arith.constant 0 : index
    %44 = vector.load %arg9[%c2, %c0_29] : memref<9x256xf32, #tpu.memory_space<vmem>>, vector<1x256xf32>
    %45 = vector.broadcast %44 : vector<1x256xf32> to vector<8x256xf32>
    %46 = arith.mulf %43, %45 : vector<8x256xf32>
    %47 = arith.addf %41, %46 : vector<8x256xf32>
    %48 = vector.extract_strided_slice %28 {offsets = [24, 0], sizes = [8, 256], strides = [1, 1]} : vector<72x256xf32> to vector<8x256xf32>
    %c1_i32 = arith.constant 1 : i32
    %49 = tpu.dynamic_rotate %48 by %c1_i32 dim 1 : vector<8x256xf32>, i32 -> vector<8x256xf32>
    %c3 = arith.constant 3 : index
    %c0_30 = arith.constant 0 : index
    %50 = vector.load %arg9[%c3, %c0_30] : memref<9x256xf32, #tpu.memory_space<vmem>>, vector<1x256xf32>
    %51 = vector.broadcast %50 : vector<1x256xf32> to vector<8x256xf32>
    %52 = arith.mulf %49, %51 : vector<8x256xf32>
    %53 = arith.addf %47, %52 : vector<8x256xf32>
    %54 = vector.extract_strided_slice %28 {offsets = [32, 0], sizes = [8, 256], strides = [1, 1]} : vector<72x256xf32> to vector<8x256xf32>
    %c4 = arith.constant 4 : index
    %c0_31 = arith.constant 0 : index
    %55 = vector.load %arg9[%c4, %c0_31] : memref<9x256xf32, #tpu.memory_space<vmem>>, vector<1x256xf32>
    %56 = vector.broadcast %55 : vector<1x256xf32> to vector<8x256xf32>
    %57 = arith.mulf %54, %56 : vector<8x256xf32>
    %58 = arith.addf %53, %57 : vector<8x256xf32>
    %59 = vector.extract_strided_slice %28 {offsets = [40, 0], sizes = [8, 256], strides = [1, 1]} : vector<72x256xf32> to vector<8x256xf32>
    %c255_i32 = arith.constant 255 : i32
    %60 = tpu.dynamic_rotate %59 by %c255_i32 dim 1 : vector<8x256xf32>, i32 -> vector<8x256xf32>
    %c5 = arith.constant 5 : index
    %c0_32 = arith.constant 0 : index
    %61 = vector.load %arg9[%c5, %c0_32] : memref<9x256xf32, #tpu.memory_space<vmem>>, vector<1x256xf32>
    %62 = vector.broadcast %61 : vector<1x256xf32> to vector<8x256xf32>
    %63 = arith.mulf %60, %62 : vector<8x256xf32>
    %64 = arith.addf %58, %63 : vector<8x256xf32>
    %65 = vector.extract_strided_slice %28 {offsets = [48, 0], sizes = [8, 256], strides = [1, 1]} : vector<72x256xf32> to vector<8x256xf32>
    %c241_i32 = arith.constant 241 : i32
    %66 = tpu.dynamic_rotate %65 by %c241_i32 dim 1 : vector<8x256xf32>, i32 -> vector<8x256xf32>
    %c6 = arith.constant 6 : index
    %c0_33 = arith.constant 0 : index
    %67 = vector.load %arg9[%c6, %c0_33] : memref<9x256xf32, #tpu.memory_space<vmem>>, vector<1x256xf32>
    %68 = vector.broadcast %67 : vector<1x256xf32> to vector<8x256xf32>
    %69 = arith.mulf %66, %68 : vector<8x256xf32>
    %70 = arith.addf %64, %69 : vector<8x256xf32>
    %71 = vector.extract_strided_slice %28 {offsets = [56, 0], sizes = [8, 256], strides = [1, 1]} : vector<72x256xf32> to vector<8x256xf32>
    %c240_i32 = arith.constant 240 : i32
    %72 = tpu.dynamic_rotate %71 by %c240_i32 dim 1 : vector<8x256xf32>, i32 -> vector<8x256xf32>
    %c7 = arith.constant 7 : index
    %c0_34 = arith.constant 0 : index
    %73 = vector.load %arg9[%c7, %c0_34] : memref<9x256xf32, #tpu.memory_space<vmem>>, vector<1x256xf32>
    %74 = vector.broadcast %73 : vector<1x256xf32> to vector<8x256xf32>
    %75 = arith.mulf %72, %74 : vector<8x256xf32>
    %76 = arith.addf %70, %75 : vector<8x256xf32>
    %77 = vector.extract_strided_slice %28 {offsets = [64, 0], sizes = [8, 256], strides = [1, 1]} : vector<72x256xf32> to vector<8x256xf32>
    %c239_i32 = arith.constant 239 : i32
    %78 = tpu.dynamic_rotate %77 by %c239_i32 dim 1 : vector<8x256xf32>, i32 -> vector<8x256xf32>
    %c8 = arith.constant 8 : index
    %c0_35 = arith.constant 0 : index
    %79 = vector.load %arg9[%c8, %c0_35] : memref<9x256xf32, #tpu.memory_space<vmem>>, vector<1x256xf32>
    %80 = vector.broadcast %79 : vector<1x256xf32> to vector<8x256xf32>
    %81 = arith.mulf %78, %80 : vector<8x256xf32>
    %82 = arith.addf %76, %81 : vector<8x256xf32>
    %83 = vector.broadcast %7 : vector<8x1xf32> to vector<8x256xf32>
    %84 = arith.mulf %82, %83 : vector<8x256xf32>
    %85 = vector.broadcast %8 : vector<8x1xf32> to vector<8x256xf32>
    %86 = arith.addf %84, %85 : vector<8x256xf32>
    %cst_36 = arith.constant 0.000000e+00 : f32
    %87 = vector.broadcast %cst_36 : f32 to vector<8x256xf32>
    %88 = arith.cmpf oge, %86, %87 : vector<8x256xf32>
    %cst_37 = arith.constant 0.00999999977 : f32
    %89 = vector.broadcast %cst_37 : f32 to vector<8x256xf32>
    %90 = arith.mulf %89, %86 : vector<8x256xf32>
    %91 = arith.select %88, %86, %90 : vector<8x256xi1>, vector<8x256xf32>
    %c0_38 = arith.constant 0 : index
    %c0_39 = arith.constant 0 : index
    %c0_40 = arith.constant 0 : index
    %92 = vector.load %arg12[%c0_38, %c0_39, %c0_40] : memref<2x8x256xf32, #tpu.memory_space<vmem>>, vector<1x8x256xf32>
    %93 = vector.shape_cast %92 : vector<1x8x256xf32> to vector<8x256xf32>
    %94 = vector.shape_cast %91 : vector<8x256xf32> to vector<1x8x256xf32>
    tpu.vector_store %arg12[%c0_38, %c0_39, %c0_40], %94 {strides = array<i32>} : memref<2x8x256xf32, #tpu.memory_space<vmem>>, vector<1x8x256xf32>,
    %c1_41 = arith.constant 1 : index
    %c0_42 = arith.constant 0 : index
    %c0_43 = arith.constant 0 : index
    %95 = vector.load %arg1[%c1_41, %c0_42, %c0_43] : memref<2x4x256xbf16, #tpu.memory_space<vmem>>, vector<1x4x256xbf16>
    %96 = vector.shape_cast %95 : vector<1x4x256xbf16> to vector<4x256xbf16>
    %cst_44 = arith.constant dense<0.000000e+00> : vector<4x128xf32>
    %97 = tpu.matmul %96, %0, %cst_44 {dimension_numbers = #tpu.dot_dimension_numbers<[1], [0], [0], [1], [0, 0, 1, 1], [], []>} : vector<4x256xbf16>, vector<256x128xbf16>, vector<4x128xf32> -> vector<4x128xf32>
    %98 = arith.truncf %97 : vector<4x128xf32> to vector<4x128xbf16>
    %cst_45 = arith.constant dense<0.000000e+00> : vector<32x128xf32>
    %99 = tpu.matmul %1, %98, %cst_45 {dimension_numbers = #tpu.dot_dimension_numbers<[1], [0], [0], [1], [0, 0, 1, 1], [], []>} : vector<32x4xbf16>, vector<4x128xbf16>, vector<32x128xf32> -> vector<32x128xf32>
    %100 = vector.broadcast %2 : vector<32x1xf32> to vector<32x128xf32>
    %101 = arith.mulf %99, %100 : vector<32x128xf32>
    %102 = vector.broadcast %3 : vector<32x1xf32> to vector<32x128xf32>
    %103 = arith.addf %101, %102 : vector<32x128xf32>
    %cst_46 = arith.constant 0.000000e+00 : f32
    %104 = vector.broadcast %cst_46 : f32 to vector<32x128xf32>
    %105 = arith.cmpf oge, %103, %104 : vector<32x128xf32>
    %cst_47 = arith.constant 0.00999999977 : f32
    %106 = vector.broadcast %cst_47 : f32 to vector<32x128xf32>
    %107 = arith.mulf %106, %103 : vector<32x128xf32>
    %108 = arith.select %105, %103, %107 : vector<32x128xi1>, vector<32x128xf32>
    %109 = arith.mulf %108, %4 : vector<32x128xf32>
    %110 = arith.truncf %109 : vector<32x128xf32> to vector<32x128xbf16>
    %cst_48 = arith.constant dense<0.000000e+00> : vector<32x256xf32>
    %111 = tpu.matmul %110, %5, %cst_48 {dimension_numbers = #tpu.dot_dimension_numbers<[1], [0], [0], [1], [0, 0, 1, 1], [], []>} : vector<32x128xbf16>, vector<128x256xbf16>, vector<32x256xf32> -> vector<32x256xf32>
    %112 = arith.truncf %111 : vector<32x256xf32> to vector<32x256xbf16>
    %113 = tpu.concatenate %112, %96 in 0 : vector<32x256xbf16>, vector<4x256xbf16> -> vector<36x256xbf16>
    %cst_49 = arith.constant dense<0.000000e+00> : vector<72x256xf32>
    %114 = tpu.matmul %6, %113, %cst_49 {dimension_numbers = #tpu.dot_dimension_numbers<[1], [0], [0], [1], [0, 0, 1, 1], [], []>} : vector<72x36xbf16>, vector<36x256xbf16>, vector<72x256xf32> -> vector<72x256xf32>
    %cst_50 = arith.constant 0.000000e+00 : f32
    %115 = vector.broadcast %cst_50 : f32 to vector<8x256xf32>
    %116 = vector.extract_strided_slice %114 {offsets = [0, 0], sizes = [8, 256], strides = [1, 1]} : vector<72x256xf32> to vector<8x256xf32>
    %c17_i32_51 = arith.constant 17 : i32
    %117 = tpu.dynamic_rotate %116 by %c17_i32_51 dim 1 : vector<8x256xf32>, i32 -> vector<8x256xf32>
    %c0_52 = arith.constant 0 : index
    %c0_53 = arith.constant 0 : index
    %118 = vector.load %arg9[%c0_52, %c0_53] : memref<9x256xf32, #tpu.memory_space<vmem>>, vector<1x256xf32>
    %119 = vector.broadcast %118 : vector<1x256xf32> to vector<8x256xf32>
    %120 = arith.mulf %117, %119 : vector<8x256xf32>
    %121 = arith.addf %115, %120 : vector<8x256xf32>
    %122 = vector.extract_strided_slice %114 {offsets = [8, 0], sizes = [8, 256], strides = [1, 1]} : vector<72x256xf32> to vector<8x256xf32>
    %c16_i32_54 = arith.constant 16 : i32
    %123 = tpu.dynamic_rotate %122 by %c16_i32_54 dim 1 : vector<8x256xf32>, i32 -> vector<8x256xf32>
    %c1_55 = arith.constant 1 : index
    %c0_56 = arith.constant 0 : index
    %124 = vector.load %arg9[%c1_55, %c0_56] : memref<9x256xf32, #tpu.memory_space<vmem>>, vector<1x256xf32>
    %125 = vector.broadcast %124 : vector<1x256xf32> to vector<8x256xf32>
    %126 = arith.mulf %123, %125 : vector<8x256xf32>
    %127 = arith.addf %121, %126 : vector<8x256xf32>
    %128 = vector.extract_strided_slice %114 {offsets = [16, 0], sizes = [8, 256], strides = [1, 1]} : vector<72x256xf32> to vector<8x256xf32>
    %c15_i32_57 = arith.constant 15 : i32
    %129 = tpu.dynamic_rotate %128 by %c15_i32_57 dim 1 : vector<8x256xf32>, i32 -> vector<8x256xf32>
    %c2_58 = arith.constant 2 : index
    %c0_59 = arith.constant 0 : index
    %130 = vector.load %arg9[%c2_58, %c0_59] : memref<9x256xf32, #tpu.memory_space<vmem>>, vector<1x256xf32>
    %131 = vector.broadcast %130 : vector<1x256xf32> to vector<8x256xf32>
    %132 = arith.mulf %129, %131 : vector<8x256xf32>
    %133 = arith.addf %127, %132 : vector<8x256xf32>
    %134 = vector.extract_strided_slice %114 {offsets = [24, 0], sizes = [8, 256], strides = [1, 1]} : vector<72x256xf32> to vector<8x256xf32>
    %c1_i32_60 = arith.constant 1 : i32
    %135 = tpu.dynamic_rotate %134 by %c1_i32_60 dim 1 : vector<8x256xf32>, i32 -> vector<8x256xf32>
    %c3_61 = arith.constant 3 : index
    %c0_62 = arith.constant 0 : index
    %136 = vector.load %arg9[%c3_61, %c0_62] : memref<9x256xf32, #tpu.memory_space<vmem>>, vector<1x256xf32>
    %137 = vector.broadcast %136 : vector<1x256xf32> to vector<8x256xf32>
    %138 = arith.mulf %135, %137 : vector<8x256xf32>
    %139 = arith.addf %133, %138 : vector<8x256xf32>
    %140 = vector.extract_strided_slice %114 {offsets = [32, 0], sizes = [8, 256], strides = [1, 1]} : vector<72x256xf32> to vector<8x256xf32>
    %c4_63 = arith.constant 4 : index
    %c0_64 = arith.constant 0 : index
    %141 = vector.load %arg9[%c4_63, %c0_64] : memref<9x256xf32, #tpu.memory_space<vmem>>, vector<1x256xf32>
    %142 = vector.broadcast %141 : vector<1x256xf32> to vector<8x256xf32>
    %143 = arith.mulf %140, %142 : vector<8x256xf32>
    %144 = arith.addf %139, %143 : vector<8x256xf32>
    %145 = vector.extract_strided_slice %114 {offsets = [40, 0], sizes = [8, 256], strides = [1, 1]} : vector<72x256xf32> to vector<8x256xf32>
    %c255_i32_65 = arith.constant 255 : i32
    %146 = tpu.dynamic_rotate %145 by %c255_i32_65 dim 1 : vector<8x256xf32>, i32 -> vector<8x256xf32>
    %c5_66 = arith.constant 5 : index
    %c0_67 = arith.constant 0 : index
    %147 = vector.load %arg9[%c5_66, %c0_67] : memref<9x256xf32, #tpu.memory_space<vmem>>, vector<1x256xf32>
    %148 = vector.broadcast %147 : vector<1x256xf32> to vector<8x256xf32>
    %149 = arith.mulf %146, %148 : vector<8x256xf32>
    %150 = arith.addf %144, %149 : vector<8x256xf32>
    %151 = vector.extract_strided_slice %114 {offsets = [48, 0], sizes = [8, 256], strides = [1, 1]} : vector<72x256xf32> to vector<8x256xf32>
    %c241_i32_68 = arith.constant 241 : i32
    %152 = tpu.dynamic_rotate %151 by %c241_i32_68 dim 1 : vector<8x256xf32>, i32 -> vector<8x256xf32>
    %c6_69 = arith.constant 6 : index
    %c0_70 = arith.constant 0 : index
    %153 = vector.load %arg9[%c6_69, %c0_70] : memref<9x256xf32, #tpu.memory_space<vmem>>, vector<1x256xf32>
    %154 = vector.broadcast %153 : vector<1x256xf32> to vector<8x256xf32>
    %155 = arith.mulf %152, %154 : vector<8x256xf32>
    %156 = arith.addf %150, %155 : vector<8x256xf32>
    %157 = vector.extract_strided_slice %114 {offsets = [56, 0], sizes = [8, 256], strides = [1, 1]} : vector<72x256xf32> to vector<8x256xf32>
    %c240_i32_71 = arith.constant 240 : i32
    %158 = tpu.dynamic_rotate %157 by %c240_i32_71 dim 1 : vector<8x256xf32>, i32 -> vector<8x256xf32>
    %c7_72 = arith.constant 7 : index
    %c0_73 = arith.constant 0 : index
    %159 = vector.load %arg9[%c7_72, %c0_73] : memref<9x256xf32, #tpu.memory_space<vmem>>, vector<1x256xf32>
    %160 = vector.broadcast %159 : vector<1x256xf32> to vector<8x256xf32>
    %161 = arith.mulf %158, %160 : vector<8x256xf32>
    %162 = arith.addf %156, %161 : vector<8x256xf32>
    %163 = vector.extract_strided_slice %114 {offsets = [64, 0], sizes = [8, 256], strides = [1, 1]} : vector<72x256xf32> to vector<8x256xf32>
    %c239_i32_74 = arith.constant 239 : i32
    %164 = tpu.dynamic_rotate %163 by %c239_i32_74 dim 1 : vector<8x256xf32>, i32 -> vector<8x256xf32>
    %c8_75 = arith.constant 8 : index
    %c0_76 = arith.constant 0 : index
    %165 = vector.load %arg9[%c8_75, %c0_76] : memref<9x256xf32, #tpu.memory_space<vmem>>, vector<1x256xf32>
    %166 = vector.broadcast %165 : vector<1x256xf32> to vector<8x256xf32>
    %167 = arith.mulf %164, %166 : vector<8x256xf32>
    %168 = arith.addf %162, %167 : vector<8x256xf32>
    %169 = vector.broadcast %7 : vector<8x1xf32> to vector<8x256xf32>
    %170 = arith.mulf %168, %169 : vector<8x256xf32>
    %171 = vector.broadcast %8 : vector<8x1xf32> to vector<8x256xf32>
    %172 = arith.addf %170, %171 : vector<8x256xf32>
    %cst_77 = arith.constant 0.000000e+00 : f32
    %173 = vector.broadcast %cst_77 : f32 to vector<8x256xf32>
    %174 = arith.cmpf oge, %172, %173 : vector<8x256xf32>
    %cst_78 = arith.constant 0.00999999977 : f32
    %175 = vector.broadcast %cst_78 : f32 to vector<8x256xf32>
    %176 = arith.mulf %175, %172 : vector<8x256xf32>
    %177 = arith.select %174, %172, %176 : vector<8x256xi1>, vector<8x256xf32>
    %c1_79 = arith.constant 1 : index
    %c0_80 = arith.constant 0 : index
    %c0_81 = arith.constant 0 : index
    %178 = vector.load %arg12[%c1_79, %c0_80, %c0_81] : memref<2x8x256xf32, #tpu.memory_space<vmem>>, vector<1x8x256xf32>
    %179 = vector.shape_cast %178 : vector<1x8x256xf32> to vector<8x256xf32>
    %180 = vector.shape_cast %177 : vector<8x256xf32> to vector<1x8x256xf32>
    tpu.vector_store %arg12[%c1_79, %c0_80, %c0_81], %180 {strides = array<i32>} : memref<2x8x256xf32, #tpu.memory_space<vmem>>, vector<1x8x256xf32>,
    return
  }
  func.func @transform_0(%arg0: i32) -> (i32, i32, i32) {
    %c0_i32 = arith.constant 0 : i32
    %c0_i32_0 = arith.constant 0 : i32
    %c0_i32_1 = arith.constant 0 : i32
    return %arg0, %c0_i32, %c0_i32_0 : i32, i32, i32
  }
  func.func @transform_1(%arg0: i32) -> (i32, i32) {
    %c0_i32 = arith.constant 0 : i32
    %c0_i32_0 = arith.constant 0 : i32
    %c0_i32_1 = arith.constant 0 : i32
    return %c0_i32, %c0_i32_0 : i32, i32
  }
  func.func @transform_2(%arg0: i32) -> (i32, i32) {
    %c0_i32 = arith.constant 0 : i32
    %c0_i32_0 = arith.constant 0 : i32
    %c0_i32_1 = arith.constant 0 : i32
    return %c0_i32, %c0_i32_0 : i32, i32
  }
  func.func @transform_3(%arg0: i32) -> (i32, i32) {
    %c0_i32 = arith.constant 0 : i32
    %c0_i32_0 = arith.constant 0 : i32
    %c0_i32_1 = arith.constant 0 : i32
    return %c0_i32, %c0_i32_0 : i32, i32
  }
  func.func @transform_4(%arg0: i32) -> (i32, i32) {
    %c0_i32 = arith.constant 0 : i32
    %c0_i32_0 = arith.constant 0 : i32
    %c0_i32_1 = arith.constant 0 : i32
    return %c0_i32, %c0_i32_0 : i32, i32
  }
  func.func @transform_5(%arg0: i32) -> (i32, i32) {
    %c0_i32 = arith.constant 0 : i32
    %c0_i32_0 = arith.constant 0 : i32
    %c0_i32_1 = arith.constant 0 : i32
    return %c0_i32, %c0_i32_0 : i32, i32
  }
  func.func @transform_6(%arg0: i32) -> (i32, i32) {
    %c0_i32 = arith.constant 0 : i32
    %c0_i32_0 = arith.constant 0 : i32
    %c0_i32_1 = arith.constant 0 : i32
    return %c0_i32, %c0_i32_0 : i32, i32
  }
  func.func @transform_7(%arg0: i32) -> (i32, i32) {
    %c0_i32 = arith.constant 0 : i32
    %c0_i32_0 = arith.constant 0 : i32
    %c0_i32_1 = arith.constant 0 : i32
    return %c0_i32, %c0_i32_0 : i32, i32
  }
  func.func @transform_8(%arg0: i32) -> (i32, i32) {
    %c0_i32 = arith.constant 0 : i32
    %c0_i32_0 = arith.constant 0 : i32
    %c0_i32_1 = arith.constant 0 : i32
    return %c0_i32, %c0_i32_0 : i32, i32
  }
  func.func @transform_9(%arg0: i32) -> (i32, i32) {
    %c0_i32 = arith.constant 0 : i32
    %c0_i32_0 = arith.constant 0 : i32
    %c0_i32_1 = arith.constant 0 : i32
    return %c0_i32, %c0_i32_0 : i32, i32
  }
  func.func @transform_10(%arg0: i32) -> (i32, i32) {
    %c0_i32 = arith.constant 0 : i32
    %c0_i32_0 = arith.constant 0 : i32
    %c0_i32_1 = arith.constant 0 : i32
    return %c0_i32, %c0_i32_0 : i32, i32
  }
  func.func @transform_11(%arg0: i32) -> (i32, i32, i32) {
    %c0_i32 = arith.constant 0 : i32
    %c0_i32_0 = arith.constant 0 : i32
    %c0_i32_1 = arith.constant 0 : i32
    return %arg0, %c0_i32, %c0_i32_0 : i32, i32, i32
  }
}

</mosaic_0001>

<llo_original>
// kernel: tpu_custom_call.1
$region0: #{tpu_custom_call.1}
  #allocation0 [shape = 'u32[]', space=smem, size = 0x4, offset = 0x4, fixed_abs, tag = 'smem constant byte address 0x4 - core index']
  #allocation1 [shape = 'u32[144,128]{1,0:T(1,128)}', space=vmem, size = 0x12000, scoped, tag = 'internal scratch']
  %s0 = inlined_call_operand.hbm [shape: bf16[2,4,256], index: 0, kind: input, shape index: {}]
  %s1 = inlined_call_operand.hbm [shape: bf16[256,128], index: 1, kind: input, shape index: {}]
  %s2 = inlined_call_operand.hbm [shape: bf16[32,4], index: 2, kind: input, shape index: {}]
  %s3 = inlined_call_operand.hbm [shape: f32[32,1], index: 3, kind: input, shape index: {}]
  %s4 = inlined_call_operand.hbm [shape: f32[32,1], index: 4, kind: input, shape index: {}]
  %s5 = inlined_call_operand.hbm [shape: f32[32,128], index: 5, kind: input, shape index: {}]
  %s6 = inlined_call_operand.hbm [shape: bf16[128,256], index: 6, kind: input, shape index: {}]
  %s7 = inlined_call_operand.hbm [shape: bf16[72,36], index: 7, kind: input, shape index: {}]
  %s8 = inlined_call_operand.hbm [shape: f32[9,256], index: 8, kind: input, shape index: {}]
  %s9 = inlined_call_operand.hbm [shape: f32[8,1], index: 9, kind: input, shape index: {}]
  %s10 = inlined_call_operand.hbm [shape: f32[8,1], index: 10, kind: input, shape index: {}]
  %s11 = inlined_call_operand.hbm [shape: f32[2,8,256], index: 11, kind: output, shape index: {}]
  %s12 = sld [smem:[#allocation0]]
  $region98: #{tpu_custom_call.1} parent=0
    _
  %s14 = ssub.s32 1, %s12
  %s15 = scalar_select 0, %s14, %s12
  $region1: #{tpu_custom_call.1} parent=0
    #allocation2 [shape = 'u8[4096]{0}', space=vmem, size = 0x1000, scoped, tag = 'input window, operand 0, single buffered']
    #allocation3 [shape = 's32[1]{0}', space=sflag, size = 0x4, scoped, tag = 'scoped memory for tpu_custom_call.1']
    #allocation4 [shape = 's32[1]{0}', space=sflag, size = 0x4, scoped, tag = 'scoped memory for tpu_custom_call.1']
    #allocation5 [shape = 'u8[65536]{0}', space=vmem, size = 0x10000, scoped, tag = 'input window, operand 1, single buffered']
    #allocation6 [shape = 's32[1]{0}', space=sflag, size = 0x4, scoped, tag = 'scoped memory for tpu_custom_call.1']
    #allocation7 [shape = 'u8[8192]{0}', space=vmem, size = 0x2000, scoped, tag = 'input window, operand 2, single buffered']
    #allocation8 [shape = 'u8[16384]{0}', space=vmem, size = 0x4000, scoped, tag = 'input window, operand 3, single buffered']
    #allocation9 [shape = 's32[1]{0}', space=sflag, size = 0x4, scoped, tag = 'scoped memory for tpu_custom_call.1']
    #allocation10 [shape = 'u8[16384]{0}', space=vmem, size = 0x4000, scoped, tag = 'input window, operand 4, single buffered']
    #allocation11 [shape = 'u8[16384]{0}', space=vmem, size = 0x4000, scoped, tag = 'input window, operand 5, single buffered']
    #allocation12 [shape = 's32[1]{0}', space=sflag, size = 0x4, scoped, tag = 'scoped memory for tpu_custom_call.1']
    #allocation13 [shape = 'u8[65536]{0}', space=vmem, size = 0x10000, scoped, tag = 'input window, operand 6, single buffered']
    #allocation14 [shape = 'u8[18432]{0}', space=vmem, size = 0x4800, scoped, tag = 'input window, operand 7, single buffered']
    #allocation15 [shape = 's32[1]{0}', space=sflag, size = 0x4, scoped, tag = 'scoped memory for tpu_custom_call.1']
    #allocation16 [shape = 'u8[16384]{0}', space=vmem, size = 0x4000, scoped, tag = 'input window, operand 8, single buffered']
    #allocation17 [shape = 'u8[4096]{0}', space=vmem, size = 0x1000, scoped, tag = 'input window, operand 9, single buffered']
    #allocation18 [shape = 's32[1]{0}', space=sflag, size = 0x4, scoped, tag = 'scoped memory for tpu_custom_call.1']
    #allocation19 [shape = 'u8[4096]{0}', space=vmem, size = 0x1000, scoped, tag = 'input window, operand 10, single buffered']
    #allocation20 [shape = 'u8[16384]{0}', space=vmem, size = 0x4000, scoped, tag = 'output window, operand 0, single buffered']
    %16 = vsyncpa [#allocation3], 0
    %17 = vsyncpa [#allocation6], 0
    %18 = vsyncpa [#allocation9], 0
    %19 = vsyncpa [#allocation12], 0
    %20 = vsyncpa [#allocation15], 0
    %21 = vsyncpa [#allocation18], 0
    %22 = vsyncpa [#allocation4], 0
    // Predicated region
    $region2: #{tpu_custom_call.1} parent=1 // pred_check
      _
    $region3: #{tpu_custom_call.1} parent=1 // pred_check_branch
      %24 = sbr.rel (0) target = $region5
    $region4: #{tpu_custom_call.1} parent=1 // pred_region
      %s26 = ssub.s32 128, 128
      %27 = vsyncadd [#allocation3], %s26
      %s28 = sshll.u32 [#allocation2], 4
      %s29 = int_to_ptr.vmem [resolvable:$true] %s28
      %34 = dma.hbm_to_vmem [thread:$0]  %s0, 128, %s29, [#allocation3], 64, 64, 4
    $region5: #{tpu_custom_call.1} parent=1 // pred_fallthru
      _
    // Predicated region
    $region6: #{tpu_custom_call.1} parent=1 // pred_check
      _
    $region7: #{tpu_custom_call.1} parent=1 // pred_check_branch
      %36 = sbr.rel (0) target = $region9
    $region8: #{tpu_custom_call.1} parent=1 // pred_region
      %s38 = ssub.s32 2048, 2048
      %39 = vsyncadd [#allocation6], %s38
      %s40 = sshll.u32 [#allocation5], 4
      %s41 = int_to_ptr.vmem [resolvable:$true] %s40
      %46 = dma.hbm_to_vmem [thread:$0]  %s1, 2048, %s41, [#allocation6], 64, 64, 4
    $region9: #{tpu_custom_call.1} parent=1 // pred_fallthru
      _
    // Predicated region
    $region10: #{tpu_custom_call.1} parent=1 // pred_check
      _
    $region11: #{tpu_custom_call.1} parent=1 // pred_check_branch
      %48 = sbr.rel (0) target = $region13
    $region12: #{tpu_custom_call.1} parent=1 // pred_region
      %s50 = ssub.s32 256, 256
      %51 = vsyncadd [#allocation6], %s50
      %s52 = sshll.u32 [#allocation7], 4
      %s53 = int_to_ptr.vmem [resolvable:$true] %s52
      %58 = dma.hbm_to_vmem [thread:$0]  %s2, 256, %s53, [#allocation6], 64, 64, 4
    $region13: #{tpu_custom_call.1} parent=1 // pred_fallthru
      _
    // Predicated region
    $region14: #{tpu_custom_call.1} parent=1 // pred_check
      _
    $region15: #{tpu_custom_call.1} parent=1 // pred_check_branch
      %60 = sbr.rel (0) target = $region17
    $region16: #{tpu_custom_call.1} parent=1 // pred_region
      %s62 = ssub.s32 512, 512
      %63 = vsyncadd [#allocation9], %s62
      %s64 = sshll.u32 [#allocation8], 4
      %s65 = int_to_ptr.vmem [resolvable:$true] %s64
      %70 = dma.hbm_to_vmem [thread:$0]  %s3, 512, %s65, [#allocation9], 128, 128, 8
    $region17: #{tpu_custom_call.1} parent=1 // pred_fallthru
      _
    // Predicated region
    $region18: #{tpu_custom_call.1} parent=1 // pred_check
      _
    $region19: #{tpu_custom_call.1} parent=1 // pred_check_branch
      %72 = sbr.rel (0) target = $region21
    $region20: #{tpu_custom_call.1} parent=1 // pred_region
      %s74 = ssub.s32 512, 512
      %75 = vsyncadd [#allocation9], %s74
      %s76 = sshll.u32 [#allocation10], 4
      %s77 = int_to_ptr.vmem [resolvable:$true] %s76
      %82 = dma.hbm_to_vmem [thread:$0]  %s4, 512, %s77, [#allocation9], 128, 128, 8
    $region21: #{tpu_custom_call.1} parent=1 // pred_fallthru
      _
    // Predicated region
    $region22: #{tpu_custom_call.1} parent=1 // pred_check
      _
    $region23: #{tpu_custom_call.1} parent=1 // pred_check_branch
      %84 = sbr.rel (0) target = $region25
    $region24: #{tpu_custom_call.1} parent=1 // pred_region
      %s86 = ssub.s32 512, 512
      %87 = vsyncadd [#allocation12], %s86
      %s88 = sshll.u32 [#allocation11], 4
      %s89 = int_to_ptr.vmem [resolvable:$true] %s88
      %94 = dma.hbm_to_vmem [thread:$0]  %s5, 512, %s89, [#allocation12], 128, 128, 8
    $region25: #{tpu_custom_call.1} parent=1 // pred_fallthru
      _
    // Predicated region
    $region26: #{tpu_custom_call.1} parent=1 // pred_check
      _
    $region27: #{tpu_custom_call.1} parent=1 // pred_check_branch
      %96 = sbr.rel (0) target = $region29
    $region28: #{tpu_custom_call.1} parent=1 // pred_region
      %s98 = ssub.s32 2048, 2048
      %99 = vsyncadd [#allocation12], %s98
      %s100 = sshll.u32 [#allocation13], 4
      %s101 = int_to_ptr.vmem [resolvable:$true] %s100
      %106 = dma.hbm_to_vmem [thread:$0]  %s6, 2048, %s101, [#allocation12], 128, 128, 8
    $region29: #{tpu_custom_call.1} parent=1 // pred_fallthru
      _
    // Predicated region
    $region30: #{tpu_custom_call.1} parent=1 // pred_check
      _
    $region31: #{tpu_custom_call.1} parent=1 // pred_check_branch
      %108 = sbr.rel (0) target = $region33
    $region32: #{tpu_custom_call.1} parent=1 // pred_region
      %s110 = ssub.s32 576, 576
      %111 = vsyncadd [#allocation15], %s110
      %s112 = sshll.u32 [#allocation14], 4
      %s113 = int_to_ptr.vmem [resolvable:$true] %s112
      %118 = dma.hbm_to_vmem [thread:$0]  %s7, 576, %s113, [#allocation15], 64, 64, 4
    $region33: #{tpu_custom_call.1} parent=1 // pred_fallthru
      _
    // Predicated region
    $region34: #{tpu_custom_call.1} parent=1 // pred_check
      _
    $region35: #{tpu_custom_call.1} parent=1 // pred_check_branch
      %120 = sbr.rel (0) target = $region37
    $region36: #{tpu_custom_call.1} parent=1 // pred_region
      %s122 = ssub.s32 512, 512
      %123 = vsyncadd [#allocation15], %s122
      %s124 = sshll.u32 [#allocation16], 4
      %s125 = int_to_ptr.vmem [resolvable:$true] %s124
      %130 = dma.hbm_to_vmem [thread:$0]  %s8, 512, %s125, [#allocation15], 256, 256, 16
    $region37: #{tpu_custom_call.1} parent=1 // pred_fallthru
      _
    // Predicated region
    $region38: #{tpu_custom_call.1} parent=1 // pred_check
      _
    $region39: #{tpu_custom_call.1} parent=1 // pred_check_branch
      %132 = sbr.rel (0) target = $region41
    $region40: #{tpu_custom_call.1} parent=1 // pred_region
      %s134 = ssub.s32 128, 128
      %135 = vsyncadd [#allocation18], %s134
      %s137 = sshll.u32 [#allocation17], 4
      %s138 = int_to_ptr.vmem [resolvable:$true] %s137
      %140 = dma.hbm_to_vmem [thread:$0]  %s9, 128, %s138, [#allocation18]
    $region41: #{tpu_custom_call.1} parent=1 // pred_fallthru
      _
    // Predicated region
    $region42: #{tpu_custom_call.1} parent=1 // pred_check
      _
    $region43: #{tpu_custom_call.1} parent=1 // pred_check_branch
      %142 = sbr.rel (0) target = $region45
    $region44: #{tpu_custom_call.1} parent=1 // pred_region
      %s144 = ssub.s32 128, 128
      %145 = vsyncadd [#allocation18], %s144
      %s147 = sshll.u32 [#allocation19], 4
      %s148 = int_to_ptr.vmem [resolvable:$true] %s147
      %150 = dma.hbm_to_vmem [thread:$0]  %s10, 128, %s148, [#allocation18]
    $region45: #{tpu_custom_call.1} parent=1 // pred_fallthru
      _
    // Predicated region
    $region46: #{tpu_custom_call.1} parent=1 // pred_check
      _
    $region47: #{tpu_custom_call.1} parent=1 // pred_check_branch
      %152 = sbr.rel (0) target = $region49
    $region48: #{tpu_custom_call.1} parent=1 // pred_region
      %153 = dma.done [#allocation3], 128
    $region49: #{tpu_custom_call.1} parent=1 // pred_fallthru
      _
    // Predicated region
    $region50: #{tpu_custom_call.1} parent=1 // pred_check
      _
    $region51: #{tpu_custom_call.1} parent=1 // pred_check_branch
      %155 = sbr.rel (0) target = $region53
    $region52: #{tpu_custom_call.1} parent=1 // pred_region
      %156 = dma.done [#allocation6], 2048
    $region53: #{tpu_custom_call.1} parent=1 // pred_fallthru
      _
    // Predicated region
    $region54: #{tpu_custom_call.1} parent=1 // pred_check
      _
    $region55: #{tpu_custom_call.1} parent=1 // pred_check_branch
      %158 = sbr.rel (0) target = $region57
    $region56: #{tpu_custom_call.1} parent=1 // pred_region
      %159 = dma.done [#allocation6], 256
    $region57: #{tpu_custom_call.1} parent=1 // pred_fallthru
      _
    // Predicated region
    $region58: #{tpu_custom_call.1} parent=1 // pred_check
      _
    $region59: #{tpu_custom_call.1} parent=1 // pred_check_branch
      %161 = sbr.rel (0) target = $region61
    $region60: #{tpu_custom_call.1} parent=1 // pred_region
      %162 = dma.done [#allocation9], 512
    $region61: #{tpu_custom_call.1} parent=1 // pred_fallthru
      _
    // Predicated region
    $region62: #{tpu_custom_call.1} parent=1 // pred_check
      _
    $region63: #{tpu_custom_call.1} parent=1 // pred_check_branch
      %164 = sbr.rel (0) target = $region65
    $region64: #{tpu_custom_call.1} parent=1 // pred_region
      %165 = dma.done [#allocation9], 512
    $region65: #{tpu_custom_call.1} parent=1 // pred_fallthru
      _
    // Predicated region
    $region66: #{tpu_custom_call.1} parent=1 // pred_check
      _
    $region67: #{tpu_custom_call.1} parent=1 // pred_check_branch
      %167 = sbr.rel (0) target = $region69
    $region68: #{tpu_custom_call.1} parent=1 // pred_region
      %168 = dma.done [#allocation12], 512
    $region69: #{tpu_custom_call.1} parent=1 // pred_fallthru
      _
    // Predicated region
    $region70: #{tpu_custom_call.1} parent=1 // pred_check
      _
    $region71: #{tpu_custom_call.1} parent=1 // pred_check_branch
      %170 = sbr.rel (0) target = $region73
    $region72: #{tpu_custom_call.1} parent=1 // pred_region
      %171 = dma.done [#allocation12], 2048
    $region73: #{tpu_custom_call.1} parent=1 // pred_fallthru
      _
    // Predicated region
    $region74: #{tpu_custom_call.1} parent=1 // pred_check
      _
    $region75: #{tpu_custom_call.1} parent=1 // pred_check_branch
      %173 = sbr.rel (0) target = $region77
    $region76: #{tpu_custom_call.1} parent=1 // pred_region
      %174 = dma.done [#allocation15], 576
    $region77: #{tpu_custom_call.1} parent=1 // pred_fallthru
      _
    // Predicated region
    $region78: #{tpu_custom_call.1} parent=1 // pred_check
      _
    $region79: #{tpu_custom_call.1} parent=1 // pred_check_branch
      %176 = sbr.rel (0) target = $region81
    $region80: #{tpu_custom_call.1} parent=1 // pred_region
      %177 = dma.done [#allocation15], 512
    $region81: #{tpu_custom_call.1} parent=1 // pred_fallthru
      _
    // Predicated region
    $region82: #{tpu_custom_call.1} parent=1 // pred_check
      _
    $region83: #{tpu_custom_call.1} parent=1 // pred_check_branch
      %179 = sbr.rel (0) target = $region85
    $region84: #{tpu_custom_call.1} parent=1 // pred_region
      %180 = dma.done [#allocation18], 128
    $region85: #{tpu_custom_call.1} parent=1 // pred_fallthru
      _
    // Predicated region
    $region86: #{tpu_custom_call.1} parent=1 // pred_check
      _
    $region87: #{tpu_custom_call.1} parent=1 // pred_check_branch
      %182 = sbr.rel (0) target = $region89
    $region88: #{tpu_custom_call.1} parent=1 // pred_region
      %183 = dma.done [#allocation18], 128
    $region89: #{tpu_custom_call.1} parent=1 // pred_fallthru
      _
    %v185 = vld [vmem:[#allocation5] sm:$0xf]
    %v186 = vld [vmem:[#allocation5 + $0x4] sm:$0xf]
    %v187 = vld [vmem:[#allocation5 + $0x8] sm:$0xf]
    %v188 = vld [vmem:[#allocation5 + $0xc] sm:$0xf]
    %v189 = vld [vmem:[#allocation5 + $0x10] sm:$0xf]
    %v190 = vld [vmem:[#allocation5 + $0x14] sm:$0xf]
    %v191 = vld [vmem:[#allocation5 + $0x18] sm:$0xf]
    %v192 = vld [vmem:[#allocation5 + $0x1c] sm:$0xf]
    %v193 = vld [vmem:[#allocation5 + $0x20] sm:$0xf]
    %v194 = vld [vmem:[#allocation5 + $0x24] sm:$0xf]
    %v195 = vld [vmem:[#allocation5 + $0x28] sm:$0xf]
    %v196 = vld [vmem:[#allocation5 + $0x2c] sm:$0xf]
    %v197 = vld [vmem:[#allocation5 + $0x30] sm:$0xf]
    %v198 = vld [vmem:[#allocation5 + $0x34] sm:$0xf]
    %v199 = vld [vmem:[#allocation5 + $0x38] sm:$0xf]
    %v200 = vld [vmem:[#allocation5 + $0x3c] sm:$0xf]
    %v201 = vld [vmem:[#allocation5 + $0x40] sm:$0xf]
    %v202 = vld [vmem:[#allocation5 + $0x44] sm:$0xf]
    %v203 = vld [vmem:[#allocation5 + $0x48] sm:$0xf]
    %v204 = vld [vmem:[#allocation5 + $0x4c] sm:$0xf]
    %v205 = vld [vmem:[#allocation5 + $0x50] sm:$0xf]
    %v206 = vld [vmem:[#allocation5 + $0x54] sm:$0xf]
    %v207 = vld [vmem:[#allocation5 + $0x58] sm:$0xf]
    %v208 = vld [vmem:[#allocation5 + $0x5c] sm:$0xf]
    %v209 = vld [vmem:[#allocation5 + $0x60] sm:$0xf]
    %v210 = vld [vmem:[#allocation5 + $0x64] sm:$0xf]
    %v211 = vld [vmem:[#allocation5 + $0x68] sm:$0xf]
    %v212 = vld [vmem:[#allocation5 + $0x6c] sm:$0xf]
    %v213 = vld [vmem:[#allocation5 + $0x70] sm:$0xf]
    %v214 = vld [vmem:[#allocation5 + $0x74] sm:$0xf]
    %v215 = vld [vmem:[#allocation5 + $0x78] sm:$0xf]
    %v216 = vld [vmem:[#allocation5 + $0x7c] sm:$0xf]
    %v217 = vld [vmem:[#allocation7] sm:$0xf]
    %v218 = vld [vmem:[#allocation7 + $0x4] sm:$0xf]
    %v219 = vld [vmem:[#allocation7 + $0x8] sm:$0xf]
    %v220 = vld [vmem:[#allocation7 + $0xc] sm:$0xf]
    %v221 = vld [vmem:[#allocation8] sm:$0xff]
    %v222 = vld [vmem:[#allocation8 + $0x8] sm:$0xff]
    %v223 = vld [vmem:[#allocation8 + $0x10] sm:$0xff]
    %v224 = vld [vmem:[#allocation8 + $0x18] sm:$0xff]
    %v225 = vld [vmem:[#allocation10] sm:$0xff]
    %v226 = vld [vmem:[#allocation10 + $0x8] sm:$0xff]
    %v227 = vld [vmem:[#allocation10 + $0x10] sm:$0xff]
    %v228 = vld [vmem:[#allocation10 + $0x18] sm:$0xff]
    %v229 = vld [vmem:[#allocation11] sm:$0xff]
    %v230 = vld [vmem:[#allocation11 + $0x8] sm:$0xff]
    %v231 = vld [vmem:[#allocation11 + $0x10] sm:$0xff]
    %v232 = vld [vmem:[#allocation11 + $0x18] sm:$0xff]
    %v233 = vld [vmem:[#allocation13] sm:$0xff]
    %v234 = vld [vmem:[#allocation13 + $0x8] sm:$0xff]
    %v235 = vld [vmem:[#allocation13 + $0x10] sm:$0xff]
    %v236 = vld [vmem:[#allocation13 + $0x18] sm:$0xff]
    %v237 = vld [vmem:[#allocation13 + $0x20] sm:$0xff]
    %v238 = vld [vmem:[#allocation13 + $0x28] sm:$0xff]
    %v239 = vld [vmem:[#allocation13 + $0x30] sm:$0xff]
    %v240 = vld [vmem:[#allocation13 + $0x38] sm:$0xff]
    %v241 = vld [vmem:[#allocation13 + $0x40] sm:$0xff]
    %v242 = vld [vmem:[#allocation13 + $0x48] sm:$0xff]
    %v243 = vld [vmem:[#allocation13 + $0x50] sm:$0xff]
    %v244 = vld [vmem:[#allocation13 + $0x58] sm:$0xff]
    %v245 = vld [vmem:[#allocation13 + $0x60] sm:$0xff]
    %v246 = vld [vmem:[#allocation13 + $0x68] sm:$0xff]
    %v247 = vld [vmem:[#allocation13 + $0x70] sm:$0xff]
    %v248 = vld [vmem:[#allocation13 + $0x78] sm:$0xff]
    %v249 = vld [vmem:[#allocation14] sm:$0xf]
    %v250 = vld [vmem:[#allocation14 + $0x4] sm:$0xf]
    %v251 = vld [vmem:[#allocation14 + $0x8] sm:$0xf]
    %v252 = vld [vmem:[#allocation14 + $0xc] sm:$0xf]
    %v253 = vld [vmem:[#allocation14 + $0x10] sm:$0xf]
    %v254 = vld [vmem:[#allocation14 + $0x14] sm:$0xf]
    %v255 = vld [vmem:[#allocation14 + $0x18] sm:$0xf]
    %v256 = vld [vmem:[#allocation14 + $0x1c] sm:$0xf]
    %v257 = vld [vmem:[#allocation14 + $0x20] sm:$0xf]
    %v258 = vld [vmem:[#allocation17] sm:$0xff]
    %v259 = vld [vmem:[#allocation19] sm:$0xff]
    %v260 = vld [vmem:[#allocation2] sm:$0xf]
    %v263 = vunpack.c.l.s4 1983009808
    %v264 = vunpack.c.0.s8 %v263
    %v265 = vlaneseq
    %v266 = vshrl.u32 %v265, 7
    %v267 = vsub.s32 %v264, %v266
    %v268 = vrot.slane %v260, %v267
    %v269 = vcombine.high %v268, %v268
    %v304 = vunpack.c.l.b16 %v185
    %v305 = vunpack.c.l.b16 %v186
    %v306 = vunpack.c.l.b16 %v187
    %v307 = vunpack.c.l.b16 %v188
    %v308 = vunpack.c.l.b16 %v189
    %v309 = vunpack.c.l.b16 %v190
    %v310 = vunpack.c.l.b16 %v191
    %v311 = vunpack.c.l.b16 %v192
    %v312 = vunpack.c.l.b16 %v193
    %v313 = vunpack.c.l.b16 %v194
    %v314 = vunpack.c.l.b16 %v195
    %v315 = vunpack.c.l.b16 %v196
    %v316 = vunpack.c.l.b16 %v197
    %v317 = vunpack.c.l.b16 %v198
    %v318 = vunpack.c.l.b16 %v199
    %v319 = vunpack.c.l.b16 %v200
    %v320 = vunpack.c.l.b16 %v201
    %v321 = vunpack.c.l.b16 %v202
    %v322 = vunpack.c.l.b16 %v203
    %v323 = vunpack.c.l.b16 %v204
    %v324 = vunpack.c.l.b16 %v205
    %v325 = vunpack.c.l.b16 %v206
    %v326 = vunpack.c.l.b16 %v207
    %v327 = vunpack.c.l.b16 %v208
    %v328 = vunpack.c.l.b16 %v209
    %v329 = vunpack.c.l.b16 %v210
    %v330 = vunpack.c.l.b16 %v211
    %v331 = vunpack.c.l.b16 %v212
    %v332 = vunpack.c.l.b16 %v213
    %v333 = vunpack.c.l.b16 %v214
    %v334 = vunpack.c.l.b16 %v215
    %v335 = vunpack.c.l.b16 %v216
    %v336 = vpack.c.b16 %v305, %v304
    %v337 = vpack.c.b16 %v307, %v306
    %v338 = vpack.c.b16 %v309, %v308
    %v339 = vpack.c.b16 %v311, %v310
    %v340 = vpack.c.b16 %v313, %v312
    %v341 = vpack.c.b16 %v315, %v314
    %v342 = vpack.c.b16 %v317, %v316
    %v343 = vpack.c.b16 %v319, %v318
    %v344 = vpack.c.b16 %v321, %v320
    %v345 = vpack.c.b16 %v323, %v322
    %v346 = vpack.c.b16 %v325, %v324
    %v347 = vpack.c.b16 %v327, %v326
    %v348 = vpack.c.b16 %v329, %v328
    %v349 = vpack.c.b16 %v331, %v330
    %v350 = vpack.c.b16 %v333, %v332
    %v351 = vpack.c.b16 %v335, %v334
    %368 = vmatprep.subr.bf16.mxu0 0
    %369 = vmatpush1.bf16.msra.mxu0 %v336
    %370 = vmatprep.subr.bf16.mxu0 0
    %371 = vmatpush1.bf16.msra.mxu0 %v337
    %372 = vmatprep.subr.bf16.mxu0 0
    %373 = vmatpush1.bf16.msra.mxu0 %v338
    %374 = vmatprep.subr.bf16.mxu0 0
    %375 = vmatpush1.bf16.msra.mxu0 %v339
    %376 = vmatprep.subr.bf16.mxu0 0
    %377 = vmatpush1.bf16.msra.mxu0 %v340
    %378 = vmatprep.subr.bf16.mxu0 0
    %379 = vmatpush1.bf16.msra.mxu0 %v341
    %380 = vmatprep.subr.bf16.mxu0 0
    %381 = vmatpush1.bf16.msra.mxu0 %v342
    %382 = vmatprep.subr.bf16.mxu0 0
    %383 = vmatpush1.bf16.msra.mxu0 %v343
    %384 = vmatprep.subr.bf16.mxu0 0
    %385 = vmatpush1.bf16.msra.mxu0 %v344
    %386 = vmatprep.subr.bf16.mxu0 0
    %387 = vmatpush1.bf16.msra.mxu0 %v345
    %388 = vmatprep.subr.bf16.mxu0 0
    %389 = vmatpush1.bf16.msra.mxu0 %v346
    %390 = vmatprep.subr.bf16.mxu0 0
    %391 = vmatpush1.bf16.msra.mxu0 %v347
    %392 = vmatprep.subr.bf16.mxu0 0
    %393 = vmatpush1.bf16.msra.mxu0 %v348
    %394 = vmatprep.subr.bf16.mxu0 0
    %395 = vmatpush1.bf16.msra.mxu0 %v349
    %396 = vmatprep.subr.bf16.mxu0 0
    %397 = vmatpush1.bf16.msra.mxu0 %v350
    %398 = vmatprep.subr.bf16.mxu0 0
    %399 = vmatpush1.bf16.msra.mxu0 %v351
    %400 = vmatprep.mubr.bf16.mxu0 %v269
    %401 = vmatmul.mubr.bf16.gmra.mrb[0].mxu0 %v268
    %v402 = vpop.f32.mrb[0].mxu0
    %v403 = vadd.f32 0.0, %v402
    %v404 = vpop.f32.mrb[0].mxu0
    %v405 = vpop.f32.mrb[0].mxu0
    %v406 = vpop.f32.mrb[0].mxu0
    %407 = vdwg.mxu0
    %v408 = vpack.c.bf16 %v403, %v403
    %v413 = vunpack.c.l.b16 %v217
    %v414 = vunpack.c.l.b16 %v218
    %v415 = vunpack.c.l.b16 %v219
    %v416 = vunpack.c.l.b16 %v220
    %v417 = vpack.c.b16 %v414, %v413
    %v418 = vpack.c.b16 %v416, %v415
    %vm419 = vcmask 31744
    %v421 = vsel %vm419, %v417, 0
    %v424 = vsel %vm419, %v418, 0
    %vm426 = vcmask 1041408
    %v428 = vsel %vm426, %v408, 0
    %430 = vmatprep.subr.bf16.mxu0 0
    %431 = vmatpush1.bf16.msra.mxu0 %v428
    %432 = vmatprep.subr.bf16.mxu0 0
    %433 = vmatpush1.bf16.msra.mxu0 0
    %434 = vmatprep.subr.bf16.mxu0 0
    %435 = vmatpush1.bf16.msra.mxu0 0
    %436 = vmatprep.subr.bf16.mxu0 0
    %437 = vmatpush1.bf16.msra.mxu0 0
    %438 = vmatprep.subr.bf16.mxu0 0
    %439 = vmatpush1.bf16.msra.mxu0 0
    %440 = vmatprep.subr.bf16.mxu0 0
    %441 = vmatpush1.bf16.msra.mxu0 0
    %442 = vmatprep.subr.bf16.mxu0 0
    %443 = vmatpush1.bf16.msra.mxu0 0
    %444 = vmatprep.subr.bf16.mxu0 0
    %445 = vmatpush1.bf16.msra.mxu0 0
    %446 = vmatprep.subr.bf16.mxu0 0
    %447 = vmatpush1.bf16.msra.mxu0 0
    %448 = vmatprep.subr.bf16.mxu0 0
    %449 = vmatpush1.bf16.msra.mxu0 0
    %450 = vmatprep.subr.bf16.mxu0 0
    %451 = vmatpush1.bf16.msra.mxu0 0
    %452 = vmatprep.subr.bf16.mxu0 0
    %453 = vmatpush1.bf16.msra.mxu0 0
    %454 = vmatprep.subr.bf16.mxu0 0
    %455 = vmatpush1.bf16.msra.mxu0 0
    %456 = vmatprep.subr.bf16.mxu0 0
    %457 = vmatpush1.bf16.msra.mxu0 0
    %458 = vmatprep.subr.bf16.mxu0 0
    %459 = vmatpush1.bf16.msra.mxu0 0
    %460 = vmatprep.subr.bf16.mxu0 0
    %461 = vmatpush1.bf16.msra.mxu0 0
    %462 = vmatprep.mubr.bf16.mxu0 0
    %463 = vmatmul.mubr.bf16.gmra.mrb[0].mxu0 %v421
    %v464 = vpop.f32.mrb[0].mxu0
    %v465 = vadd.f32 0.0, %v464
    %v466 = vpop.f32.mrb[0].mxu0
    %v467 = vpop.f32.mrb[0].mxu0
    %v468 = vadd.f32 0.0, %v467
    %v469 = vpop.f32.mrb[0].mxu0
    %470 = vmatprep.mubr.bf16.mxu0 0
    %471 = vmatmul.mubr.bf16.gmra.mrb[0].mxu0 %v424
    %v472 = vpop.f32.mrb[0].mxu0
    %v473 = vadd.f32 0.0, %v472
    %v474 = vpop.f32.mrb[0].mxu0
    %v475 = vpop.f32.mrb[0].mxu0
    %v476 = vadd.f32 0.0, %v475
    %v477 = vpop.f32.mrb[0].mxu0
    %478 = vdwg.mxu0
    %480 = vset.pattern.permute.xlu0 0
    %481 = vperm.xlu0 %480, %v221
    %v482 = vpop.permute.xlu0 %481
    %485 = vset.pattern.permute.xlu0 0
    %486 = vperm.xlu0 %485, %v222
    %v487 = vpop.permute.xlu0 %486
    %490 = vset.pattern.permute.xlu0 0
    %491 = vperm.xlu0 %490, %v223
    %v492 = vpop.permute.xlu0 %491
    %495 = vset.pattern.permute.xlu0 0
    %496 = vperm.xlu0 %495, %v224
    %v497 = vpop.permute.xlu0 %496
    %v499 = vmul.f32 %v465, %v482
    %v500 = vmul.f32 %v468, %v487
    %v501 = vmul.f32 %v473, %v492
    %v502 = vmul.f32 %v476, %v497
    %504 = vset.pattern.permute.xlu0 0
    %505 = vperm.xlu0 %504, %v225
    %v506 = vpop.permute.xlu0 %505
    %509 = vset.pattern.permute.xlu0 0
    %510 = vperm.xlu0 %509, %v226
    %v511 = vpop.permute.xlu0 %510
    %514 = vset.pattern.permute.xlu0 0
    %515 = vperm.xlu0 %514, %v227
    %v516 = vpop.permute.xlu0 %515
    %519 = vset.pattern.permute.xlu0 0
    %520 = vperm.xlu0 %519, %v228
    %v521 = vpop.permute.xlu0 %520
    %v523 = vadd.f32 %v499, %v506
    %v524 = vadd.f32 %v500, %v511
    %v525 = vadd.f32 %v501, %v516
    %v526 = vadd.f32 %v502, %v521
    %vm527 = vcmp.ge.f32.partialorder %v523, 0.0
    %vm528 = vcmp.ge.f32.partialorder %v524, 0.0
    %vm529 = vcmp.ge.f32.partialorder %v525, 0.0
    %vm530 = vcmp.ge.f32.partialorder %v526, 0.0
    %v531 = vmul.f32 %v523, 0.01
    %v532 = vmul.f32 %v524, 0.01
    %v533 = vmul.f32 %v525, 0.01
    %v534 = vmul.f32 %v526, 0.01
    %v535 = vsel %vm527, %v523, %v531
    %v536 = vsel %vm528, %v524, %v532
    %v537 = vsel %vm529, %v525, %v533
    %v538 = vsel %vm530, %v526, %v534
    %v539 = vmul.f32 %v535, %v229
    %v540 = vmul.f32 %v536, %v230
    %v541 = vmul.f32 %v537, %v231
    %v542 = vmul.f32 %v538, %v232
    %v543 = vpack.c.bf16 %v540, %v539
    %v544 = vpack.c.bf16 %v542, %v541
    %v561 = vunpack.c.l.b16 %v233
    %v562 = vunpack.c.h.b16 %v233
    %v563 = vunpack.c.l.b16 %v234
    %v564 = vunpack.c.h.b16 %v234
    %v565 = vunpack.c.l.b16 %v235
    %v566 = vunpack.c.h.b16 %v235
    %v567 = vunpack.c.l.b16 %v236
    %v568 = vunpack.c.h.b16 %v236
    %v569 = vunpack.c.l.b16 %v237
    %v570 = vunpack.c.h.b16 %v237
    %v571 = vunpack.c.l.b16 %v238
    %v572 = vunpack.c.h.b16 %v238
    %v573 = vunpack.c.l.b16 %v239
    %v574 = vunpack.c.h.b16 %v239
    %v575 = vunpack.c.l.b16 %v240
    %v576 = vunpack.c.h.b16 %v240
    %v577 = vunpack.c.l.b16 %v241
    %v578 = vunpack.c.h.b16 %v241
    %v579 = vunpack.c.l.b16 %v242
    %v580 = vunpack.c.h.b16 %v242
    %v581 = vunpack.c.l.b16 %v243
    %v582 = vunpack.c.h.b16 %v243
    %v583 = vunpack.c.l.b16 %v244
    %v584 = vunpack.c.h.b16 %v244
    %v585 = vunpack.c.l.b16 %v245
    %v586 = vunpack.c.h.b16 %v245
    %v587 = vunpack.c.l.b16 %v246
    %v588 = vunpack.c.h.b16 %v246
    %v589 = vunpack.c.l.b16 %v247
    %v590 = vunpack.c.h.b16 %v247
    %v591 = vunpack.c.l.b16 %v248
    %v592 = vunpack.c.h.b16 %v248
    %v593 = vpack.c.b16 %v563, %v561
    %v594 = vpack.c.b16 %v564, %v562
    %v595 = vpack.c.b16 %v567, %v565
    %v596 = vpack.c.b16 %v568, %v566
    %v597 = vpack.c.b16 %v571, %v569
    %v598 = vpack.c.b16 %v572, %v570
    %v599 = vpack.c.b16 %v575, %v573
    %v600 = vpack.c.b16 %v576, %v574
    %v601 = vpack.c.b16 %v579, %v577
    %v602 = vpack.c.b16 %v580, %v578
    %v603 = vpack.c.b16 %v583, %v581
    %v604 = vpack.c.b16 %v584, %v582
    %v605 = vpack.c.b16 %v587, %v585
    %v606 = vpack.c.b16 %v588, %v586
    %v607 = vpack.c.b16 %v591, %v589
    %v608 = vpack.c.b16 %v592, %v590
    %625 = vmatprep.subr.bf16.mxu0 %v594
    %626 = vmatpush1.bf16.msra.mxu0 %v593
    %627 = vmatprep.subr.bf16.mxu0 %v596
    %628 = vmatpush1.bf16.msra.mxu0 %v595
    %629 = vmatprep.subr.bf16.mxu0 %v598
    %630 = vmatpush1.bf16.msra.mxu0 %v597
    %631 = vmatprep.subr.bf16.mxu0 %v600
    %632 = vmatpush1.bf16.msra.mxu0 %v599
    %633 = vmatprep.subr.bf16.mxu0 %v602
    %634 = vmatpush1.bf16.msra.mxu0 %v601
    %635 = vmatprep.subr.bf16.mxu0 %v604
    %636 = vmatpush1.bf16.msra.mxu0 %v603
    %637 = vmatprep.subr.bf16.mxu0 %v606
    %638 = vmatpush1.bf16.msra.mxu0 %v605
    %639 = vmatprep.subr.bf16.mxu0 %v608
    %640 = vmatpush1.bf16.msra.mxu0 %v607
    %641 = vmatprep.subr.bf16.mxu0 0
    %642 = vmatpush1.bf16.msra.mxu0 0
    %643 = vmatprep.subr.bf16.mxu0 0
    %644 = vmatpush1.bf16.msra.mxu0 0
    %645 = vmatprep.subr.bf16.mxu0 0
    %646 = vmatpush1.bf16.msra.mxu0 0
    %647 = vmatprep.subr.bf16.mxu0 0
    %648 = vmatpush1.bf16.msra.mxu0 0
    %649 = vmatprep.subr.bf16.mxu0 0
    %650 = vmatpush1.bf16.msra.mxu0 0
    %651 = vmatprep.subr.bf16.mxu0 0
    %652 = vmatpush1.bf16.msra.mxu0 0
    %653 = vmatprep.subr.bf16.mxu0 0
    %654 = vmatpush1.bf16.msra.mxu0 0
    %655 = vmatprep.subr.bf16.mxu0 0
    %656 = vmatpush1.bf16.msra.mxu0 0
    %657 = vmatprep.mubr.bf16.mxu0 0
    %658 = vmatmul.mubr.bf16.gmra.mrb[0].mxu0 %v543
    %v659 = vpop.f32.mrb[0].mxu0
    %v660 = vadd.f32 0.0, %v659
    %v661 = vpop.f32.mrb[0].mxu0
    %v662 = vadd.f32 0.0, %v661
    %v663 = vpop.f32.mrb[0].mxu0
    %v664 = vadd.f32 0.0, %v663
    %v665 = vpop.f32.mrb[0].mxu0
    %v666 = vadd.f32 0.0, %v665
    %667 = vmatprep.mubr.bf16.mxu0 0
    %668 = vmatmul.mubr.bf16.gmra.mrb[0].mxu0 %v544
    %v669 = vpop.f32.mrb[0].mxu0
    %v670 = vadd.f32 0.0, %v669
    %v671 = vpop.f32.mrb[0].mxu0
    %v672 = vadd.f32 0.0, %v671
    %v673 = vpop.f32.mrb[0].mxu0
    %v674 = vadd.f32 0.0, %v673
    %v675 = vpop.f32.mrb[0].mxu0
    %v676 = vadd.f32 0.0, %v675
    %677 = vdwg.mxu0
    %v678 = vpack.c.bf16 %v664, %v660
    %v679 = vpack.c.bf16 %v666, %v662
    %v680 = vpack.c.bf16 %v674, %v670
    %v681 = vpack.c.bf16 %v676, %v672
    %v691 = vunpack.c.l.b16 %v249
    %v692 = vunpack.c.l.b16 %v250
    %v693 = vunpack.c.l.b16 %v251
    %v694 = vunpack.c.l.b16 %v252
    %v695 = vunpack.c.l.b16 %v253
    %v696 = vunpack.c.l.b16 %v254
    %v697 = vunpack.c.l.b16 %v255
    %v698 = vunpack.c.l.b16 %v256
    %v699 = vunpack.c.l.b16 %v257
    %v700 = vpack.c.b16 %v692, %v691
    %v701 = vpack.c.b16 %v694, %v693
    %v702 = vpack.c.b16 %v696, %v695
    %v703 = vpack.c.b16 %v698, %v697
    %v704 = vpack.c.b16 %v699, %v699
    %vm705 = vcmask 293888
    %v707 = vsel %vm705, %v700, 0
    %v710 = vsel %vm705, %v701, 0
    %v713 = vsel %vm705, %v702, 0
    %v716 = vsel %vm705, %v703, 0
    %v719 = vsel %vm705, %v704, 0
    %v722 = vsel %vm426, %v268, 0
    %v725 = vsel %vm426, %v269, 0
    %727 = vmatprep.subr.bf16.mxu0 %v679
    %728 = vmatpush1.bf16.msra.mxu0 %v678
    %729 = vmatprep.subr.bf16.mxu0 %v681
    %730 = vmatpush1.bf16.msra.mxu0 %v680
    %731 = vmatprep.subr.bf16.mxu0 %v725
    %732 = vmatpush1.bf16.msra.mxu0 %v722
    %733 = vmatprep.subr.bf16.mxu0 0
    %734 = vmatpush1.bf16.msra.mxu0 0
    %735 = vmatprep.subr.bf16.mxu0 0
    %736 = vmatpush1.bf16.msra.mxu0 0
    %737 = vmatprep.subr.bf16.mxu0 0
    %738 = vmatpush1.bf16.msra.mxu0 0
    %739 = vmatprep.subr.bf16.mxu0 0
    %740 = vmatpush1.bf16.msra.mxu0 0
    %741 = vmatprep.subr.bf16.mxu0 0
    %742 = vmatpush1.bf16.msra.mxu0 0
    %743 = vmatprep.subr.bf16.mxu0 0
    %744 = vmatpush1.bf16.msra.mxu0 0
    %745 = vmatprep.subr.bf16.mxu0 0
    %746 = vmatpush1.bf16.msra.mxu0 0
    %747 = vmatprep.subr.bf16.mxu0 0
    %748 = vmatpush1.bf16.msra.mxu0 0
    %749 = vmatprep.subr.bf16.mxu0 0
    %750 = vmatpush1.bf16.msra.mxu0 0
    %751 = vmatprep.subr.bf16.mxu0 0
    %752 = vmatpush1.bf16.msra.mxu0 0
    %753 = vmatprep.subr.bf16.mxu0 0
    %754 = vmatpush1.bf16.msra.mxu0 0
    %755 = vmatprep.subr.bf16.mxu0 0
    %756 = vmatpush1.bf16.msra.mxu0 0
    %757 = vmatprep.subr.bf16.mxu0 0
    %758 = vmatpush1.bf16.msra.mxu0 0
    %759 = vmatprep.mubr.bf16.mxu0 0
    %760 = vmatmul.mubr.bf16.gmra.mrb[0].mxu0 %v707
    %v761 = vpop.f32.mrb[0].mxu0
    %v762 = vadd.f32 0.0, %v761
    %v763 = vpop.f32.mrb[0].mxu0
    %v764 = vadd.f32 0.0, %v763
    %v765 = vpop.f32.mrb[0].mxu0
    %v766 = vadd.f32 0.0, %v765
    %v767 = vpop.f32.mrb[0].mxu0
    %v768 = vadd.f32 0.0, %v767
    %769 = vmatprep.mubr.bf16.mxu0 0
    %770 = vmatmul.mubr.bf16.gmra.mrb[0].mxu0 %v710
    %v771 = vpop.f32.mrb[0].mxu0
    %v772 = vadd.f32 0.0, %v771
    %v773 = vpop.f32.mrb[0].mxu0
    %v774 = vadd.f32 0.0, %v773
    %v775 = vpop.f32.mrb[0].mxu0
    %v776 = vadd.f32 0.0, %v775
    %v777 = vpop.f32.mrb[0].mxu0
    %v778 = vadd.f32 0.0, %v777
    %779 = vmatprep.mubr.bf16.mxu0 0
    %780 = vmatmul.mubr.bf16.gmra.mrb[0].mxu0 %v713
    %v781 = vpop.f32.mrb[0].mxu0
    %v782 = vadd.f32 0.0, %v781
    %v783 = vpop.f32.mrb[0].mxu0
    %v784 = vadd.f32 0.0, %v783
    %v785 = vpop.f32.mrb[0].mxu0
    %v786 = vadd.f32 0.0, %v785
    %v787 = vpop.f32.mrb[0].mxu0
    %v788 = vadd.f32 0.0, %v787
    %789 = vmatprep.mubr.bf16.mxu0 0
    %790 = vmatmul.mubr.bf16.gmra.mrb[0].mxu0 %v716
    %v791 = vpop.f32.mrb[0].mxu0
    %v792 = vadd.f32 0.0, %v791
    %v793 = vpop.f32.mrb[0].mxu0
    %v794 = vadd.f32 0.0, %v793
    %v795 = vpop.f32.mrb[0].mxu0
    %v796 = vadd.f32 0.0, %v795
    %v797 = vpop.f32.mrb[0].mxu0
    %v798 = vadd.f32 0.0, %v797
    %799 = vmatprep.mubr.bf16.mxu0 0
    %800 = vmatmul.mubr.bf16.gmra.mrb[0].mxu0 %v719
    %v801 = vpop.f32.mrb[0].mxu0
    %v802 = vadd.f32 0.0, %v801
    %v803 = vpop.f32.mrb[0].mxu0
    %v804 = vadd.f32 0.0, %v803
    %v805 = vpop.f32.mrb[0].mxu0
    %v806 = vpop.f32.mrb[0].mxu0
    %807 = vdwg.mxu0
    %808 = vrot.lane.b32.xlu0 %v762, 17
    %v809 = vpop.permute.xlu0 %808
    %810 = vrot.lane.b32.xlu0 %v764, 17
    %v811 = vpop.permute.xlu0 %810
    %v812 = vlaneseq
    %v813 = vand.u32 %v812, 127
    %vm814 = vcmp.lt.s32.totalorder %v813, 17
    %v815 = vsel %vm814, %v809, %v811
    %v816 = vsel %vm814, %v811, %v809
    %v817 = vld [vmem:[#allocation16] ss:$8 sm:$0x3]
    %v819 = vlaneseq
    %v820 = vshrl.u32 %v819, 7
    %v821 = vsub.s32 0, %v820
    %v822 = vrot.slane %v817, %v821
    %v823 = vlaneseq
    %v824 = vshrl.u32 %v823, 7
    %v825 = vsub.s32 1, %v824
    %v826 = vrot.slane %v817, %v825
    %v829 = vmul.f32 %v816, %v822
    %v830 = vmul.f32 %v815, %v826
    %v831 = vadd.f32 %v829, 0.0
    %v832 = vadd.f32 %v830, 0.0
    %833 = vrot.lane.b32.xlu0 %v766, 16
    %v834 = vpop.permute.xlu0 %833
    %835 = vrot.lane.b32.xlu0 %v768, 16
    %v836 = vpop.permute.xlu0 %835
    %vm837 = vcmp.lt.s32.totalorder %v813, 16
    %v838 = vsel %vm837, %v834, %v836
    %v839 = vsel %vm837, %v836, %v834
    %s840 = scalar_lea.vmem [#allocation16], 1
    %v841 = vld [vmem:[%s840] ss:$8 sm:$0x3]
    %v843 = vlaneseq
    %v844 = vshrl.u32 %v843, 7
    %v845 = vsub.s32 0, %v844
    %v846 = vrot.slane %v841, %v845
    %v847 = vlaneseq
    %v848 = vshrl.u32 %v847, 7
    %v849 = vsub.s32 1, %v848
    %v850 = vrot.slane %v841, %v849
    %v853 = vmul.f32 %v839, %v846
    %v854 = vmul.f32 %v838, %v850
    %v855 = vadd.f32 %v831, %v853
    %v856 = vadd.f32 %v832, %v854
    %857 = vrot.lane.b32.xlu0 %v772, 15
    %v858 = vpop.permute.xlu0 %857
    %859 = vrot.lane.b32.xlu0 %v774, 15
    %v860 = vpop.permute.xlu0 %859
    %vm861 = vcmp.lt.s32.totalorder %v813, 15
    %v862 = vsel %vm861, %v858, %v860
    %v863 = vsel %vm861, %v860, %v858
    %s864 = scalar_lea.vmem [#allocation16], 2
    %v865 = vld [vmem:[%s864] ss:$8 sm:$0x3]
    %v867 = vlaneseq
    %v868 = vshrl.u32 %v867, 7
    %v869 = vsub.s32 0, %v868
    %v870 = vrot.slane %v865, %v869
    %v871 = vlaneseq
    %v872 = vshrl.u32 %v871, 7
    %v873 = vsub.s32 1, %v872
    %v874 = vrot.slane %v865, %v873
    %v877 = vmul.f32 %v863, %v870
    %v878 = vmul.f32 %v862, %v874
    %v879 = vadd.f32 %v855, %v877
    %v880 = vadd.f32 %v856, %v878
    %881 = vrot.lane.b32.xlu0 %v776, 1
    %v882 = vpop.permute.xlu0 %881
    %883 = vrot.lane.b32.xlu0 %v778, 1
    %v884 = vpop.permute.xlu0 %883
    %vm885 = vcmp.lt.s32.totalorder %v813, 1
    %v886 = vsel %vm885, %v882, %v884
    %v887 = vsel %vm885, %v884, %v882
    %s888 = scalar_lea.vmem [#allocation16], 3
    %v889 = vld [vmem:[%s888] ss:$8 sm:$0x3]
    %v891 = vlaneseq
    %v892 = vshrl.u32 %v891, 7
    %v893 = vsub.s32 0, %v892
    %v894 = vrot.slane %v889, %v893
    %v895 = vlaneseq
    %v896 = vshrl.u32 %v895, 7
    %v897 = vsub.s32 1, %v896
    %v898 = vrot.slane %v889, %v897
    %v901 = vmul.f32 %v887, %v894
    %v902 = vmul.f32 %v886, %v898
    %v903 = vadd.f32 %v879, %v901
    %v904 = vadd.f32 %v880, %v902
    %s905 = scalar_lea.vmem [#allocation16], 4
    %v906 = vld [vmem:[%s905] ss:$8 sm:$0x3]
    %v908 = vlaneseq
    %v909 = vshrl.u32 %v908, 7
    %v910 = vsub.s32 0, %v909
    %v911 = vrot.slane %v906, %v910
    %v912 = vlaneseq
    %v913 = vshrl.u32 %v912, 7
    %v914 = vsub.s32 1, %v913
    %v915 = vrot.slane %v906, %v914
    %v918 = vmul.f32 %v782, %v911
    %v919 = vmul.f32 %v784, %v915
    %v920 = vadd.f32 %v903, %v918
    %v921 = vadd.f32 %v904, %v919
    %922 = vrot.lane.b32.xlu0 %v786, 127
    %v923 = vpop.permute.xlu0 %922
    %924 = vrot.lane.b32.xlu0 %v788, 127
    %v925 = vpop.permute.xlu0 %924
    %vm926 = vcmp.lt.s32.totalorder %v813, 127
    %v927 = vsel %vm926, %v923, %v925
    %v928 = vsel %vm926, %v925, %v923
    %s929 = scalar_lea.vmem [#allocation16], 5
    %v930 = vld [vmem:[%s929] ss:$8 sm:$0x3]
    %v932 = vlaneseq
    %v933 = vshrl.u32 %v932, 7
    %v934 = vsub.s32 0, %v933
    %v935 = vrot.slane %v930, %v934
    %v936 = vlaneseq
    %v937 = vshrl.u32 %v936, 7
    %v938 = vsub.s32 1, %v937
    %v939 = vrot.slane %v930, %v938
    %v942 = vmul.f32 %v927, %v935
    %v943 = vmul.f32 %v928, %v939
    %v944 = vadd.f32 %v920, %v942
    %v945 = vadd.f32 %v921, %v943
    %946 = vrot.lane.b32.xlu0 %v792, 113
    %v947 = vpop.permute.xlu0 %946
    %948 = vrot.lane.b32.xlu0 %v794, 113
    %v949 = vpop.permute.xlu0 %948
    %vm950 = vcmp.lt.s32.totalorder %v813, 113
    %v951 = vsel %vm950, %v947, %v949
    %v952 = vsel %vm950, %v949, %v947
    %s953 = scalar_lea.vmem [#allocation16], 6
    %v954 = vld [vmem:[%s953] ss:$8 sm:$0x3]
    %v956 = vlaneseq
    %v957 = vshrl.u32 %v956, 7
    %v958 = vsub.s32 0, %v957
    %v959 = vrot.slane %v954, %v958
    %v960 = vlaneseq
    %v961 = vshrl.u32 %v960, 7
    %v962 = vsub.s32 1, %v961
    %v963 = vrot.slane %v954, %v962
    %v966 = vmul.f32 %v951, %v959
    %v967 = vmul.f32 %v952, %v963
    %v968 = vadd.f32 %v944, %v966
    %v969 = vadd.f32 %v945, %v967
    %970 = vrot.lane.b32.xlu0 %v796, 112
    %v971 = vpop.permute.xlu0 %970
    %972 = vrot.lane.b32.xlu0 %v798, 112
    %v973 = vpop.permute.xlu0 %972
    %vm974 = vcmp.lt.s32.totalorder %v813, 112
    %v975 = vsel %vm974, %v971, %v973
    %v976 = vsel %vm974, %v973, %v971
    %s977 = scalar_lea.vmem [#allocation16], 7
    %v978 = vld [vmem:[%s977] ss:$8 sm:$0x3]
    %v980 = vlaneseq
    %v981 = vshrl.u32 %v980, 7
    %v982 = vsub.s32 0, %v981
    %v983 = vrot.slane %v978, %v982
    %v984 = vlaneseq
    %v985 = vshrl.u32 %v984, 7
    %v986 = vsub.s32 1, %v985
    %v987 = vrot.slane %v978, %v986
    %v990 = vmul.f32 %v975, %v983
    %v991 = vmul.f32 %v976, %v987
    %v992 = vadd.f32 %v968, %v990
    %v993 = vadd.f32 %v969, %v991
    %994 = vrot.lane.b32.xlu0 %v802, 111
    %v995 = vpop.permute.xlu0 %994
    %996 = vrot.lane.b32.xlu0 %v804, 111
    %v997 = vpop.permute.xlu0 %996
    %vm998 = vcmp.lt.s32.totalorder %v813, 111
    %v999 = vsel %vm998, %v995, %v997
    %v1000 = vsel %vm998, %v997, %v995
    %s1001 = scalar_lea.vmem [#allocation16], 16
    %v1002 = vld [vmem:[%s1001] ss:$8 sm:$0x3]
    %v1004 = vlaneseq
    %v1005 = vshrl.u32 %v1004, 7
    %v1006 = vsub.s32 0, %v1005
    %v1007 = vrot.slane %v1002, %v1006
    %v1008 = vlaneseq
    %v1009 = vshrl.u32 %v1008, 7
    %v1010 = vsub.s32 1, %v1009
    %v1011 = vrot.slane %v1002, %v1010
    %v1014 = vmul.f32 %v999, %v1007
    %v1015 = vmul.f32 %v1000, %v1011
    %v1016 = vadd.f32 %v992, %v1014
    %v1017 = vadd.f32 %v993, %v1015
    %1019 = vset.pattern.permute.xlu0 0
    %1020 = vperm.xlu0 %1019, %v258
    %v1021 = vpop.permute.xlu0 %1020
    %v1023 = vmul.f32 %v1016, %v1021
    %v1024 = vmul.f32 %v1017, %v1021
    %1026 = vset.pattern.permute.xlu0 0
    %1027 = vperm.xlu0 %1026, %v259
    %v1028 = vpop.permute.xlu0 %1027
    %v1030 = vadd.f32 %v1023, %v1028
    %v1031 = vadd.f32 %v1024, %v1028
    %vm1032 = vcmp.ge.f32.partialorder %v1030, 0.0
    %vm1033 = vcmp.ge.f32.partialorder %v1031, 0.0
    %v1034 = vmul.f32 %v1030, 0.01
    %v1035 = vmul.f32 %v1031, 0.01
    %v1036 = vsel %vm1032, %v1030, %v1034
    %v1037 = vsel %vm1033, %v1031, %v1035
    %1038 = vst [vmem:[#allocation20] sm:$0xff] %v1036
    %1039 = vst [vmem:[#allocation20 + $0x8] sm:$0xff] %v1037
    %s1040 = scalar_lea.vmem [#allocation2], 4
    %v1041 = vld [vmem:[%s1040] sm:$0xf]
    %v1044 = vunpack.c.l.s4 1983009808
    %v1045 = vunpack.c.0.s8 %v1044
    %v1046 = vlaneseq
    %v1047 = vshrl.u32 %v1046, 7
    %v1048 = vsub.s32 %v1045, %v1047
    %v1049 = vrot.slane %v1041, %v1048
    %v1050 = vcombine.high %v1049, %v1049
    %1053 = vmatprep.subr.bf16.mxu0 0
    %1054 = vmatpush1.bf16.msra.mxu0 %v336
    %1055 = vmatprep.subr.bf16.mxu0 0
    %1056 = vmatpush1.bf16.msra.mxu0 %v337
    %1057 = vmatprep.subr.bf16.mxu0 0
    %1058 = vmatpush1.bf16.msra.mxu0 %v338
    %1059 = vmatprep.subr.bf16.mxu0 0
    %1060 = vmatpush1.bf16.msra.mxu0 %v339
    %1061 = vmatprep.subr.bf16.mxu0 0
    %1062 = vmatpush1.bf16.msra.mxu0 %v340
    %1063 = vmatprep.subr.bf16.mxu0 0
    %1064 = vmatpush1.bf16.msra.mxu0 %v341
    %1065 = vmatprep.subr.bf16.mxu0 0
    %1066 = vmatpush1.bf16.msra.mxu0 %v342
    %1067 = vmatprep.subr.bf16.mxu0 0
    %1068 = vmatpush1.bf16.msra.mxu0 %v343
    %1069 = vmatprep.subr.bf16.mxu0 0
    %1070 = vmatpush1.bf16.msra.mxu0 %v344
    %1071 = vmatprep.subr.bf16.mxu0 0
    %1072 = vmatpush1.bf16.msra.mxu0 %v345
    %1073 = vmatprep.subr.bf16.mxu0 0
    %1074 = vmatpush1.bf16.msra.mxu0 %v346
    %1075 = vmatprep.subr.bf16.mxu0 0
    %1076 = vmatpush1.bf16.msra.mxu0 %v347
    %1077 = vmatprep.subr.bf16.mxu0 0
    %1078 = vmatpush1.bf16.msra.mxu0 %v348
    %1079 = vmatprep.subr.bf16.mxu0 0
    %1080 = vmatpush1.bf16.msra.mxu0 %v349
    %1081 = vmatprep.subr.bf16.mxu0 0
    %1082 = vmatpush1.bf16.msra.mxu0 %v350
    %1083 = vmatprep.subr.bf16.mxu0 0
    %1084 = vmatpush1.bf16.msra.mxu0 %v351
    %1085 = vmatprep.mubr.bf16.mxu0 %v1050
    %1086 = vmatmul.mubr.bf16.gmra.mrb[0].mxu0 %v1049
    %v1087 = vpop.f32.mrb[0].mxu0
    %v1088 = vadd.f32 0.0, %v1087
    %v1089 = vpop.f32.mrb[0].mxu0
    %v1090 = vpop.f32.mrb[0].mxu0
    %v1091 = vpop.f32.mrb[0].mxu0
    %1092 = vdwg.mxu0
    %v1093 = vpack.c.bf16 %v1088, %v1088
    %v1095 = vsel %vm426, %v1093, 0
    %1097 = vmatprep.subr.bf16.mxu0 0
    %1098 = vmatpush1.bf16.msra.mxu0 %v1095
    %1099 = vmatprep.subr.bf16.mxu0 0
    %1100 = vmatpush1.bf16.msra.mxu0 0
    %1101 = vmatprep.subr.bf16.mxu0 0
    %1102 = vmatpush1.bf16.msra.mxu0 0
    %1103 = vmatprep.subr.bf16.mxu0 0
    %1104 = vmatpush1.bf16.msra.mxu0 0
    %1105 = vmatprep.subr.bf16.mxu0 0
    %1106 = vmatpush1.bf16.msra.mxu0 0
    %1107 = vmatprep.subr.bf16.mxu0 0
    %1108 = vmatpush1.bf16.msra.mxu0 0
    %1109 = vmatprep.subr.bf16.mxu0 0
    %1110 = vmatpush1.bf16.msra.mxu0 0
    %1111 = vmatprep.subr.bf16.mxu0 0
    %1112 = vmatpush1.bf16.msra.mxu0 0
    %1113 = vmatprep.subr.bf16.mxu0 0
    %1114 = vmatpush1.bf16.msra.mxu0 0
    %1115 = vmatprep.subr.bf16.mxu0 0
    %1116 = vmatpush1.bf16.msra.mxu0 0
    %1117 = vmatprep.subr.bf16.mxu0 0
    %1118 = vmatpush1.bf16.msra.mxu0 0
    %1119 = vmatprep.subr.bf16.mxu0 0
    %1120 = vmatpush1.bf16.msra.mxu0 0
    %1121 = vmatprep.subr.bf16.mxu0 0
    %1122 = vmatpush1.bf16.msra.mxu0 0
    %1123 = vmatprep.subr.bf16.mxu0 0
    %1124 = vmatpush1.bf16.msra.mxu0 0
    %1125 = vmatprep.subr.bf16.mxu0 0
    %1126 = vmatpush1.bf16.msra.mxu0 0
    %1127 = vmatprep.subr.bf16.mxu0 0
    %1128 = vmatpush1.bf16.msra.mxu0 0
    %1129 = vmatprep.mubr.bf16.mxu0 0
    %1130 = vmatmul.mubr.bf16.gmra.mrb[0].mxu0 %v421
    %v1131 = vpop.f32.mrb[0].mxu0
    %v1132 = vadd.f32 0.0, %v1131
    %v1133 = vpop.f32.mrb[0].mxu0
    %v1134 = vpop.f32.mrb[0].mxu0
    %v1135 = vadd.f32 0.0, %v1134
    %v1136 = vpop.f32.mrb[0].mxu0
    %1137 = vmatprep.mubr.bf16.mxu0 0
    %1138 = vmatmul.mubr.bf16.gmra.mrb[0].mxu0 %v424
    %v1139 = vpop.f32.mrb[0].mxu0
    %v1140 = vadd.f32 0.0, %v1139
    %v1141 = vpop.f32.mrb[0].mxu0
    %v1142 = vpop.f32.mrb[0].mxu0
    %v1143 = vadd.f32 0.0, %v1142
    %v1144 = vpop.f32.mrb[0].mxu0
    %1145 = vdwg.mxu0
    %v1146 = vmul.f32 %v1132, %v482
    %v1147 = vmul.f32 %v1135, %v487
    %v1148 = vmul.f32 %v1140, %v492
    %v1149 = vmul.f32 %v1143, %v497
    %v1150 = vadd.f32 %v1146, %v506
    %v1151 = vadd.f32 %v1147, %v511
    %v1152 = vadd.f32 %v1148, %v516
    %v1153 = vadd.f32 %v1149, %v521
    %vm1154 = vcmp.ge.f32.partialorder %v1150, 0.0
    %vm1155 = vcmp.ge.f32.partialorder %v1151, 0.0
    %vm1156 = vcmp.ge.f32.partialorder %v1152, 0.0
    %vm1157 = vcmp.ge.f32.partialorder %v1153, 0.0
    %v1158 = vmul.f32 %v1150, 0.01
    %v1159 = vmul.f32 %v1151, 0.01
    %v1160 = vmul.f32 %v1152, 0.01
    %v1161 = vmul.f32 %v1153, 0.01
    %v1162 = vsel %vm1154, %v1150, %v1158
    %v1163 = vsel %vm1155, %v1151, %v1159
    %v1164 = vsel %vm1156, %v1152, %v1160
    %v1165 = vsel %vm1157, %v1153, %v1161
    %v1166 = vmul.f32 %v1162, %v229
    %v1167 = vmul.f32 %v1163, %v230
    %v1168 = vmul.f32 %v1164, %v231
    %v1169 = vmul.f32 %v1165, %v232
    %v1170 = vpack.c.bf16 %v1167, %v1166
    %v1171 = vpack.c.bf16 %v1169, %v1168
    %1172 = vmatprep.subr.bf16.mxu0 %v594
    %1173 = vmatpush1.bf16.msra.mxu0 %v593
    %1174 = vmatprep.subr.bf16.mxu0 %v596
    %1175 = vmatpush1.bf16.msra.mxu0 %v595
    %1176 = vmatprep.subr.bf16.mxu0 %v598
    %1177 = vmatpush1.bf16.msra.mxu0 %v597
    %1178 = vmatprep.subr.bf16.mxu0 %v600
    %1179 = vmatpush1.bf16.msra.mxu0 %v599
    %1180 = vmatprep.subr.bf16.mxu0 %v602
    %1181 = vmatpush1.bf16.msra.mxu0 %v601
    %1182 = vmatprep.subr.bf16.mxu0 %v604
    %1183 = vmatpush1.bf16.msra.mxu0 %v603
    %1184 = vmatprep.subr.bf16.mxu0 %v606
    %1185 = vmatpush1.bf16.msra.mxu0 %v605
    %1186 = vmatprep.subr.bf16.mxu0 %v608
    %1187 = vmatpush1.bf16.msra.mxu0 %v607
    %1188 = vmatprep.subr.bf16.mxu0 0
    %1189 = vmatpush1.bf16.msra.mxu0 0
    %1190 = vmatprep.subr.bf16.mxu0 0
    %1191 = vmatpush1.bf16.msra.mxu0 0
    %1192 = vmatprep.subr.bf16.mxu0 0
    %1193 = vmatpush1.bf16.msra.mxu0 0
    %1194 = vmatprep.subr.bf16.mxu0 0
    %1195 = vmatpush1.bf16.msra.mxu0 0
    %1196 = vmatprep.subr.bf16.mxu0 0
    %1197 = vmatpush1.bf16.msra.mxu0 0
    %1198 = vmatprep.subr.bf16.mxu0 0
    %1199 = vmatpush1.bf16.msra.mxu0 0
    %1200 = vmatprep.subr.bf16.mxu0 0
    %1201 = vmatpush1.bf16.msra.mxu0 0
    %1202 = vmatprep.subr.bf16.mxu0 0
    %1203 = vmatpush1.bf16.msra.mxu0 0
    %1204 = vmatprep.mubr.bf16.mxu0 0
    %1205 = vmatmul.mubr.bf16.gmra.mrb[0].mxu0 %v1170
    %v1206 = vpop.f32.mrb[0].mxu0
    %v1207 = vadd.f32 0.0, %v1206
    %v1208 = vpop.f32.mrb[0].mxu0
    %v1209 = vadd.f32 0.0, %v1208
    %v1210 = vpop.f32.mrb[0].mxu0
    %v1211 = vadd.f32 0.0, %v1210
    %v1212 = vpop.f32.mrb[0].mxu0
    %v1213 = vadd.f32 0.0, %v1212
    %1214 = vmatprep.mubr.bf16.mxu0 0
    %1215 = vmatmul.mubr.bf16.gmra.mrb[0].mxu0 %v1171
    %v1216 = vpop.f32.mrb[0].mxu0
    %v1217 = vadd.f32 0.0, %v1216
    %v1218 = vpop.f32.mrb[0].mxu0
    %v1219 = vadd.f32 0.0, %v1218
    %v1220 = vpop.f32.mrb[0].mxu0
    %v1221 = vadd.f32 0.0, %v1220
    %v1222 = vpop.f32.mrb[0].mxu0
    %v1223 = vadd.f32 0.0, %v1222
    %1224 = vdwg.mxu0
    %v1225 = vpack.c.bf16 %v1211, %v1207
    %v1226 = vpack.c.bf16 %v1213, %v1209
    %v1227 = vpack.c.bf16 %v1221, %v1217
    %v1228 = vpack.c.bf16 %v1223, %v1219
    %v1230 = vsel %vm426, %v1049, 0
    %v1233 = vsel %vm426, %v1050, 0
    %1235 = vmatprep.subr.bf16.mxu0 %v1226
    %1236 = vmatpush1.bf16.msra.mxu0 %v1225
    %1237 = vmatprep.subr.bf16.mxu0 %v1228
    %1238 = vmatpush1.bf16.msra.mxu0 %v1227
    %1239 = vmatprep.subr.bf16.mxu0 %v1233
    %1240 = vmatpush1.bf16.msra.mxu0 %v1230
    %1241 = vmatprep.subr.bf16.mxu0 0
    %1242 = vmatpush1.bf16.msra.mxu0 0
    %1243 = vmatprep.subr.bf16.mxu0 0
    %1244 = vmatpush1.bf16.msra.mxu0 0
    %1245 = vmatprep.subr.bf16.mxu0 0
    %1246 = vmatpush1.bf16.msra.mxu0 0
    %1247 = vmatprep.subr.bf16.mxu0 0
    %1248 = vmatpush1.bf16.msra.mxu0 0
    %1249 = vmatprep.subr.bf16.mxu0 0
    %1250 = vmatpush1.bf16.msra.mxu0 0
    %1251 = vmatprep.subr.bf16.mxu0 0
    %1252 = vmatpush1.bf16.msra.mxu0 0
    %1253 = vmatprep.subr.bf16.mxu0 0
    %1254 = vmatpush1.bf16.msra.mxu0 0
    %1255 = vmatprep.subr.bf16.mxu0 0
    %1256 = vmatpush1.bf16.msra.mxu0 0
    %1257 = vmatprep.subr.bf16.mxu0 0
    %1258 = vmatpush1.bf16.msra.mxu0 0
    %1259 = vmatprep.subr.bf16.mxu0 0
    %1260 = vmatpush1.bf16.msra.mxu0 0
    %1261 = vmatprep.subr.bf16.mxu0 0
    %1262 = vmatpush1.bf16.msra.mxu0 0
    %1263 = vmatprep.subr.bf16.mxu0 0
    %1264 = vmatpush1.bf16.msra.mxu0 0
    %1265 = vmatprep.subr.bf16.mxu0 0
    %1266 = vmatpush1.bf16.msra.mxu0 0
    %1267 = vmatprep.mubr.bf16.mxu0 0
    %1268 = vmatmul.mubr.bf16.gmra.mrb[0].mxu0 %v707
    %v1269 = vpop.f32.mrb[0].mxu0
    %v1270 = vadd.f32 0.0, %v1269
    %v1271 = vpop.f32.mrb[0].mxu0
    %v1272 = vadd.f32 0.0, %v1271
    %v1273 = vpop.f32.mrb[0].mxu0
    %v1274 = vadd.f32 0.0, %v1273
    %v1275 = vpop.f32.mrb[0].mxu0
    %v1276 = vadd.f32 0.0, %v1275
    %1277 = vmatprep.mubr.bf16.mxu0 0
    %1278 = vmatmul.mubr.bf16.gmra.mrb[0].mxu0 %v710
    %v1279 = vpop.f32.mrb[0].mxu0
    %v1280 = vadd.f32 0.0, %v1279
    %v1281 = vpop.f32.mrb[0].mxu0
    %v1282 = vadd.f32 0.0, %v1281
    %v1283 = vpop.f32.mrb[0].mxu0
    %v1284 = vadd.f32 0.0, %v1283
    %v1285 = vpop.f32.mrb[0].mxu0
    %v1286 = vadd.f32 0.0, %v1285
    %1287 = vmatprep.mubr.bf16.mxu0 0
    %1288 = vmatmul.mubr.bf16.gmra.mrb[0].mxu0 %v713
    %v1289 = vpop.f32.mrb[0].mxu0
    %v1290 = vadd.f32 0.0, %v1289
    %v1291 = vpop.f32.mrb[0].mxu0
    %v1292 = vadd.f32 0.0, %v1291
    %v1293 = vpop.f32.mrb[0].mxu0
    %v1294 = vadd.f32 0.0, %v1293
    %v1295 = vpop.f32.mrb[0].mxu0
    %v1296 = vadd.f32 0.0, %v1295
    %1297 = vmatprep.mubr.bf16.mxu0 0
    %1298 = vmatmul.mubr.bf16.gmra.mrb[0].mxu0 %v716
    %v1299 = vpop.f32.mrb[0].mxu0
    %v1300 = vadd.f32 0.0, %v1299
    %v1301 = vpop.f32.mrb[0].mxu0
    %v1302 = vadd.f32 0.0, %v1301
    %v1303 = vpop.f32.mrb[0].mxu0
    %v1304 = vadd.f32 0.0, %v1303
    %v1305 = vpop.f32.mrb[0].mxu0
    %v1306 = vadd.f32 0.0, %v1305
    %1307 = vmatprep.mubr.bf16.mxu0 0
    %1308 = vmatmul.mubr.bf16.gmra.mrb[0].mxu0 %v719
    %v1309 = vpop.f32.mrb[0].mxu0
    %v1310 = vadd.f32 0.0, %v1309
    %v1311 = vpop.f32.mrb[0].mxu0
    %v1312 = vadd.f32 0.0, %v1311
    %v1313 = vpop.f32.mrb[0].mxu0
    %v1314 = vpop.f32.mrb[0].mxu0
    %1315 = vdwg.mxu0
    %1316 = vrot.lane.b32.xlu0 %v1270, 17
    %v1317 = vpop.permute.xlu0 %1316
    %1318 = vrot.lane.b32.xlu0 %v1272, 17
    %v1319 = vpop.permute.xlu0 %1318
    %v1320 = vsel %vm814, %v1317, %v1319
    %v1321 = vsel %vm814, %v1319, %v1317
    %v1322 = vld [vmem:[#allocation16] ss:$8 sm:$0x3]
    %v1324 = vlaneseq
    %v1325 = vshrl.u32 %v1324, 7
    %v1326 = vsub.s32 0, %v1325
    %v1327 = vrot.slane %v1322, %v1326
    %v1328 = vlaneseq
    %v1329 = vshrl.u32 %v1328, 7
    %v1330 = vsub.s32 1, %v1329
    %v1331 = vrot.slane %v1322, %v1330
    %v1334 = vmul.f32 %v1321, %v1327
    %v1335 = vmul.f32 %v1320, %v1331
    %v1336 = vadd.f32 %v1334, 0.0
    %v1337 = vadd.f32 %v1335, 0.0
    %1338 = vrot.lane.b32.xlu0 %v1274, 16
    %v1339 = vpop.permute.xlu0 %1338
    %1340 = vrot.lane.b32.xlu0 %v1276, 16
    %v1341 = vpop.permute.xlu0 %1340
    %v1342 = vsel %vm837, %v1339, %v1341
    %v1343 = vsel %vm837, %v1341, %v1339
    %v1344 = vld [vmem:[%s840] ss:$8 sm:$0x3]
    %v1346 = vlaneseq
    %v1347 = vshrl.u32 %v1346, 7
    %v1348 = vsub.s32 0, %v1347
    %v1349 = vrot.slane %v1344, %v1348
    %v1350 = vlaneseq
    %v1351 = vshrl.u32 %v1350, 7
    %v1352 = vsub.s32 1, %v1351
    %v1353 = vrot.slane %v1344, %v1352
    %v1356 = vmul.f32 %v1343, %v1349
    %v1357 = vmul.f32 %v1342, %v1353
    %v1358 = vadd.f32 %v1336, %v1356
    %v1359 = vadd.f32 %v1337, %v1357
    %1360 = vrot.lane.b32.xlu0 %v1280, 15
    %v1361 = vpop.permute.xlu0 %1360
    %1362 = vrot.lane.b32.xlu0 %v1282, 15
    %v1363 = vpop.permute.xlu0 %1362
    %v1364 = vsel %vm861, %v1361, %v1363
    %v1365 = vsel %vm861, %v1363, %v1361
    %v1366 = vld [vmem:[%s864] ss:$8 sm:$0x3]
    %v1368 = vlaneseq
    %v1369 = vshrl.u32 %v1368, 7
    %v1370 = vsub.s32 0, %v1369
    %v1371 = vrot.slane %v1366, %v1370
    %v1372 = vlaneseq
    %v1373 = vshrl.u32 %v1372, 7
    %v1374 = vsub.s32 1, %v1373
    %v1375 = vrot.slane %v1366, %v1374
    %v1378 = vmul.f32 %v1365, %v1371
    %v1379 = vmul.f32 %v1364, %v1375
    %v1380 = vadd.f32 %v1358, %v1378
    %v1381 = vadd.f32 %v1359, %v1379
    %1382 = vrot.lane.b32.xlu0 %v1284, 1
    %v1383 = vpop.permute.xlu0 %1382
    %1384 = vrot.lane.b32.xlu0 %v1286, 1
    %v1385 = vpop.permute.xlu0 %1384
    %v1386 = vsel %vm885, %v1383, %v1385
    %v1387 = vsel %vm885, %v1385, %v1383
    %v1388 = vld [vmem:[%s888] ss:$8 sm:$0x3]
    %v1390 = vlaneseq
    %v1391 = vshrl.u32 %v1390, 7
    %v1392 = vsub.s32 0, %v1391
    %v1393 = vrot.slane %v1388, %v1392
    %v1394 = vlaneseq
    %v1395 = vshrl.u32 %v1394, 7
    %v1396 = vsub.s32 1, %v1395
    %v1397 = vrot.slane %v1388, %v1396
    %v1400 = vmul.f32 %v1387, %v1393
    %v1401 = vmul.f32 %v1386, %v1397
    %v1402 = vadd.f32 %v1380, %v1400
    %v1403 = vadd.f32 %v1381, %v1401
    %v1404 = vld [vmem:[%s905] ss:$8 sm:$0x3]
    %v1406 = vlaneseq
    %v1407 = vshrl.u32 %v1406, 7
    %v1408 = vsub.s32 0, %v1407
    %v1409 = vrot.slane %v1404, %v1408
    %v1410 = vlaneseq
    %v1411 = vshrl.u32 %v1410, 7
    %v1412 = vsub.s32 1, %v1411
    %v1413 = vrot.slane %v1404, %v1412
    %v1416 = vmul.f32 %v1290, %v1409
    %v1417 = vmul.f32 %v1292, %v1413
    %v1418 = vadd.f32 %v1402, %v1416
    %v1419 = vadd.f32 %v1403, %v1417
    %1420 = vrot.lane.b32.xlu0 %v1294, 127
    %v1421 = vpop.permute.xlu0 %1420
    %1422 = vrot.lane.b32.xlu0 %v1296, 127
    %v1423 = vpop.permute.xlu0 %1422
    %v1424 = vsel %vm926, %v1421, %v1423
    %v1425 = vsel %vm926, %v1423, %v1421
    %v1426 = vld [vmem:[%s929] ss:$8 sm:$0x3]
    %v1428 = vlaneseq
    %v1429 = vshrl.u32 %v1428, 7
    %v1430 = vsub.s32 0, %v1429
    %v1431 = vrot.slane %v1426, %v1430
    %v1432 = vlaneseq
    %v1433 = vshrl.u32 %v1432, 7
    %v1434 = vsub.s32 1, %v1433
    %v1435 = vrot.slane %v1426, %v1434
    %v1438 = vmul.f32 %v1424, %v1431
    %v1439 = vmul.f32 %v1425, %v1435
    %v1440 = vadd.f32 %v1418, %v1438
    %v1441 = vadd.f32 %v1419, %v1439
    %1442 = vrot.lane.b32.xlu0 %v1300, 113
    %v1443 = vpop.permute.xlu0 %1442
    %1444 = vrot.lane.b32.xlu0 %v1302, 113
    %v1445 = vpop.permute.xlu0 %1444
    %v1446 = vsel %vm950, %v1443, %v1445
    %v1447 = vsel %vm950, %v1445, %v1443
    %v1448 = vld [vmem:[%s953] ss:$8 sm:$0x3]
    %v1450 = vlaneseq
    %v1451 = vshrl.u32 %v1450, 7
    %v1452 = vsub.s32 0, %v1451
    %v1453 = vrot.slane %v1448, %v1452
    %v1454 = vlaneseq
    %v1455 = vshrl.u32 %v1454, 7
    %v1456 = vsub.s32 1, %v1455
    %v1457 = vrot.slane %v1448, %v1456
    %v1460 = vmul.f32 %v1446, %v1453
    %v1461 = vmul.f32 %v1447, %v1457
    %v1462 = vadd.f32 %v1440, %v1460
    %v1463 = vadd.f32 %v1441, %v1461
    %1464 = vrot.lane.b32.xlu0 %v1304, 112
    %v1465 = vpop.permute.xlu0 %1464
    %1466 = vrot.lane.b32.xlu0 %v1306, 112
    %v1467 = vpop.permute.xlu0 %1466
    %v1468 = vsel %vm974, %v1465, %v1467
    %v1469 = vsel %vm974, %v1467, %v1465
    %v1470 = vld [vmem:[%s977] ss:$8 sm:$0x3]
    %v1472 = vlaneseq
    %v1473 = vshrl.u32 %v1472, 7
    %v1474 = vsub.s32 0, %v1473
    %v1475 = vrot.slane %v1470, %v1474
    %v1476 = vlaneseq
    %v1477 = vshrl.u32 %v1476, 7
    %v1478 = vsub.s32 1, %v1477
    %v1479 = vrot.slane %v1470, %v1478
    %v1482 = vmul.f32 %v1468, %v1475
    %v1483 = vmul.f32 %v1469, %v1479
    %v1484 = vadd.f32 %v1462, %v1482
    %v1485 = vadd.f32 %v1463, %v1483
    %1486 = vrot.lane.b32.xlu0 %v1310, 111
    %v1487 = vpop.permute.xlu0 %1486
    %1488 = vrot.lane.b32.xlu0 %v1312, 111
    %v1489 = vpop.permute.xlu0 %1488
    %v1490 = vsel %vm998, %v1487, %v1489
    %v1491 = vsel %vm998, %v1489, %v1487
    %v1492 = vld [vmem:[%s1001] ss:$8 sm:$0x3]
    %v1494 = vlaneseq
    %v1495 = vshrl.u32 %v1494, 7
    %v1496 = vsub.s32 0, %v1495
    %v1497 = vrot.slane %v1492, %v1496
    %v1498 = vlaneseq
    %v1499 = vshrl.u32 %v1498, 7
    %v1500 = vsub.s32 1, %v1499
    %v1501 = vrot.slane %v1492, %v1500
    %v1504 = vmul.f32 %v1490, %v1497
    %v1505 = vmul.f32 %v1491, %v1501
    %v1506 = vadd.f32 %v1484, %v1504
    %v1507 = vadd.f32 %v1485, %v1505
    %v1508 = vmul.f32 %v1506, %v1021
    %v1509 = vmul.f32 %v1507, %v1021
    %v1510 = vadd.f32 %v1508, %v1028
    %v1511 = vadd.f32 %v1509, %v1028
    %vm1512 = vcmp.ge.f32.partialorder %v1510, 0.0
    %vm1513 = vcmp.ge.f32.partialorder %v1511, 0.0
    %v1514 = vmul.f32 %v1510, 0.01
    %v1515 = vmul.f32 %v1511, 0.01
    %v1516 = vsel %vm1512, %v1510, %v1514
    %v1517 = vsel %vm1513, %v1511, %v1515
    %s1518 = scalar_lea.vmem [#allocation20], 16
    %1519 = vst [vmem:[%s1518] sm:$0xff] %v1516
    %1520 = vst [vmem:[%s1518 + $0x8] sm:$0xff] %v1517
    // Predicated region
    $region90: #{tpu_custom_call.1} parent=1 // pred_check
      _
    $region91: #{tpu_custom_call.1} parent=1 // pred_check_branch
      %1522 = sbr.rel (0) target = $region93
    $region92: #{tpu_custom_call.1} parent=1 // pred_region
      %s1524 = ssub.s32 512, 512
      %1525 = vsyncadd [#allocation4], %s1524
      %s1526 = sshll.u32 [#allocation20], 4
      %s1527 = int_to_ptr.vmem [resolvable:$true] %s1526
      %1532 = dma.vmem_to_hbm [thread:$0]  %s1527, 512, %s11, [#allocation4], 256, 256, 16
    $region93: #{tpu_custom_call.1} parent=1 // pred_fallthru
      _
    // Predicated region
    $region94: #{tpu_custom_call.1} parent=1 // pred_check
      _
    $region95: #{tpu_custom_call.1} parent=1 // pred_check_branch
      %1534 = sbr.rel (0) target = $region97
    $region96: #{tpu_custom_call.1} parent=1 // pred_region
      %1535 = dma.done [#allocation4], 512
    $region97: #{tpu_custom_call.1} parent=1 // pred_fallthru
      _
    %1536 = vsyncpa [#allocation3], 1
    %1537 = vsyncpa [#allocation6], 1
    %1538 = vsyncpa [#allocation9], 1
    %1539 = vsyncpa [#allocation12], 1
    %1540 = vsyncpa [#allocation15], 1
    %1541 = vsyncpa [#allocation18], 1
    %1542 = vsyncpa [#allocation4], 1

// kernel: tpu_custom_call.1
$region0: #{tpu_custom_call.1}
  #allocation0 [shape = 'u32[]', space=smem, size = 0x4, offset = 0x4, fixed_abs, tag = 'smem constant byte address 0x4 - core index']
  #allocation1 [shape = 'u32[144,128]{1,0:T(1,128)}', space=vmem, size = 0x12000, scoped, tag = 'internal scratch']
  %s0 = inlined_call_operand.hbm [shape: bf16[2,4,256], index: 0, kind: input, shape index: {}]
  %s1 = inlined_call_operand.hbm [shape: bf16[256,128], index: 1, kind: input, shape index: {}]
  %s2 = inlined_call_operand.hbm [shape: bf16[32,4], index: 2, kind: input, shape index: {}]
  %s3 = inlined_call_operand.hbm [shape: f32[32,1], index: 3, kind: input, shape index: {}]
  %s4 = inlined_call_operand.hbm [shape: f32[32,1], index: 4, kind: input, shape index: {}]
  %s5 = inlined_call_operand.hbm [shape: f32[32,128], index: 5, kind: input, shape index: {}]
  %s6 = inlined_call_operand.hbm [shape: bf16[128,256], index: 6, kind: input, shape index: {}]
  %s7 = inlined_call_operand.hbm [shape: bf16[72,36], index: 7, kind: input, shape index: {}]
  %s8 = inlined_call_operand.hbm [shape: f32[9,256], index: 8, kind: input, shape index: {}]
  %s9 = inlined_call_operand.hbm [shape: f32[8,1], index: 9, kind: input, shape index: {}]
  %s10 = inlined_call_operand.hbm [shape: f32[8,1], index: 10, kind: input, shape index: {}]
  %s11 = inlined_call_operand.hbm [shape: f32[2,8,256], index: 11, kind: output, shape index: {}]
  %s12 = sld [smem:[#allocation0]]
  $region98: #{tpu_custom_call.1} parent=0
    _
  %s14 = ssub.s32 1, %s12
  %s15 = scalar_select 0, %s14, %s12
  $region1: #{tpu_custom_call.1} parent=0
    #allocation2 [shape = 'u8[4096]{0}', space=vmem, size = 0x1000, scoped, tag = 'input window, operand 0, single buffered']
    #allocation3 [shape = 's32[1]{0}', space=sflag, size = 0x4, scoped, tag = 'scoped memory for tpu_custom_call.1']
    #allocation4 [shape = 's32[1]{0}', space=sflag, size = 0x4, scoped, tag = 'scoped memory for tpu_custom_call.1']
    #allocation5 [shape = 'u8[65536]{0}', space=vmem, size = 0x10000, scoped, tag = 'input window, operand 1, single buffered']
    #allocation6 [shape = 's32[1]{0}', space=sflag, size = 0x4, scoped, tag = 'scoped memory for tpu_custom_call.1']
    #allocation7 [shape = 'u8[8192]{0}', space=vmem, size = 0x2000, scoped, tag = 'input window, operand 2, single buffered']
    #allocation8 [shape = 'u8[16384]{0}', space=vmem, size = 0x4000, scoped, tag = 'input window, operand 3, single buffered']
    #allocation9 [shape = 's32[1]{0}', space=sflag, size = 0x4, scoped, tag = 'scoped memory for tpu_custom_call.1']
    #allocation10 [shape = 'u8[16384]{0}', space=vmem, size = 0x4000, scoped, tag = 'input window, operand 4, single buffered']
    #allocation11 [shape = 'u8[16384]{0}', space=vmem, size = 0x4000, scoped, tag = 'input window, operand 5, single buffered']
    #allocation12 [shape = 's32[1]{0}', space=sflag, size = 0x4, scoped, tag = 'scoped memory for tpu_custom_call.1']
    #allocation13 [shape = 'u8[65536]{0}', space=vmem, size = 0x10000, scoped, tag = 'input window, operand 6, single buffered']
    #allocation14 [shape = 'u8[18432]{0}', space=vmem, size = 0x4800, scoped, tag = 'input window, operand 7, single buffered']
    #allocation15 [shape = 's32[1]{0}', space=sflag, size = 0x4, scoped, tag = 'scoped memory for tpu_custom_call.1']
    #allocation16 [shape = 'u8[16384]{0}', space=vmem, size = 0x4000, scoped, tag = 'input window, operand 8, single buffered']
    #allocation17 [shape = 'u8[4096]{0}', space=vmem, size = 0x1000, scoped, tag = 'input window, operand 9, single buffered']
    #allocation18 [shape = 's32[1]{0}', space=sflag, size = 0x4, scoped, tag = 'scoped memory for tpu_custom_call.1']
    #allocation19 [shape = 'u8[4096]{0}', space=vmem, size = 0x1000, scoped, tag = 'input window, operand 10, single buffered']
    #allocation20 [shape = 'u8[16384]{0}', space=vmem, size = 0x4000, scoped, tag = 'output window, operand 0, single buffered']
    %16 = vsyncpa [#allocation3], 0
    %17 = vsyncpa [#allocation6], 0
    %18 = vsyncpa [#allocation9], 0
    %19 = vsyncpa [#allocation12], 0
    %20 = vsyncpa [#allocation15], 0
    %21 = vsyncpa [#allocation18], 0
    %22 = vsyncpa [#allocation4], 0
    // Predicated region
    $region2: #{tpu_custom_call.1} parent=1 // pred_check
      _
    $region3: #{tpu_custom_call.1} parent=1 // pred_check_branch
      %24 = sbr.rel (0) target = $region5
    $region4: #{tpu_custom_call.1} parent=1 // pred_region
      %s26 = ssub.s32 128, 128
      %27 = vsyncadd [#allocation3], %s26
      %s28 = sshll.u32 [#allocation2], 4
      %s29 = int_to_ptr.vmem [resolvable:$true] %s28
      %34 = dma.hbm_to_vmem [thread:$0]  %s0, 128, %s29, [#allocation3], 64, 64, 4
    $region5: #{tpu_custom_call.1} parent=1 // pred_fallthru
      _
    // Predicated region
    $region6: #{tpu_custom_call.1} parent=1 // pred_check
      _
    $region7: #{tpu_custom_call.1} parent=1 // pred_check_branch
      %36 = sbr.rel (0) target = $region9
    $region8: #{tpu_custom_call.1} parent=1 // pred_region
      %s38 = ssub.s32 2048, 2048
      %39 = vsyncadd [#allocation6], %s38
      %s40 = sshll.u32 [#allocation5], 4
      %s41 = int_to_ptr.vmem [resolvable:$true] %s40
      %46 = dma.hbm_to_vmem [thread:$0]  %s1, 2048, %s41, [#allocation6], 64, 64, 4
    $region9: #{tpu_custom_call.1} parent=1 // pred_fallthru
      _
    // Predicated region
    $region10: #{tpu_custom_call.1} parent=1 // pred_check
      _
    $region11: #{tpu_custom_call.1} parent=1 // pred_check_branch
      %48 = sbr.rel (0) target = $region13
    $region12: #{tpu_custom_call.1} parent=1 // pred_region
      %s50 = ssub.s32 256, 256
      %51 = vsyncadd [#allocation6], %s50
      %s52 = sshll.u32 [#allocation7], 4
      %s53 = int_to_ptr.vmem [resolvable:$true] %s52
      %58 = dma.hbm_to_vmem [thread:$0]  %s2, 256, %s53, [#allocation6], 64, 64, 4
    $region13: #{tpu_custom_call.1} parent=1 // pred_fallthru
      _
    // Predicated region
    $region14: #{tpu_custom_call.1} parent=1 // pred_check
      _
    $region15: #{tpu_custom_call.1} parent=1 // pred_check_branch
      %60 = sbr.rel (0) target = $region17
    $region16: #{tpu_custom_call.1} parent=1 // pred_region
      %s62 = ssub.s32 512, 512
      %63 = vsyncadd [#allocation9], %s62
      %s64 = sshll.u32 [#allocation8], 4
      %s65 = int_to_ptr.vmem [resolvable:$true] %s64
      %70 = dma.hbm_to_vmem [thread:$0]  %s3, 512, %s65, [#allocation9], 128, 128, 8
    $region17: #{tpu_custom_call.1} parent=1 // pred_fallthru
      _
    // Predicated region
    $region18: #{tpu_custom_call.1} parent=1 // pred_check
      _
    $region19: #{tpu_custom_call.1} parent=1 // pred_check_branch
      %72 = sbr.rel (0) target = $region21
    $region20: #{tpu_custom_call.1} parent=1 // pred_region
      %s74 = ssub.s32 512, 512
      %75 = vsyncadd [#allocation9], %s74
      %s76 = sshll.u32 [#allocation10], 4
      %s77 = int_to_ptr.vmem [resolvable:$true] %s76
      %82 = dma.hbm_to_vmem [thread:$0]  %s4, 512, %s77, [#allocation9], 128, 128, 8
    $region21: #{tpu_custom_call.1} parent=1 // pred_fallthru
      _
    // Predicated region
    $region22: #{tpu_custom_call.1} parent=1 // pred_check
      _
    $region23: #{tpu_custom_call.1} parent=1 // pred_check_branch
      %84 = sbr.rel (0) target = $region25
    $region24: #{tpu_custom_call.1} parent=1 // pred_region
      %s86 = ssub.s32 512, 512
      %87 = vsyncadd [#allocation12], %s86
      %s88 = sshll.u32 [#allocation11], 4
      %s89 = int_to_ptr.vmem [resolvable:$true] %s88
      %94 = dma.hbm_to_vmem [thread:$0]  %s5, 512, %s89, [#allocation12], 128, 128, 8
    $region25: #{tpu_custom_call.1} parent=1 // pred_fallthru
      _
    // Predicated region
    $region26: #{tpu_custom_call.1} parent=1 // pred_check
      _
    $region27: #{tpu_custom_call.1} parent=1 // pred_check_branch
      %96 = sbr.rel (0) target = $region29
    $region28: #{tpu_custom_call.1} parent=1 // pred_region
      %s98 = ssub.s32 2048, 2048
      %99 = vsyncadd [#allocation12], %s98
      %s100 = sshll.u32 [#allocation13], 4
      %s101 = int_to_ptr.vmem [resolvable:$true] %s100
      %106 = dma.hbm_to_vmem [thread:$0]  %s6, 2048, %s101, [#allocation12], 128, 128, 8
    $region29: #{tpu_custom_call.1} parent=1 // pred_fallthru
      _
    // Predicated region
    $region30: #{tpu_custom_call.1} parent=1 // pred_check
      _
    $region31: #{tpu_custom_call.1} parent=1 // pred_check_branch
      %108 = sbr.rel (0) target = $region33
    $region32: #{tpu_custom_call.1} parent=1 // pred_region
      %s110 = ssub.s32 576, 576
      %111 = vsyncadd [#allocation15], %s110
      %s112 = sshll.u32 [#allocation14], 4
      %s113 = int_to_ptr.vmem [resolvable:$true] %s112
      %118 = dma.hbm_to_vmem [thread:$0]  %s7, 576, %s113, [#allocation15], 64, 64, 4
    $region33: #{tpu_custom_call.1} parent=1 // pred_fallthru
      _
    // Predicated region
    $region34: #{tpu_custom_call.1} parent=1 // pred_check
      _
    $region35: #{tpu_custom_call.1} parent=1 // pred_check_branch
      %120 = sbr.rel (0) target = $region37
    $region36: #{tpu_custom_call.1} parent=1 // pred_region
      %s122 = ssub.s32 512, 512
      %123 = vsyncadd [#allocation15], %s122
      %s124 = sshll.u32 [#allocation16], 4
      %s125 = int_to_ptr.vmem [resolvable:$true] %s124
      %130 = dma.hbm_to_vmem [thread:$0]  %s8, 512, %s125, [#allocation15], 256, 256, 16
    $region37: #{tpu_custom_call.1} parent=1 // pred_fallthru
      _
    // Predicated region
    $region38: #{tpu_custom_call.1} parent=1 // pred_check
      _
    $region39: #{tpu_custom_call.1} parent=1 // pred_check_branch
      %132 = sbr.rel (0) target = $region41
    $region40: #{tpu_custom_call.1} parent=1 // pred_region
      %s134 = ssub.s32 128, 128
      %135 = vsyncadd [#allocation18], %s134
      %s137 = sshll.u32 [#allocation17], 4
      %s138 = int_to_ptr.vmem [resolvable:$true] %s137
      %140 = dma.hbm_to_vmem [thread:$0]  %s9, 128, %s138, [#allocation18]
    $region41: #{tpu_custom_call.1} parent=1 // pred_fallthru
      _
    // Predicated region
    $region42: #{tpu_custom_call.1} parent=1 // pred_check
      _
    $region43: #{tpu_custom_call.1} parent=1 // pred_check_branch
      %142 = sbr.rel (0) target = $region45
    $region44: #{tpu_custom_call.1} parent=1 // pred_region
      %s144 = ssub.s32 128, 128
      %145 = vsyncadd [#allocation18], %s144
      %s147 = sshll.u32 [#allocation19], 4
      %s148 = int_to_ptr.vmem [resolvable:$true] %s147
      %150 = dma.hbm_to_vmem [thread:$0]  %s10, 128, %s148, [#allocation18]
    $region45: #{tpu_custom_call.1} parent=1 // pred_fallthru
      _
    // Predicated region
    $region46: #{tpu_custom_call.1} parent=1 // pred_check
      _
    $region47: #{tpu_custom_call.1} parent=1 // pred_check_branch
      %152 = sbr.rel (0) target = $region49
    $region48: #{tpu_custom_call.1} parent=1 // pred_region
      %153 = dma.done [#allocation3], 128
    $region49: #{tpu_custom_call.1} parent=1 // pred_fallthru
      _
    // Predicated region
    $region50: #{tpu_custom_call.1} parent=1 // pred_check
      _
    $region51: #{tpu_custom_call.1} parent=1 // pred_check_branch
      %155 = sbr.rel (0) target = $region53
    $region52: #{tpu_custom_call.1} parent=1 // pred_region
      %156 = dma.done [#allocation6], 2048
    $region53: #{tpu_custom_call.1} parent=1 // pred_fallthru
      _
    // Predicated region
    $region54: #{tpu_custom_call.1} parent=1 // pred_check
      _
    $region55: #{tpu_custom_call.1} parent=1 // pred_check_branch
      %158 = sbr.rel (0) target = $region57
    $region56: #{tpu_custom_call.1} parent=1 // pred_region
      %159 = dma.done [#allocation6], 256
    $region57: #{tpu_custom_call.1} parent=1 // pred_fallthru
      _
    // Predicated region
    $region58: #{tpu_custom_call.1} parent=1 // pred_check
      _
    $region59: #{tpu_custom_call.1} parent=1 // pred_check_branch
      %161 = sbr.rel (0) target = $region61
    $region60: #{tpu_custom_call.1} parent=1 // pred_region
      %162 = dma.done [#allocation9], 512
    $region61: #{tpu_custom_call.1} parent=1 // pred_fallthru
      _
    // Predicated region
    $region62: #{tpu_custom_call.1} parent=1 // pred_check
      _
    $region63: #{tpu_custom_call.1} parent=1 // pred_check_branch
      %164 = sbr.rel (0) target = $region65
    $region64: #{tpu_custom_call.1} parent=1 // pred_region
      %165 = dma.done [#allocation9], 512
    $region65: #{tpu_custom_call.1} parent=1 // pred_fallthru
      _
    // Predicated region
    $region66: #{tpu_custom_call.1} parent=1 // pred_check
      _
    $region67: #{tpu_custom_call.1} parent=1 // pred_check_branch
      %167 = sbr.rel (0) target = $region69
    $region68: #{tpu_custom_call.1} parent=1 // pred_region
      %168 = dma.done [#allocation12], 512
    $region69: #{tpu_custom_call.1} parent=1 // pred_fallthru
      _
    // Predicated region
    $region70: #{tpu_custom_call.1} parent=1 // pred_check
      _
    $region71: #{tpu_custom_call.1} parent=1 // pred_check_branch
      %170 = sbr.rel (0) target = $region73
    $region72: #{tpu_custom_call.1} parent=1 // pred_region
      %171 = dma.done [#allocation12], 2048
    $region73: #{tpu_custom_call.1} parent=1 // pred_fallthru
      _
    // Predicated region
    $region74: #{tpu_custom_call.1} parent=1 // pred_check
      _
    $region75: #{tpu_custom_call.1} parent=1 // pred_check_branch
      %173 = sbr.rel (0) target = $region77
    $region76: #{tpu_custom_call.1} parent=1 // pred_region
      %174 = dma.done [#allocation15], 576
    $region77: #{tpu_custom_call.1} parent=1 // pred_fallthru
      _
    // Predicated region
    $region78: #{tpu_custom_call.1} parent=1 // pred_check
      _
    $region79: #{tpu_custom_call.1} parent=1 // pred_check_branch
      %176 = sbr.rel (0) target = $region81
    $region80: #{tpu_custom_call.1} parent=1 // pred_region
      %177 = dma.done [#allocation15], 512
    $region81: #{tpu_custom_call.1} parent=1 // pred_fallthru
      _
    // Predicated region
    $region82: #{tpu_custom_call.1} parent=1 // pred_check
      _
    $region83: #{tpu_custom_call.1} parent=1 // pred_check_branch
      %179 = sbr.rel (0) target = $region85
    $region84: #{tpu_custom_call.1} parent=1 // pred_region
      %180 = dma.done [#allocation18], 128
    $region85: #{tpu_custom_call.1} parent=1 // pred_fallthru
      _
    // Predicated region
    $region86: #{tpu_custom_call.1} parent=1 // pred_check
      _
    $region87: #{tpu_custom_call.1} parent=1 // pred_check_branch
      %182 = sbr.rel (0) target = $region89
    $region88: #{tpu_custom_call.1} parent=1 // pred_region
      %183 = dma.done [#allocation18], 128
    $region89: #{tpu_custom_call.1} parent=1 // pred_fallthru
      _
    %v185 = vld [vmem:[#allocation5] sm:$0xf]
    %v186 = vld [vmem:[#allocation5 + $0x4] sm:$0xf]
    %v187 = vld [vmem:[#allocation5 + $0x8] sm:$0xf]
    %v188 = vld [vmem:[#allocation5 + $0xc] sm:$0xf]
    %v189 = vld [vmem:[#allocation5 + $0x10] sm:$0xf]
    %v190 = vld [vmem:[#allocation5 + $0x14] sm:$0xf]
    %v191 = vld [vmem:[#allocation5 + $0x18] sm:$0xf]
    %v192 = vld [vmem:[#allocation5 + $0x1c] sm:$0xf]
    %v193 = vld [vmem:[#allocation5 + $0x20] sm:$0xf]
    %v194 = vld [vmem:[#allocation5 + $0x24] sm:$0xf]
    %v195 = vld [vmem:[#allocation5 + $0x28] sm:$0xf]
    %v196 = vld [vmem:[#allocation5 + $0x2c] sm:$0xf]
    %v197 = vld [vmem:[#allocation5 + $0x30] sm:$0xf]
    %v198 = vld [vmem:[#allocation5 + $0x34] sm:$0xf]
    %v199 = vld [vmem:[#allocation5 + $0x38] sm:$0xf]
    %v200 = vld [vmem:[#allocation5 + $0x3c] sm:$0xf]
    %v201 = vld [vmem:[#allocation5 + $0x40] sm:$0xf]
    %v202 = vld [vmem:[#allocation5 + $0x44] sm:$0xf]
    %v203 = vld [vmem:[#allocation5 + $0x48] sm:$0xf]
    %v204 = vld [vmem:[#allocation5 + $0x4c] sm:$0xf]
    %v205 = vld [vmem:[#allocation5 + $0x50] sm:$0xf]
    %v206 = vld [vmem:[#allocation5 + $0x54] sm:$0xf]
    %v207 = vld [vmem:[#allocation5 + $0x58] sm:$0xf]
    %v208 = vld [vmem:[#allocation5 + $0x5c] sm:$0xf]
    %v209 = vld [vmem:[#allocation5 + $0x60] sm:$0xf]
    %v210 = vld [vmem:[#allocation5 + $0x64] sm:$0xf]
    %v211 = vld [vmem:[#allocation5 + $0x68] sm:$0xf]
    %v212 = vld [vmem:[#allocation5 + $0x6c] sm:$0xf]
    %v213 = vld [vmem:[#allocation5 + $0x70] sm:$0xf]
    %v214 = vld [vmem:[#allocation5 + $0x74] sm:$0xf]
    %v215 = vld [vmem:[#allocation5 + $0x78] sm:$0xf]
    %v216 = vld [vmem:[#allocation5 + $0x7c] sm:$0xf]
    %v217 = vld [vmem:[#allocation7] sm:$0xf]
    %v218 = vld [vmem:[#allocation7 + $0x4] sm:$0xf]
    %v219 = vld [vmem:[#allocation7 + $0x8] sm:$0xf]
    %v220 = vld [vmem:[#allocation7 + $0xc] sm:$0xf]
    %v221 = vld [vmem:[#allocation8] sm:$0xff]
    %v222 = vld [vmem:[#allocation8 + $0x8] sm:$0xff]
    %v223 = vld [vmem:[#allocation8 + $0x10] sm:$0xff]
    %v224 = vld [vmem:[#allocation8 + $0x18] sm:$0xff]
    %v225 = vld [vmem:[#allocation10] sm:$0xff]
    %v226 = vld [vmem:[#allocation10 + $0x8] sm:$0xff]
    %v227 = vld [vmem:[#allocation10 + $0x10] sm:$0xff]
    %v228 = vld [vmem:[#allocation10 + $0x18] sm:$0xff]
    %v229 = vld [vmem:[#allocation11] sm:$0xff]
    %v230 = vld [vmem:[#allocation11 + $0x8] sm:$0xff]
    %v231 = vld [vmem:[#allocation11 + $0x10] sm:$0xff]
    %v232 = vld [vmem:[#allocation11 + $0x18] sm:$0xff]
    %v233 = vld [vmem:[#allocation13] sm:$0xff]
    %v234 = vld [vmem:[#allocation13 + $0x8] sm:$0xff]
    %v235 = vld [vmem:[#allocation13 + $0x10] sm:$0xff]
    %v236 = vld [vmem:[#allocation13 + $0x18] sm:$0xff]
    %v237 = vld [vmem:[#allocation13 + $0x20] sm:$0xff]
    %v238 = vld [vmem:[#allocation13 + $0x28] sm:$0xff]
    %v239 = vld [vmem:[#allocation13 + $0x30] sm:$0xff]
    %v240 = vld [vmem:[#allocation13 + $0x38] sm:$0xff]
    %v241 = vld [vmem:[#allocation13 + $0x40] sm:$0xff]
    %v242 = vld [vmem:[#allocation13 + $0x48] sm:$0xff]
    %v243 = vld [vmem:[#allocation13 + $0x50] sm:$0xff]
    %v244 = vld [vmem:[#allocation13 + $0x58] sm:$0xff]
    %v245 = vld [vmem:[#allocation13 + $0x60] sm:$0xff]
    %v246 = vld [vmem:[#allocation13 + $0x68] sm:$0xff]
    %v247 = vld [vmem:[#allocation13 + $0x70] sm:$0xff]
    %v248 = vld [vmem:[#allocation13 + $0x78] sm:$0xff]
    %v249 = vld [vmem:[#allocation14] sm:$0xf]
    %v250 = vld [vmem:[#allocation14 + $0x4] sm:$0xf]
    %v251 = vld [vmem:[#allocation14 + $0x8] sm:$0xf]
    %v252 = vld [vmem:[#allocation14 + $0xc] sm:$0xf]
    %v253 = vld [vmem:[#allocation14 + $0x10] sm:$0xf]
    %v254 = vld [vmem:[#allocation14 + $0x14] sm:$0xf]
    %v255 = vld [vmem:[#allocation14 + $0x18] sm:$0xf]
    %v256 = vld [vmem:[#allocation14 + $0x1c] sm:$0xf]
    %v257 = vld [vmem:[#allocation14 + $0x20] sm:$0xf]
    %v258 = vld [vmem:[#allocation17] sm:$0xff]
    %v259 = vld [vmem:[#allocation19] sm:$0xff]
    %v260 = vld [vmem:[#allocation2] sm:$0xf]
    %v263 = vunpack.c.l.s4 1983009808
    %v264 = vunpack.c.0.s8 %v263
    %v265 = vlaneseq
    %v266 = vshrl.u32 %v265, 7
    %v267 = vsub.s32 %v264, %v266
    %v268 = vrot.slane %v260, %v267
    %v269 = vcombine.high %v268, %v268
    %v304 = vunpack.c.l.b16 %v185
    %v305 = vunpack.c.l.b16 %v186
    %v306 = vunpack.c.l.b16 %v187
    %v307 = vunpack.c.l.b16 %v188
    %v308 = vunpack.c.l.b16 %v189
    %v309 = vunpack.c.l.b16 %v190
    %v310 = vunpack.c.l.b16 %v191
    %v311 = vunpack.c.l.b16 %v192
    %v312 = vunpack.c.l.b16 %v193
    %v313 = vunpack.c.l.b16 %v194
    %v314 = vunpack.c.l.b16 %v195
    %v315 = vunpack.c.l.b16 %v196
    %v316 = vunpack.c.l.b16 %v197
    %v317 = vunpack.c.l.b16 %v198
    %v318 = vunpack.c.l.b16 %v199
    %v319 = vunpack.c.l.b16 %v200
    %v320 = vunpack.c.l.b16 %v201
    %v321 = vunpack.c.l.b16 %v202
    %v322 = vunpack.c.l.b16 %v203
    %v323 = vunpack.c.l.b16 %v204
    %v324 = vunpack.c.l.b16 %v205
    %v325 = vunpack.c.l.b16 %v206
    %v326 = vunpack.c.l.b16 %v207
    %v327 = vunpack.c.l.b16 %v208
    %v328 = vunpack.c.l.b16 %v209
    %v329 = vunpack.c.l.b16 %v210
    %v330 = vunpack.c.l.b16 %v211
    %v331 = vunpack.c.l.b16 %v212
    %v332 = vunpack.c.l.b16 %v213
    %v333 = vunpack.c.l.b16 %v214
    %v334 = vunpack.c.l.b16 %v215
    %v335 = vunpack.c.l.b16 %v216
    %v336 = vpack.c.b16 %v305, %v304
    %v337 = vpack.c.b16 %v307, %v306
    %v338 = vpack.c.b16 %v309, %v308
    %v339 = vpack.c.b16 %v311, %v310
    %v340 = vpack.c.b16 %v313, %v312
    %v341 = vpack.c.b16 %v315, %v314
    %v342 = vpack.c.b16 %v317, %v316
    %v343 = vpack.c.b16 %v319, %v318
    %v344 = vpack.c.b16 %v321, %v320
    %v345 = vpack.c.b16 %v323, %v322
    %v346 = vpack.c.b16 %v325, %v324
    %v347 = vpack.c.b16 %v327, %v326
    %v348 = vpack.c.b16 %v329, %v328
    %v349 = vpack.c.b16 %v331, %v330
    %v350 = vpack.c.b16 %v333, %v332
    %v351 = vpack.c.b16 %v335, %v334
    %368 = vmatprep.subr.bf16.mxu0 0
    %369 = vmatpush1.bf16.msra.mxu0 %v336
    %370 = vmatprep.subr.bf16.mxu0 0
    %371 = vmatpush1.bf16.msra.mxu0 %v337
    %372 = vmatprep.subr.bf16.mxu0 0
    %373 = vmatpush1.bf16.msra.mxu0 %v338
    %374 = vmatprep.subr.bf16.mxu0 0
    %375 = vmatpush1.bf16.msra.mxu0 %v339
    %376 = vmatprep.subr.bf16.mxu0 0
    %377 = vmatpush1.bf16.msra.mxu0 %v340
    %378 = vmatprep.subr.bf16.mxu0 0
    %379 = vmatpush1.bf16.msra.mxu0 %v341
    %380 = vmatprep.subr.bf16.mxu0 0
    %381 = vmatpush1.bf16.msra.mxu0 %v342
    %382 = vmatprep.subr.bf16.mxu0 0
    %383 = vmatpush1.bf16.msra.mxu0 %v343
    %384 = vmatprep.subr.bf16.mxu0 0
    %385 = vmatpush1.bf16.msra.mxu0 %v344
    %386 = vmatprep.subr.bf16.mxu0 0
    %387 = vmatpush1.bf16.msra.mxu0 %v345
    %388 = vmatprep.subr.bf16.mxu0 0
    %389 = vmatpush1.bf16.msra.mxu0 %v346
    %390 = vmatprep.subr.bf16.mxu0 0
    %391 = vmatpush1.bf16.msra.mxu0 %v347
    %392 = vmatprep.subr.bf16.mxu0 0
    %393 = vmatpush1.bf16.msra.mxu0 %v348
    %394 = vmatprep.subr.bf16.mxu0 0
    %395 = vmatpush1.bf16.msra.mxu0 %v349
    %396 = vmatprep.subr.bf16.mxu0 0
    %397 = vmatpush1.bf16.msra.mxu0 %v350
    %398 = vmatprep.subr.bf16.mxu0 0
    %399 = vmatpush1.bf16.msra.mxu0 %v351
    %400 = vmatprep.mubr.bf16.mxu0 %v269
    %401 = vmatmul.mubr.bf16.gmra.mrb[0].mxu0 %v268
    %v402 = vpop.f32.mrb[0].mxu0
    %v403 = vadd.f32 0.0, %v402
    %v404 = vpop.f32.mrb[0].mxu0
    %v405 = vpop.f32.mrb[0].mxu0
    %v406 = vpop.f32.mrb[0].mxu0
    %407 = vdwg.mxu0
    %v408 = vpack.c.bf16 %v403, %v403
    %v413 = vunpack.c.l.b16 %v217
    %v414 = vunpack.c.l.b16 %v218
    %v415 = vunpack.c.l.b16 %v219
    %v416 = vunpack.c.l.b16 %v220
    %v417 = vpack.c.b16 %v414, %v413
    %v418 = vpack.c.b16 %v416, %v415
    %vm419 = vcmask 31744
    %v421 = vsel %vm419, %v417, 0
    %v424 = vsel %vm419, %v418, 0
    %vm426 = vcmask 1041408
    %v428 = vsel %vm426, %v408, 0
    %430 = vmatprep.subr.bf16.mxu0 0
    %431 = vmatpush1.bf16.msra.mxu0 %v428
    %432 = vmatprep.subr.bf16.mxu0 0
    %433 = vmatpush1.bf16.msra.mxu0 0
    %434 = vmatprep.subr.bf16.mxu0 0
    %435 = vmatpush1.bf16.msra.mxu0 0
    %436 = vmatprep.subr.bf16.mxu0 0
    %437 = vmatpush1.bf16.msra.mxu0 0
    %438 = vmatprep.subr.bf16.mxu0 0
    %439 = vmatpush1.bf16.msra.mxu0 0
    %440 = vmatprep.subr.bf16.mxu0 0
    %441 = vmatpush1.bf16.msra.mxu0 0
    %442 = vmatprep.subr.bf16.mxu0 0
    %443 = vmatpush1.bf16.msra.mxu0 0
    %444 = vmatprep.subr.bf16.mxu0 0
    %445 = vmatpush1.bf16.msra.mxu0 0
    %446 = vmatprep.subr.bf16.mxu0 0
    %447 = vmatpush1.bf16.msra.mxu0 0
    %448 = vmatprep.subr.bf16.mxu0 0
    %449 = vmatpush1.bf16.msra.mxu0 0
    %450 = vmatprep.subr.bf16.mxu0 0
    %451 = vmatpush1.bf16.msra.mxu0 0
    %452 = vmatprep.subr.bf16.mxu0 0
    %453 = vmatpush1.bf16.msra.mxu0 0
    %454 = vmatprep.subr.bf16.mxu0 0
    %455 = vmatpush1.bf16.msra.mxu0 0
    %456 = vmatprep.subr.bf16.mxu0 0
    %457 = vmatpush1.bf16.msra.mxu0 0
    %458 = vmatprep.subr.bf16.mxu0 0
    %459 = vmatpush1.bf16.msra.mxu0 0
    %460 = vmatprep.subr.bf16.mxu0 0
    %461 = vmatpush1.bf16.msra.mxu0 0
    %462 = vmatprep.mubr.bf16.mxu0 0
    %463 = vmatmul.mubr.bf16.gmra.mrb[0].mxu0 %v421
    %v464 = vpop.f32.mrb[0].mxu0
    %v465 = vadd.f32 0.0, %v464
    %v466 = vpop.f32.mrb[0].mxu0
    %v467 = vpop.f32.mrb[0].mxu0
    %v468 = vadd.f32 0.0, %v467
    %v469 = vpop.f32.mrb[0].mxu0
    %470 = vmatprep.mubr.bf16.mxu0 0
    %471 = vmatmul.mubr.bf16.gmra.mrb[0].mxu0 %v424
    %v472 = vpop.f32.mrb[0].mxu0
    %v473 = vadd.f32 0.0, %v472
    %v474 = vpop.f32.mrb[0].mxu0
    %v475 = vpop.f32.mrb[0].mxu0
    %v476 = vadd.f32 0.0, %v475
    %v477 = vpop.f32.mrb[0].mxu0
    %478 = vdwg.mxu0
    %480 = vset.pattern.permute.xlu0 0
    %481 = vperm.xlu0 %480, %v221
    %v482 = vpop.permute.xlu0 %481
    %485 = vset.pattern.permute.xlu0 0
    %486 = vperm.xlu0 %485, %v222
    %v487 = vpop.permute.xlu0 %486
    %490 = vset.pattern.permute.xlu0 0
    %491 = vperm.xlu0 %490, %v223
    %v492 = vpop.permute.xlu0 %491
    %495 = vset.pattern.permute.xlu0 0
    %496 = vperm.xlu0 %495, %v224
    %v497 = vpop.permute.xlu0 %496
    %v499 = vmul.f32 %v465, %v482
    %v500 = vmul.f32 %v468, %v487
    %v501 = vmul.f32 %v473, %v492
    %v502 = vmul.f32 %v476, %v497
    %504 = vset.pattern.permute.xlu0 0
    %505 = vperm.xlu0 %504, %v225
    %v506 = vpop.permute.xlu0 %505
    %509 = vset.pattern.permute.xlu0 0
    %510 = vperm.xlu0 %509, %v226
    %v511 = vpop.permute.xlu0 %510
    %514 = vset.pattern.permute.xlu0 0
    %515 = vperm.xlu0 %514, %v227
    %v516 = vpop.permute.xlu0 %515
    %519 = vset.pattern.permute.xlu0 0
    %520 = vperm.xlu0 %519, %v228
    %v521 = vpop.permute.xlu0 %520
    %v523 = vadd.f32 %v499, %v506
    %v524 = vadd.f32 %v500, %v511
    %v525 = vadd.f32 %v501, %v516
    %v526 = vadd.f32 %v502, %v521
    %vm527 = vcmp.ge.f32.partialorder %v523, 0.0
    %vm528 = vcmp.ge.f32.partialorder %v524, 0.0
    %vm529 = vcmp.ge.f32.partialorder %v525, 0.0
    %vm530 = vcmp.ge.f32.partialorder %v526, 0.0
    %v531 = vmul.f32 %v523, 0.01
    %v532 = vmul.f32 %v524, 0.01
    %v533 = vmul.f32 %v525, 0.01
    %v534 = vmul.f32 %v526, 0.01
    %v535 = vsel %vm527, %v523, %v531
    %v536 = vsel %vm528, %v524, %v532
    %v537 = vsel %vm529, %v525, %v533
    %v538 = vsel %vm530, %v526, %v534
    %v539 = vmul.f32 %v535, %v229
    %v540 = vmul.f32 %v536, %v230
    %v541 = vmul.f32 %v537, %v231
    %v542 = vmul.f32 %v538, %v232
    %v543 = vpack.c.bf16 %v540, %v539
    %v544 = vpack.c.bf16 %v542, %v541
    %v561 = vunpack.c.l.b16 %v233
    %v562 = vunpack.c.h.b16 %v233
    %v563 = vunpack.c.l.b16 %v234
    %v564 = vunpack.c.h.b16 %v234
    %v565 = vunpack.c.l.b16 %v235
    %v566 = vunpack.c.h.b16 %v235
    %v567 = vunpack.c.l.b16 %v236
    %v568 = vunpack.c.h.b16 %v236
    %v569 = vunpack.c.l.b16 %v237
    %v570 = vunpack.c.h.b16 %v237
    %v571 = vunpack.c.l.b16 %v238
    %v572 = vunpack.c.h.b16 %v238
    %v573 = vunpack.c.l.b16 %v239
    %v574 = vunpack.c.h.b16 %v239
    %v575 = vunpack.c.l.b16 %v240
    %v576 = vunpack.c.h.b16 %v240
    %v577 = vunpack.c.l.b16 %v241
    %v578 = vunpack.c.h.b16 %v241
    %v579 = vunpack.c.l.b16 %v242
    %v580 = vunpack.c.h.b16 %v242
    %v581 = vunpack.c.l.b16 %v243
    %v582 = vunpack.c.h.b16 %v243
    %v583 = vunpack.c.l.b16 %v244
    %v584 = vunpack.c.h.b16 %v244
    %v585 = vunpack.c.l.b16 %v245
    %v586 = vunpack.c.h.b16 %v245
    %v587 = vunpack.c.l.b16 %v246
    %v588 = vunpack.c.h.b16 %v246
    %v589 = vunpack.c.l.b16 %v247
    %v590 = vunpack.c.h.b16 %v247
    %v591 = vunpack.c.l.b16 %v248
    %v592 = vunpack.c.h.b16 %v248
    %v593 = vpack.c.b16 %v563, %v561
    %v594 = vpack.c.b16 %v564, %v562
    %v595 = vpack.c.b16 %v567, %v565
    %v596 = vpack.c.b16 %v568, %v566
    %v597 = vpack.c.b16 %v571, %v569
    %v598 = vpack.c.b16 %v572, %v570
    %v599 = vpack.c.b16 %v575, %v573
    %v600 = vpack.c.b16 %v576, %v574
    %v601 = vpack.c.b16 %v579, %v577
    %v602 = vpack.c.b16 %v580, %v578
    %v603 = vpack.c.b16 %v583, %v581
    %v604 = vpack.c.b16 %v584, %v582
    %v605 = vpack.c.b16 %v587, %v585
    %v606 = vpack.c.b16 %v588, %v586
    %v607 = vpack.c.b16 %v591, %v589
    %v608 = vpack.c.b16 %v592, %v590
    %625 = vmatprep.subr.bf16.mxu0 %v594
    %626 = vmatpush1.bf16.msra.mxu0 %v593
    %627 = vmatprep.subr.bf16.mxu0 %v596
    %628 = vmatpush1.bf16.msra.mxu0 %v595
    %629 = vmatprep.subr.bf16.mxu0 %v598
    %630 = vmatpush1.bf16.msra.mxu0 %v597
    %631 = vmatprep.subr.bf16.mxu0 %v600
    %632 = vmatpush1.bf16.msra.mxu0 %v599
    %633 = vmatprep.subr.bf16.mxu0 %v602
    %634 = vmatpush1.bf16.msra.mxu0 %v601
    %635 = vmatprep.subr.bf16.mxu0 %v604
    %636 = vmatpush1.bf16.msra.mxu0 %v603
    %637 = vmatprep.subr.bf16.mxu0 %v606
    %638 = vmatpush1.bf16.msra.mxu0 %v605
    %639 = vmatprep.subr.bf16.mxu0 %v608
    %640 = vmatpush1.bf16.msra.mxu0 %v607
    %641 = vmatprep.subr.bf16.mxu0 0
    %642 = vmatpush1.bf16.msra.mxu0 0
    %643 = vmatprep.subr.bf16.mxu0 0
    %644 = vmatpush1.bf16.msra.mxu0 0
    %645 = vmatprep.subr.bf16.mxu0 0
    %646 = vmatpush1.bf16.msra.mxu0 0
    %647 = vmatprep.subr.bf16.mxu0 0
    %648 = vmatpush1.bf16.msra.mxu0 0
    %649 = vmatprep.subr.bf16.mxu0 0
    %650 = vmatpush1.bf16.msra.mxu0 0
    %651 = vmatprep.subr.bf16.mxu0 0
    %652 = vmatpush1.bf16.msra.mxu0 0
    %653 = vmatprep.subr.bf16.mxu0 0
    %654 = vmatpush1.bf16.msra.mxu0 0
    %655 = vmatprep.subr.bf16.mxu0 0
    %656 = vmatpush1.bf16.msra.mxu0 0
    %657 = vmatprep.mubr.bf16.mxu0 0
    %658 = vmatmul.mubr.bf16.gmra.mrb[0].mxu0 %v543
    %v659 = vpop.f32.mrb[0].mxu0
    %v660 = vadd.f32 0.0, %v659
    %v661 = vpop.f32.mrb[0].mxu0
    %v662 = vadd.f32 0.0, %v661
    %v663 = vpop.f32.mrb[0].mxu0
    %v664 = vadd.f32 0.0, %v663
    %v665 = vpop.f32.mrb[0].mxu0
    %v666 = vadd.f32 0.0, %v665
    %667 = vmatprep.mubr.bf16.mxu0 0
    %668 = vmatmul.mubr.bf16.gmra.mrb[0].mxu0 %v544
    %v669 = vpop.f32.mrb[0].mxu0
    %v670 = vadd.f32 0.0, %v669
    %v671 = vpop.f32.mrb[0].mxu0
    %v672 = vadd.f32 0.0, %v671
    %v673 = vpop.f32.mrb[0].mxu0
    %v674 = vadd.f32 0.0, %v673
    %v675 = vpop.f32.mrb[0].mxu0
    %v676 = vadd.f32 0.0, %v675
    %677 = vdwg.mxu0
    %v678 = vpack.c.bf16 %v664, %v660
    %v679 = vpack.c.bf16 %v666, %v662
    %v680 = vpack.c.bf16 %v674, %v670
    %v681 = vpack.c.bf16 %v676, %v672
    %v691 = vunpack.c.l.b16 %v249
    %v692 = vunpack.c.l.b16 %v250
    %v693 = vunpack.c.l.b16 %v251
    %v694 = vunpack.c.l.b16 %v252
    %v695 = vunpack.c.l.b16 %v253
    %v696 = vunpack.c.l.b16 %v254
    %v697 = vunpack.c.l.b16 %v255
    %v698 = vunpack.c.l.b16 %v256
    %v699 = vunpack.c.l.b16 %v257
    %v700 = vpack.c.b16 %v692, %v691
    %v701 = vpack.c.b16 %v694, %v693
    %v702 = vpack.c.b16 %v696, %v695
    %v703 = vpack.c.b16 %v698, %v697
    %v704 = vpack.c.b16 %v699, %v699
    %vm705 = vcmask 293888
    %v707 = vsel %vm705, %v700, 0
    %v710 = vsel %vm705, %v701, 0
    %v713 = vsel %vm705, %v702, 0
    %v716 = vsel %vm705, %v703, 0
    %v719 = vsel %vm705, %v704, 0
    %v722 = vsel %vm426, %v268, 0
    %v725 = vsel %vm426, %v269, 0
    %727 = vmatprep.subr.bf16.mxu0 %v679
    %728 = vmatpush1.bf16.msra.mxu0 %v678
    %729 = vmatprep.subr.bf16.mxu0 %v681
    %730 = vmatpush1.bf16.msra.mxu0 %v680
    %731 = vmatprep.subr.bf16.mxu0 %v725
    %732 = vmatpush1.bf16.msra.mxu0 %v722
    %733 = vmatprep.subr.bf16.mxu0 0
    %734 = vmatpush1.bf16.msra.mxu0 0
    %735 = vmatprep.subr.bf16.mxu0 0
    %736 = vmatpush1.bf16.msra.mxu0 0
    %737 = vmatprep.subr.bf16.mxu0 0
    %738 = vmatpush1.bf16.msra.mxu0 0
    %739 = vmatprep.subr.bf16.mxu0 0
    %740 = vmatpush1.bf16.msra.mxu0 0
    %741 = vmatprep.subr.bf16.mxu0 0
    %742 = vmatpush1.bf16.msra.mxu0 0
    %743 = vmatprep.subr.bf16.mxu0 0
    %744 = vmatpush1.bf16.msra.mxu0 0
    %745 = vmatprep.subr.bf16.mxu0 0
    %746 = vmatpush1.bf16.msra.mxu0 0
    %747 = vmatprep.subr.bf16.mxu0 0
    %748 = vmatpush1.bf16.msra.mxu0 0
    %749 = vmatprep.subr.bf16.mxu0 0
    %750 = vmatpush1.bf16.msra.mxu0 0
    %751 = vmatprep.subr.bf16.mxu0 0
    %752 = vmatpush1.bf16.msra.mxu0 0
    %753 = vmatprep.subr.bf16.mxu0 0
    %754 = vmatpush1.bf16.msra.mxu0 0
    %755 = vmatprep.subr.bf16.mxu0 0
    %756 = vmatpush1.bf16.msra.mxu0 0
    %757 = vmatprep.subr.bf16.mxu0 0
    %758 = vmatpush1.bf16.msra.mxu0 0
    %759 = vmatprep.mubr.bf16.mxu0 0
    %760 = vmatmul.mubr.bf16.gmra.mrb[0].mxu0 %v707
    %v761 = vpop.f32.mrb[0].mxu0
    %v762 = vadd.f32 0.0, %v761
    %v763 = vpop.f32.mrb[0].mxu0
    %v764 = vadd.f32 0.0, %v763
    %v765 = vpop.f32.mrb[0].mxu0
    %v766 = vadd.f32 0.0, %v765
    %v767 = vpop.f32.mrb[0].mxu0
    %v768 = vadd.f32 0.0, %v767
    %769 = vmatprep.mubr.bf16.mxu0 0
    %770 = vmatmul.mubr.bf16.gmra.mrb[0].mxu0 %v710
    %v771 = vpop.f32.mrb[0].mxu0
    %v772 = vadd.f32 0.0, %v771
    %v773 = vpop.f32.mrb[0].mxu0
    %v774 = vadd.f32 0.0, %v773
    %v775 = vpop.f32.mrb[0].mxu0
    %v776 = vadd.f32 0.0, %v775
    %v777 = vpop.f32.mrb[0].mxu0
    %v778 = vadd.f32 0.0, %v777
    %779 = vmatprep.mubr.bf16.mxu0 0
    %780 = vmatmul.mubr.bf16.gmra.mrb[0].mxu0 %v713
    %v781 = vpop.f32.mrb[0].mxu0
    %v782 = vadd.f32 0.0, %v781
    %v783 = vpop.f32.mrb[0].mxu0
    %v784 = vadd.f32 0.0, %v783
    %v785 = vpop.f32.mrb[0].mxu0
    %v786 = vadd.f32 0.0, %v785
    %v787 = vpop.f32.mrb[0].mxu0
    %v788 = vadd.f32 0.0, %v787
    %789 = vmatprep.mubr.bf16.mxu0 0
    %790 = vmatmul.mubr.bf16.gmra.mrb[0].mxu0 %v716
    %v791 = vpop.f32.mrb[0].mxu0
    %v792 = vadd.f32 0.0, %v791
    %v793 = vpop.f32.mrb[0].mxu0
    %v794 = vadd.f32 0.0, %v793
    %v795 = vpop.f32.mrb[0].mxu0
    %v796 = vadd.f32 0.0, %v795
    %v797 = vpop.f32.mrb[0].mxu0
    %v798 = vadd.f32 0.0, %v797
    %799 = vmatprep.mubr.bf16.mxu0 0
    %800 = vmatmul.mubr.bf16.gmra.mrb[0].mxu0 %v719
    %v801 = vpop.f32.mrb[0].mxu0
    %v802 = vadd.f32 0.0, %v801
    %v803 = vpop.f32.mrb[0].mxu0
    %v804 = vadd.f32 0.0, %v803
    %v805 = vpop.f32.mrb[0].mxu0
    %v806 = vpop.f32.mrb[0].mxu0
    %807 = vdwg.mxu0
    %808 = vrot.lane.b32.xlu0 %v762, 17
    %v809 = vpop.permute.xlu0 %808
    %810 = vrot.lane.b32.xlu0 %v764, 17
    %v811 = vpop.permute.xlu0 %810
    %v812 = vlaneseq
    %v813 = vand.u32 %v812, 127
    %vm814 = vcmp.lt.s32.totalorder %v813, 17
    %v815 = vsel %vm814, %v809, %v811
    %v816 = vsel %vm814, %v811, %v809
    %v817 = vld [vmem:[#allocation16] ss:$8 sm:$0x3]
    %v819 = vlaneseq
    %v820 = vshrl.u32 %v819, 7
    %v821 = vsub.s32 0, %v820
    %v822 = vrot.slane %v817, %v821
    %v823 = vlaneseq
    %v824 = vshrl.u32 %v823, 7
    %v825 = vsub.s32 1, %v824
    %v826 = vrot.slane %v817, %v825
    %v829 = vmul.f32 %v816, %v822
    %v830 = vmul.f32 %v815, %v826
    %v831 = vadd.f32 %v829, 0.0
    %v832 = vadd.f32 %v830, 0.0
    %833 = vrot.lane.b32.xlu0 %v766, 16
    %v834 = vpop.permute.xlu0 %833
    %835 = vrot.lane.b32.xlu0 %v768, 16
    %v836 = vpop.permute.xlu0 %835
    %vm837 = vcmp.lt.s32.totalorder %v813, 16
    %v838 = vsel %vm837, %v834, %v836
    %v839 = vsel %vm837, %v836, %v834
    %s840 = scalar_lea.vmem [#allocation16], 1
    %v841 = vld [vmem:[%s840] ss:$8 sm:$0x3]
    %v843 = vlaneseq
    %v844 = vshrl.u32 %v843, 7
    %v845 = vsub.s32 0, %v844
    %v846 = vrot.slane %v841, %v845
    %v847 = vlaneseq
    %v848 = vshrl.u32 %v847, 7
    %v849 = vsub.s32 1, %v848
    %v850 = vrot.slane %v841, %v849
    %v853 = vmul.f32 %v839, %v846
    %v854 = vmul.f32 %v838, %v850
    %v855 = vadd.f32 %v831, %v853
    %v856 = vadd.f32 %v832, %v854
    %857 = vrot.lane.b32.xlu0 %v772, 15
    %v858 = vpop.permute.xlu0 %857
    %859 = vrot.lane.b32.xlu0 %v774, 15
    %v860 = vpop.permute.xlu0 %859
    %vm861 = vcmp.lt.s32.totalorder %v813, 15
    %v862 = vsel %vm861, %v858, %v860
    %v863 = vsel %vm861, %v860, %v858
    %s864 = scalar_lea.vmem [#allocation16], 2
    %v865 = vld [vmem:[%s864] ss:$8 sm:$0x3]
    %v867 = vlaneseq
    %v868 = vshrl.u32 %v867, 7
    %v869 = vsub.s32 0, %v868
    %v870 = vrot.slane %v865, %v869
    %v871 = vlaneseq
    %v872 = vshrl.u32 %v871, 7
    %v873 = vsub.s32 1, %v872
    %v874 = vrot.slane %v865, %v873
    %v877 = vmul.f32 %v863, %v870
    %v878 = vmul.f32 %v862, %v874
    %v879 = vadd.f32 %v855, %v877
    %v880 = vadd.f32 %v856, %v878
    %881 = vrot.lane.b32.xlu0 %v776, 1
    %v882 = vpop.permute.xlu0 %881
    %883 = vrot.lane.b32.xlu0 %v778, 1
    %v884 = vpop.permute.xlu0 %883
    %vm885 = vcmp.lt.s32.totalorder %v813, 1
    %v886 = vsel %vm885, %v882, %v884
    %v887 = vsel %vm885, %v884, %v882
    %s888 = scalar_lea.vmem [#allocation16], 3
    %v889 = vld [vmem:[%s888] ss:$8 sm:$0x3]
    %v891 = vlaneseq
    %v892 = vshrl.u32 %v891, 7
    %v893 = vsub.s32 0, %v892
    %v894 = vrot.slane %v889, %v893
    %v895 = vlaneseq
    %v896 = vshrl.u32 %v895, 7
    %v897 = vsub.s32 1, %v896
    %v898 = vrot.slane %v889, %v897
    %v901 = vmul.f32 %v887, %v894
    %v902 = vmul.f32 %v886, %v898
    %v903 = vadd.f32 %v879, %v901
    %v904 = vadd.f32 %v880, %v902
    %s905 = scalar_lea.vmem [#allocation16], 4
    %v906 = vld [vmem:[%s905] ss:$8 sm:$0x3]
    %v908 = vlaneseq
    %v909 = vshrl.u32 %v908, 7
    %v910 = vsub.s32 0, %v909
    %v911 = vrot.slane %v906, %v910
    %v912 = vlaneseq
    %v913 = vshrl.u32 %v912, 7
    %v914 = vsub.s32 1, %v913
    %v915 = vrot.slane %v906, %v914
    %v918 = vmul.f32 %v782, %v911
    %v919 = vmul.f32 %v784, %v915
    %v920 = vadd.f32 %v903, %v918
    %v921 = vadd.f32 %v904, %v919
    %922 = vrot.lane.b32.xlu0 %v786, 127
    %v923 = vpop.permute.xlu0 %922
    %924 = vrot.lane.b32.xlu0 %v788, 127
    %v925 = vpop.permute.xlu0 %924
    %vm926 = vcmp.lt.s32.totalorder %v813, 127
    %v927 = vsel %vm926, %v923, %v925
    %v928 = vsel %vm926, %v925, %v923
    %s929 = scalar_lea.vmem [#allocation16], 5
    %v930 = vld [vmem:[%s929] ss:$8 sm:$0x3]
    %v932 = vlaneseq
    %v933 = vshrl.u32 %v932, 7
    %v934 = vsub.s32 0, %v933
    %v935 = vrot.slane %v930, %v934
    %v936 = vlaneseq
    %v937 = vshrl.u32 %v936, 7
    %v938 = vsub.s32 1, %v937
    %v939 = vrot.slane %v930, %v938
    %v942 = vmul.f32 %v927, %v935
    %v943 = vmul.f32 %v928, %v939
    %v944 = vadd.f32 %v920, %v942
    %v945 = vadd.f32 %v921, %v943
    %946 = vrot.lane.b32.xlu0 %v792, 113
    %v947 = vpop.permute.xlu0 %946
    %948 = vrot.lane.b32.xlu0 %v794, 113
    %v949 = vpop.permute.xlu0 %948
    %vm950 = vcmp.lt.s32.totalorder %v813, 113
    %v951 = vsel %vm950, %v947, %v949
    %v952 = vsel %vm950, %v949, %v947
    %s953 = scalar_lea.vmem [#allocation16], 6
    %v954 = vld [vmem:[%s953] ss:$8 sm:$0x3]
    %v956 = vlaneseq
    %v957 = vshrl.u32 %v956, 7
    %v958 = vsub.s32 0, %v957
    %v959 = vrot.slane %v954, %v958
    %v960 = vlaneseq
    %v961 = vshrl.u32 %v960, 7
    %v962 = vsub.s32 1, %v961
    %v963 = vrot.slane %v954, %v962
    %v966 = vmul.f32 %v951, %v959
    %v967 = vmul.f32 %v952, %v963
    %v968 = vadd.f32 %v944, %v966
    %v969 = vadd.f32 %v945, %v967
    %970 = vrot.lane.b32.xlu0 %v796, 112
    %v971 = vpop.permute.xlu0 %970
    %972 = vrot.lane.b32.xlu0 %v798, 112
    %v973 = vpop.permute.xlu0 %972
    %vm974 = vcmp.lt.s32.totalorder %v813, 112
    %v975 = vsel %vm974, %v971, %v973
    %v976 = vsel %vm974, %v973, %v971
    %s977 = scalar_lea.vmem [#allocation16], 7
    %v978 = vld [vmem:[%s977] ss:$8 sm:$0x3]
    %v980 = vlaneseq
    %v981 = vshrl.u32 %v980, 7
    %v982 = vsub.s32 0, %v981
    %v983 = vrot.slane %v978, %v982
    %v984 = vlaneseq
    %v985 = vshrl.u32 %v984, 7
    %v986 = vsub.s32 1, %v985
    %v987 = vrot.slane %v978, %v986
    %v990 = vmul.f32 %v975, %v983
    %v991 = vmul.f32 %v976, %v987
    %v992 = vadd.f32 %v968, %v990
    %v993 = vadd.f32 %v969, %v991
    %994 = vrot.lane.b32.xlu0 %v802, 111
    %v995 = vpop.permute.xlu0 %994
    %996 = vrot.lane.b32.xlu0 %v804, 111
    %v997 = vpop.permute.xlu0 %996
    %vm998 = vcmp.lt.s32.totalorder %v813, 111
    %v999 = vsel %vm998, %v995, %v997
    %v1000 = vsel %vm998, %v997, %v995
    %s1001 = scalar_lea.vmem [#allocation16], 16
    %v1002 = vld [vmem:[%s1001] ss:$8 sm:$0x3]
    %v1004 = vlaneseq
    %v1005 = vshrl.u32 %v1004, 7
    %v1006 = vsub.s32 0, %v1005
    %v1007 = vrot.slane %v1002, %v1006
    %v1008 = vlaneseq
    %v1009 = vshrl.u32 %v1008, 7
    %v1010 = vsub.s32 1, %v1009
    %v1011 = vrot.slane %v1002, %v1010
    %v1014 = vmul.f32 %v999, %v1007
    %v1015 = vmul.f32 %v1000, %v1011
    %v1016 = vadd.f32 %v992, %v1014
    %v1017 = vadd.f32 %v993, %v1015
    %1019 = vset.pattern.permute.xlu0 0
    %1020 = vperm.xlu0 %1019, %v258
    %v1021 = vpop.permute.xlu0 %1020
    %v1023 = vmul.f32 %v1016, %v1021
    %v1024 = vmul.f32 %v1017, %v1021
    %1026 = vset.pattern.permute.xlu0 0
    %1027 = vperm.xlu0 %1026, %v259
    %v1028 = vpop.permute.xlu0 %1027
    %v1030 = vadd.f32 %v1023, %v1028
    %v1031 = vadd.f32 %v1024, %v1028
    %vm1032 = vcmp.ge.f32.partialorder %v1030, 0.0
    %vm1033 = vcmp.ge.f32.partialorder %v1031, 0.0
    %v1034 = vmul.f32 %v1030, 0.01
    %v1035 = vmul.f32 %v1031, 0.01
    %v1036 = vsel %vm1032, %v1030, %v1034
    %v1037 = vsel %vm1033, %v1031, %v1035
    %1038 = vst [vmem:[#allocation20] sm:$0xff] %v1036
    %1039 = vst [vmem:[#allocation20 + $0x8] sm:$0xff] %v1037
    %s1040 = scalar_lea.vmem [#allocation2], 4
    %v1041 = vld [vmem:[%s1040] sm:$0xf]
    %v1044 = vunpack.c.l.s4 1983009808
    %v1045 = vunpack.c.0.s8 %v1044
    %v1046 = vlaneseq
    %v1047 = vshrl.u32 %v1046, 7
    %v1048 = vsub.s32 %v1045, %v1047
    %v1049 = vrot.slane %v1041, %v1048
    %v1050 = vcombine.high %v1049, %v1049
    %1053 = vmatprep.subr.bf16.mxu0 0
    %1054 = vmatpush1.bf16.msra.mxu0 %v336
    %1055 = vmatprep.subr.bf16.mxu0 0
    %1056 = vmatpush1.bf16.msra.mxu0 %v337
    %1057 = vmatprep.subr.bf16.mxu0 0
    %1058 = vmatpush1.bf16.msra.mxu0 %v338
    %1059 = vmatprep.subr.bf16.mxu0 0
    %1060 = vmatpush1.bf16.msra.mxu0 %v339
    %1061 = vmatprep.subr.bf16.mxu0 0
    %1062 = vmatpush1.bf16.msra.mxu0 %v340
    %1063 = vmatprep.subr.bf16.mxu0 0
    %1064 = vmatpush1.bf16.msra.mxu0 %v341
    %1065 = vmatprep.subr.bf16.mxu0 0
    %1066 = vmatpush1.bf16.msra.mxu0 %v342
    %1067 = vmatprep.subr.bf16.mxu0 0
    %1068 = vmatpush1.bf16.msra.mxu0 %v343
    %1069 = vmatprep.subr.bf16.mxu0 0
    %1070 = vmatpush1.bf16.msra.mxu0 %v344
    %1071 = vmatprep.subr.bf16.mxu0 0
    %1072 = vmatpush1.bf16.msra.mxu0 %v345
    %1073 = vmatprep.subr.bf16.mxu0 0
    %1074 = vmatpush1.bf16.msra.mxu0 %v346
    %1075 = vmatprep.subr.bf16.mxu0 0
    %1076 = vmatpush1.bf16.msra.mxu0 %v347
    %1077 = vmatprep.subr.bf16.mxu0 0
    %1078 = vmatpush1.bf16.msra.mxu0 %v348
    %1079 = vmatprep.subr.bf16.mxu0 0
    %1080 = vmatpush1.bf16.msra.mxu0 %v349
    %1081 = vmatprep.subr.bf16.mxu0 0
    %1082 = vmatpush1.bf16.msra.mxu0 %v350
    %1083 = vmatprep.subr.bf16.mxu0 0
    %1084 = vmatpush1.bf16.msra.mxu0 %v351
    %1085 = vmatprep.mubr.bf16.mxu0 %v1050
    %1086 = vmatmul.mubr.bf16.gmra.mrb[0].mxu0 %v1049
    %v1087 = vpop.f32.mrb[0].mxu0
    %v1088 = vadd.f32 0.0, %v1087
    %v1089 = vpop.f32.mrb[0].mxu0
    %v1090 = vpop.f32.mrb[0].mxu0
    %v1091 = vpop.f32.mrb[0].mxu0
    %1092 = vdwg.mxu0
    %v1093 = vpack.c.bf16 %v1088, %v1088
    %v1095 = vsel %vm426, %v1093, 0
    %1097 = vmatprep.subr.bf16.mxu0 0
    %1098 = vmatpush1.bf16.msra.mxu0 %v1095
    %1099 = vmatprep.subr.bf16.mxu0 0
    %1100 = vmatpush1.bf16.msra.mxu0 0
    %1101 = vmatprep.subr.bf16.mxu0 0
    %1102 = vmatpush1.bf16.msra.mxu0 0
    %1103 = vmatprep.subr.bf16.mxu0 0
    %1104 = vmatpush1.bf16.msra.mxu0 0
    %1105 = vmatprep.subr.bf16.mxu0 0
    %1106 = vmatpush1.bf16.msra.mxu0 0
    %1107 = vmatprep.subr.bf16.mxu0 0
    %1108 = vmatpush1.bf16.msra.mxu0 0
    %1109 = vmatprep.subr.bf16.mxu0 0
    %1110 = vmatpush1.bf16.msra.mxu0 0
    %1111 = vmatprep.subr.bf16.mxu0 0
    %1112 = vmatpush1.bf16.msra.mxu0 0
    %1113 = vmatprep.subr.bf16.mxu0 0
    %1114 = vmatpush1.bf16.msra.mxu0 0
    %1115 = vmatprep.subr.bf16.mxu0 0
    %1116 = vmatpush1.bf16.msra.mxu0 0
    %1117 = vmatprep.subr.bf16.mxu0 0
    %1118 = vmatpush1.bf16.msra.mxu0 0
    %1119 = vmatprep.subr.bf16.mxu0 0
    %1120 = vmatpush1.bf16.msra.mxu0 0
    %1121 = vmatprep.subr.bf16.mxu0 0
    %1122 = vmatpush1.bf16.msra.mxu0 0
    %1123 = vmatprep.subr.bf16.mxu0 0
    %1124 = vmatpush1.bf16.msra.mxu0 0
    %1125 = vmatprep.subr.bf16.mxu0 0
    %1126 = vmatpush1.bf16.msra.mxu0 0
    %1127 = vmatprep.subr.bf16.mxu0 0
    %1128 = vmatpush1.bf16.msra.mxu0 0
    %1129 = vmatprep.mubr.bf16.mxu0 0
    %1130 = vmatmul.mubr.bf16.gmra.mrb[0].mxu0 %v421
    %v1131 = vpop.f32.mrb[0].mxu0
    %v1132 = vadd.f32 0.0, %v1131
    %v1133 = vpop.f32.mrb[0].mxu0
    %v1134 = vpop.f32.mrb[0].mxu0
    %v1135 = vadd.f32 0.0, %v1134
    %v1136 = vpop.f32.mrb[0].mxu0
    %1137 = vmatprep.mubr.bf16.mxu0 0
    %1138 = vmatmul.mubr.bf16.gmra.mrb[0].mxu0 %v424
    %v1139 = vpop.f32.mrb[0].mxu0
    %v1140 = vadd.f32 0.0, %v1139
    %v1141 = vpop.f32.mrb[0].mxu0
    %v1142 = vpop.f32.mrb[0].mxu0
    %v1143 = vadd.f32 0.0, %v1142
    %v1144 = vpop.f32.mrb[0].mxu0
    %1145 = vdwg.mxu0
    %v1146 = vmul.f32 %v1132, %v482
    %v1147 = vmul.f32 %v1135, %v487
    %v1148 = vmul.f32 %v1140, %v492
    %v1149 = vmul.f32 %v1143, %v497
    %v1150 = vadd.f32 %v1146, %v506
    %v1151 = vadd.f32 %v1147, %v511
    %v1152 = vadd.f32 %v1148, %v516
    %v1153 = vadd.f32 %v1149, %v521
    %vm1154 = vcmp.ge.f32.partialorder %v1150, 0.0
    %vm1155 = vcmp.ge.f32.partialorder %v1151, 0.0
    %vm1156 = vcmp.ge.f32.partialorder %v1152, 0.0
    %vm1157 = vcmp.ge.f32.partialorder %v1153, 0.0
    %v1158 = vmul.f32 %v1150, 0.01
    %v1159 = vmul.f32 %v1151, 0.01
    %v1160 = vmul.f32 %v1152, 0.01
    %v1161 = vmul.f32 %v1153, 0.01
    %v1162 = vsel %vm1154, %v1150, %v1158
    %v1163 = vsel %vm1155, %v1151, %v1159
    %v1164 = vsel %vm1156, %v1152, %v1160
    %v1165 = vsel %vm1157, %v1153, %v1161
    %v1166 = vmul.f32 %v1162, %v229
    %v1167 = vmul.f32 %v1163, %v230
    %v1168 = vmul.f32 %v1164, %v231
    %v1169 = vmul.f32 %v1165, %v232
    %v1170 = vpack.c.bf16 %v1167, %v1166
    %v1171 = vpack.c.bf16 %v1169, %v1168
    %1172 = vmatprep.subr.bf16.mxu0 %v594
    %1173 = vmatpush1.bf16.msra.mxu0 %v593
    %1174 = vmatprep.subr.bf16.mxu0 %v596
    %1175 = vmatpush1.bf16.msra.mxu0 %v595
    %1176 = vmatprep.subr.bf16.mxu0 %v598
    %1177 = vmatpush1.bf16.msra.mxu0 %v597
    %1178 = vmatprep.subr.bf16.mxu0 %v600
    %1179 = vmatpush1.bf16.msra.mxu0 %v599
    %1180 = vmatprep.subr.bf16.mxu0 %v602
    %1181 = vmatpush1.bf16.msra.mxu0 %v601
    %1182 = vmatprep.subr.bf16.mxu0 %v604
    %1183 = vmatpush1.bf16.msra.mxu0 %v603
    %1184 = vmatprep.subr.bf16.mxu0 %v606
    %1185 = vmatpush1.bf16.msra.mxu0 %v605
    %1186 = vmatprep.subr.bf16.mxu0 %v608
    %1187 = vmatpush1.bf16.msra.mxu0 %v607
    %1188 = vmatprep.subr.bf16.mxu0 0
    %1189 = vmatpush1.bf16.msra.mxu0 0
    %1190 = vmatprep.subr.bf16.mxu0 0
    %1191 = vmatpush1.bf16.msra.mxu0 0
    %1192 = vmatprep.subr.bf16.mxu0 0
    %1193 = vmatpush1.bf16.msra.mxu0 0
    %1194 = vmatprep.subr.bf16.mxu0 0
    %1195 = vmatpush1.bf16.msra.mxu0 0
    %1196 = vmatprep.subr.bf16.mxu0 0
    %1197 = vmatpush1.bf16.msra.mxu0 0
    %1198 = vmatprep.subr.bf16.mxu0 0
    %1199 = vmatpush1.bf16.msra.mxu0 0
    %1200 = vmatprep.subr.bf16.mxu0 0
    %1201 = vmatpush1.bf16.msra.mxu0 0
    %1202 = vmatprep.subr.bf16.mxu0 0
    %1203 = vmatpush1.bf16.msra.mxu0 0
    %1204 = vmatprep.mubr.bf16.mxu0 0
    %1205 = vmatmul.mubr.bf16.gmra.mrb[0].mxu0 %v1170
    %v1206 = vpop.f32.mrb[0].mxu0
    %v1207 = vadd.f32 0.0, %v1206
    %v1208 = vpop.f32.mrb[0].mxu0
    %v1209 = vadd.f32 0.0, %v1208
    %v1210 = vpop.f32.mrb[0].mxu0
    %v1211 = vadd.f32 0.0, %v1210
    %v1212 = vpop.f32.mrb[0].mxu0
    %v1213 = vadd.f32 0.0, %v1212
    %1214 = vmatprep.mubr.bf16.mxu0 0
    %1215 = vmatmul.mubr.bf16.gmra.mrb[0].mxu0 %v1171
    %v1216 = vpop.f32.mrb[0].mxu0
    %v1217 = vadd.f32 0.0, %v1216
    %v1218 = vpop.f32.mrb[0].mxu0
    %v1219 = vadd.f32 0.0, %v1218
    %v1220 = vpop.f32.mrb[0].mxu0
    %v1221 = vadd.f32 0.0, %v1220
    %v1222 = vpop.f32.mrb[0].mxu0
    %v1223 = vadd.f32 0.0, %v1222
    %1224 = vdwg.mxu0
    %v1225 = vpack.c.bf16 %v1211, %v1207
    %v1226 = vpack.c.bf16 %v1213, %v1209
    %v1227 = vpack.c.bf16 %v1221, %v1217
    %v1228 = vpack.c.bf16 %v1223, %v1219
    %v1230 = vsel %vm426, %v1049, 0
    %v1233 = vsel %vm426, %v1050, 0
    %1235 = vmatprep.subr.bf16.mxu0 %v1226
    %1236 = vmatpush1.bf16.msra.mxu0 %v1225
    %1237 = vmatprep.subr.bf16.mxu0 %v1228
    %1238 = vmatpush1.bf16.msra.mxu0 %v1227
    %1239 = vmatprep.subr.bf16.mxu0 %v1233
    %1240 = vmatpush1.bf16.msra.mxu0 %v1230
    %1241 = vmatprep.subr.bf16.mxu0 0
    %1242 = vmatpush1.bf16.msra.mxu0 0
    %1243 = vmatprep.subr.bf16.mxu0 0
    %1244 = vmatpush1.bf16.msra.mxu0 0
    %1245 = vmatprep.subr.bf16.mxu0 0
    %1246 = vmatpush1.bf16.msra.mxu0 0
    %1247 = vmatprep.subr.bf16.mxu0 0
    %1248 = vmatpush1.bf16.msra.mxu0 0
    %1249 = vmatprep.subr.bf16.mxu0 0
    %1250 = vmatpush1.bf16.msra.mxu0 0
    %1251 = vmatprep.subr.bf16.mxu0 0
    %1252 = vmatpush1.bf16.msra.mxu0 0
    %1253 = vmatprep.subr.bf16.mxu0 0
    %1254 = vmatpush1.bf16.msra.mxu0 0
    %1255 = vmatprep.subr.bf16.mxu0 0
    %1256 = vmatpush1.bf16.msra.mxu0 0
    %1257 = vmatprep.subr.bf16.mxu0 0
    %1258 = vmatpush1.bf16.msra.mxu0 0
    %1259 = vmatprep.subr.bf16.mxu0 0
    %1260 = vmatpush1.bf16.msra.mxu0 0
    %1261 = vmatprep.subr.bf16.mxu0 0
    %1262 = vmatpush1.bf16.msra.mxu0 0
    %1263 = vmatprep.subr.bf16.mxu0 0
    %1264 = vmatpush1.bf16.msra.mxu0 0
    %1265 = vmatprep.subr.bf16.mxu0 0
    %1266 = vmatpush1.bf16.msra.mxu0 0
    %1267 = vmatprep.mubr.bf16.mxu0 0
    %1268 = vmatmul.mubr.bf16.gmra.mrb[0].mxu0 %v707
    %v1269 = vpop.f32.mrb[0].mxu0
    %v1270 = vadd.f32 0.0, %v1269
    %v1271 = vpop.f32.mrb[0].mxu0
    %v1272 = vadd.f32 0.0, %v1271
    %v1273 = vpop.f32.mrb[0].mxu0
    %v1274 = vadd.f32 0.0, %v1273
    %v1275 = vpop.f32.mrb[0].mxu0
    %v1276 = vadd.f32 0.0, %v1275
    %1277 = vmatprep.mubr.bf16.mxu0 0
    %1278 = vmatmul.mubr.bf16.gmra.mrb[0].mxu0 %v710
    %v1279 = vpop.f32.mrb[0].mxu0
    %v1280 = vadd.f32 0.0, %v1279
    %v1281 = vpop.f32.mrb[0].mxu0
    %v1282 = vadd.f32 0.0, %v1281
    %v1283 = vpop.f32.mrb[0].mxu0
    %v1284 = vadd.f32 0.0, %v1283
    %v1285 = vpop.f32.mrb[0].mxu0
    %v1286 = vadd.f32 0.0, %v1285
    %1287 = vmatprep.mubr.bf16.mxu0 0
    %1288 = vmatmul.mubr.bf16.gmra.mrb[0].mxu0 %v713
    %v1289 = vpop.f32.mrb[0].mxu0
    %v1290 = vadd.f32 0.0, %v1289
    %v1291 = vpop.f32.mrb[0].mxu0
    %v1292 = vadd.f32 0.0, %v1291
    %v1293 = vpop.f32.mrb[0].mxu0
    %v1294 = vadd.f32 0.0, %v1293
    %v1295 = vpop.f32.mrb[0].mxu0
    %v1296 = vadd.f32 0.0, %v1295
    %1297 = vmatprep.mubr.bf16.mxu0 0
    %1298 = vmatmul.mubr.bf16.gmra.mrb[0].mxu0 %v716
    %v1299 = vpop.f32.mrb[0].mxu0
    %v1300 = vadd.f32 0.0, %v1299
    %v1301 = vpop.f32.mrb[0].mxu0
    %v1302 = vadd.f32 0.0, %v1301
    %v1303 = vpop.f32.mrb[0].mxu0
    %v1304 = vadd.f32 0.0, %v1303
    %v1305 = vpop.f32.mrb[0].mxu0
    %v1306 = vadd.f32 0.0, %v1305
    %1307 = vmatprep.mubr.bf16.mxu0 0
    %1308 = vmatmul.mubr.bf16.gmra.mrb[0].mxu0 %v719
    %v1309 = vpop.f32.mrb[0].mxu0
    %v1310 = vadd.f32 0.0, %v1309
    %v1311 = vpop.f32.mrb[0].mxu0
    %v1312 = vadd.f32 0.0, %v1311
    %v1313 = vpop.f32.mrb[0].mxu0
    %v1314 = vpop.f32.mrb[0].mxu0
    %1315 = vdwg.mxu0
    %1316 = vrot.lane.b32.xlu0 %v1270, 17
    %v1317 = vpop.permute.xlu0 %1316
    %1318 = vrot.lane.b32.xlu0 %v1272, 17
    %v1319 = vpop.permute.xlu0 %1318
    %v1320 = vsel %vm814, %v1317, %v1319
    %v1321 = vsel %vm814, %v1319, %v1317
    %v1322 = vld [vmem:[#allocation16] ss:$8 sm:$0x3]
    %v1324 = vlaneseq
    %v1325 = vshrl.u32 %v1324, 7
    %v1326 = vsub.s32 0, %v1325
    %v1327 = vrot.slane %v1322, %v1326
    %v1328 = vlaneseq
    %v1329 = vshrl.u32 %v1328, 7
    %v1330 = vsub.s32 1, %v1329
    %v1331 = vrot.slane %v1322, %v1330
    %v1334 = vmul.f32 %v1321, %v1327
    %v1335 = vmul.f32 %v1320, %v1331
    %v1336 = vadd.f32 %v1334, 0.0
    %v1337 = vadd.f32 %v1335, 0.0
    %1338 = vrot.lane.b32.xlu0 %v1274, 16
    %v1339 = vpop.permute.xlu0 %1338
    %1340 = vrot.lane.b32.xlu0 %v1276, 16
    %v1341 = vpop.permute.xlu0 %1340
    %v1342 = vsel %vm837, %v1339, %v1341
    %v1343 = vsel %vm837, %v1341, %v1339
    %v1344 = vld [vmem:[%s840] ss:$8 sm:$0x3]
    %v1346 = vlaneseq
    %v1347 = vshrl.u32 %v1346, 7
    %v1348 = vsub.s32 0, %v1347
    %v1349 = vrot.slane %v1344, %v1348
    %v1350 = vlaneseq
    %v1351 = vshrl.u32 %v1350, 7
    %v1352 = vsub.s32 1, %v1351
    %v1353 = vrot.slane %v1344, %v1352
    %v1356 = vmul.f32 %v1343, %v1349
    %v1357 = vmul.f32 %v1342, %v1353
    %v1358 = vadd.f32 %v1336, %v1356
    %v1359 = vadd.f32 %v1337, %v1357
    %1360 = vrot.lane.b32.xlu0 %v1280, 15
    %v1361 = vpop.permute.xlu0 %1360
    %1362 = vrot.lane.b32.xlu0 %v1282, 15
    %v1363 = vpop.permute.xlu0 %1362
    %v1364 = vsel %vm861, %v1361, %v1363
    %v1365 = vsel %vm861, %v1363, %v1361
    %v1366 = vld [vmem:[%s864] ss:$8 sm:$0x3]
    %v1368 = vlaneseq
    %v1369 = vshrl.u32 %v1368, 7
    %v1370 = vsub.s32 0, %v1369
    %v1371 = vrot.slane %v1366, %v1370
    %v1372 = vlaneseq
    %v1373 = vshrl.u32 %v1372, 7
    %v1374 = vsub.s32 1, %v1373
    %v1375 = vrot.slane %v1366, %v1374
    %v1378 = vmul.f32 %v1365, %v1371
    %v1379 = vmul.f32 %v1364, %v1375
    %v1380 = vadd.f32 %v1358, %v1378
    %v1381 = vadd.f32 %v1359, %v1379
    %1382 = vrot.lane.b32.xlu0 %v1284, 1
    %v1383 = vpop.permute.xlu0 %1382
    %1384 = vrot.lane.b32.xlu0 %v1286, 1
    %v1385 = vpop.permute.xlu0 %1384
    %v1386 = vsel %vm885, %v1383, %v1385
    %v1387 = vsel %vm885, %v1385, %v1383
    %v1388 = vld [vmem:[%s888] ss:$8 sm:$0x3]
    %v1390 = vlaneseq
    %v1391 = vshrl.u32 %v1390, 7
    %v1392 = vsub.s32 0, %v1391
    %v1393 = vrot.slane %v1388, %v1392
    %v1394 = vlaneseq
    %v1395 = vshrl.u32 %v1394, 7
    %v1396 = vsub.s32 1, %v1395
    %v1397 = vrot.slane %v1388, %v1396
    %v1400 = vmul.f32 %v1387, %v1393
    %v1401 = vmul.f32 %v1386, %v1397
    %v1402 = vadd.f32 %v1380, %v1400
    %v1403 = vadd.f32 %v1381, %v1401
    %v1404 = vld [vmem:[%s905] ss:$8 sm:$0x3]
    %v1406 = vlaneseq
    %v1407 = vshrl.u32 %v1406, 7
    %v1408 = vsub.s32 0, %v1407
    %v1409 = vrot.slane %v1404, %v1408
    %v1410 = vlaneseq
    %v1411 = vshrl.u32 %v1410, 7
    %v1412 = vsub.s32 1, %v1411
    %v1413 = vrot.slane %v1404, %v1412
    %v1416 = vmul.f32 %v1290, %v1409
    %v1417 = vmul.f32 %v1292, %v1413
    %v1418 = vadd.f32 %v1402, %v1416
    %v1419 = vadd.f32 %v1403, %v1417
    %1420 = vrot.lane.b32.xlu0 %v1294, 127
    %v1421 = vpop.permute.xlu0 %1420
    %1422 = vrot.lane.b32.xlu0 %v1296, 127
    %v1423 = vpop.permute.xlu0 %1422
    %v1424 = vsel %vm926, %v1421, %v1423
    %v1425 = vsel %vm926, %v1423, %v1421
    %v1426 = vld [vmem:[%s929] ss:$8 sm:$0x3]
    %v1428 = vlaneseq
    %v1429 = vshrl.u32 %v1428, 7
    %v1430 = vsub.s32 0, %v1429
    %v1431 = vrot.slane %v1426, %v1430
    %v1432 = vlaneseq
    %v1433 = vshrl.u32 %v1432, 7
    %v1434 = vsub.s32 1, %v1433
    %v1435 = vrot.slane %v1426, %v1434
    %v1438 = vmul.f32 %v1424, %v1431
    %v1439 = vmul.f32 %v1425, %v1435
    %v1440 = vadd.f32 %v1418, %v1438
    %v1441 = vadd.f32 %v1419, %v1439
    %1442 = vrot.lane.b32.xlu0 %v1300, 113
    %v1443 = vpop.permute.xlu0 %1442
    %1444 = vrot.lane.b32.xlu0 %v1302, 113
    %v1445 = vpop.permute.xlu0 %1444
    %v1446 = vsel %vm950, %v1443, %v1445
    %v1447 = vsel %vm950, %v1445, %v1443
    %v1448 = vld [vmem:[%s953] ss:$8 sm:$0x3]
    %v1450 = vlaneseq
    %v1451 = vshrl.u32 %v1450, 7
    %v1452 = vsub.s32 0, %v1451
    %v1453 = vrot.slane %v1448, %v1452
    %v1454 = vlaneseq
    %v1455 = vshrl.u32 %v1454, 7
    %v1456 = vsub.s32 1, %v1455
    %v1457 = vrot.slane %v1448, %v1456
    %v1460 = vmul.f32 %v1446, %v1453
    %v1461 = vmul.f32 %v1447, %v1457
    %v1462 = vadd.f32 %v1440, %v1460
    %v1463 = vadd.f32 %v1441, %v1461
    %1464 = vrot.lane.b32.xlu0 %v1304, 112
    %v1465 = vpop.permute.xlu0 %1464
    %1466 = vrot.lane.b32.xlu0 %v1306, 112
    %v1467 = vpop.permute.xlu0 %1466
    %v1468 = vsel %vm974, %v1465, %v1467
    %v1469 = vsel %vm974, %v1467, %v1465
    %v1470 = vld [vmem:[%s977] ss:$8 sm:$0x3]
    %v1472 = vlaneseq
    %v1473 = vshrl.u32 %v1472, 7
    %v1474 = vsub.s32 0, %v1473
    %v1475 = vrot.slane %v1470, %v1474
    %v1476 = vlaneseq
    %v1477 = vshrl.u32 %v1476, 7
    %v1478 = vsub.s32 1, %v1477
    %v1479 = vrot.slane %v1470, %v1478
    %v1482 = vmul.f32 %v1468, %v1475
    %v1483 = vmul.f32 %v1469, %v1479
    %v1484 = vadd.f32 %v1462, %v1482
    %v1485 = vadd.f32 %v1463, %v1483
    %1486 = vrot.lane.b32.xlu0 %v1310, 111
    %v1487 = vpop.permute.xlu0 %1486
    %1488 = vrot.lane.b32.xlu0 %v1312, 111
    %v1489 = vpop.permute.xlu0 %1488
    %v1490 = vsel %vm998, %v1487, %v1489
    %v1491 = vsel %vm998, %v1489, %v1487
    %v1492 = vld [vmem:[%s1001] ss:$8 sm:$0x3]
    %v1494 = vlaneseq
    %v1495 = vshrl.u32 %v1494, 7
    %v1496 = vsub.s32 0, %v1495
    %v1497 = vrot.slane %v1492, %v1496
    %v1498 = vlaneseq
    %v1499 = vshrl.u32 %v1498, 7
    %v1500 = vsub.s32 1, %v1499
    %v1501 = vrot.slane %v1492, %v1500
    %v1504 = vmul.f32 %v1490, %v1497
    %v1505 = vmul.f32 %v1491, %v1501
    %v1506 = vadd.f32 %v1484, %v1504
    %v1507 = vadd.f32 %v1485, %v1505
    %v1508 = vmul.f32 %v1506, %v1021
    %v1509 = vmul.f32 %v1507, %v1021
    %v1510 = vadd.f32 %v1508, %v1028
    %v1511 = vadd.f32 %v1509, %v1028
    %vm1512 = vcmp.ge.f32.partialorder %v1510, 0.0
    %vm1513 = vcmp.ge.f32.partialorder %v1511, 0.0
    %v1514 = vmul.f32 %v1510, 0.01
    %v1515 = vmul.f32 %v1511, 0.01
    %v1516 = vsel %vm1512, %v1510, %v1514
    %v1517 = vsel %vm1513, %v1511, %v1515
    %s1518 = scalar_lea.vmem [#allocation20], 16
    %1519 = vst [vmem:[%s1518] sm:$0xff] %v1516
    %1520 = vst [vmem:[%s1518 + $0x8] sm:$0xff] %v1517
    // Predicated region
    $region90: #{tpu_custom_call.1} parent=1 // pred_check
      _
    $region91: #{tpu_custom_call.1} parent=1 // pred_check_branch
      %1522 = sbr.rel (0) target = $region93
    $region92: #{tpu_custom_call.1} parent=1 // pred_region
      %s1524 = ssub.s32 512, 512
      %1525 = vsyncadd [#allocation4], %s1524
      %s1526 = sshll.u32 [#allocation20], 4
      %s1527 = int_to_ptr.vmem [resolvable:$true] %s1526
      %1532 = dma.vmem_to_hbm [thread:$0]  %s1527, 512, %s11, [#allocation4], 256, 256, 16
    $region93: #{tpu_custom_call.1} parent=1 // pred_fallthru
      _
    // Predicated region
    $region94: #{tpu_custom_call.1} parent=1 // pred_check
      _
    $region95: #{tpu_custom_call.1} parent=1 // pred_check_branch
      %1534 = sbr.rel (0) target = $region97
    $region96: #{tpu_custom_call.1} parent=1 // pred_region
      %1535 = dma.done [#allocation4], 512
    $region97: #{tpu_custom_call.1} parent=1 // pred_fallthru
      _
    %1536 = vsyncpa [#allocation3], 1
    %1537 = vsyncpa [#allocation6], 1
    %1538 = vsyncpa [#allocation9], 1
    %1539 = vsyncpa [#allocation12], 1
    %1540 = vsyncpa [#allocation15], 1
    %1541 = vsyncpa [#allocation18], 1
    %1542 = vsyncpa [#allocation4], 1

</llo_original>
